<compile_context>
chip_gen: v6e
topology: v6e:2x2x1
jax: 0.10.0
libtpu: 0.0.40
codegen_flags: <defaults>
</compile_context>

<pallas_src>
import functools

import jax
import jax.numpy as jnp
from jax.experimental import pallas as pl
from jax.experimental.pallas import tpu as pltpu


def _round_up(x, m):
    return -(-x // m) * m


def _make_kernel(Tc, Bp, obs_dim, obs_p, hidden_dim, latent_dim, unroll):
    H, L = hidden_dim, latent_dim

    def gates_to_hc(g, c, hd):
        # gate layout (i, f, o, g): one contiguous nonlinearity over 3*hd
        # columns + one tanh over the last hd columns.  sigmoid expressed via
        # tanh so the slab is a single EUP pass.
        sig = 0.5 * jnp.tanh(0.5 * g[:, :3 * hd]) + 0.5
        i = sig[:, 0 * hd:1 * hd]
        f = sig[:, 1 * hd:2 * hd]
        o = sig[:, 2 * hd:3 * hd]
        gg = jnp.tanh(g[:, 3 * hd:4 * hd])
        cn = f * c + i * gg
        hn = o * jnp.tanh(cn)
        return hn, cn

    def kernel(x_ref,
               e1_wx, e1_wh, e1_b,
               e2_wx, e2_wh, e2_b,
               d1_wx, d1_wh, d1_b,
               d2_wx, d2_wh, d2_b,
               fc1_w, fc1_b, fc2_w,
               out_ref,
               xproj_ref, dout_ref, hcH_ref, hcL_ref):
        # ---- reset recurrent state at the first time-chunk ----
        @pl.when(pl.program_id(0) == 0)
        def _():
            hcH_ref[...] = jnp.zeros_like(hcH_ref)
            hcL_ref[...] = jnp.zeros_like(hcL_ref)

        # ---- hoisted, time-parallel encoder layer-1 input projection ----
        xp = (jnp.dot(x_ref[...].reshape(Tc * Bp, obs_dim), e1_wx[...],
                      preferred_element_type=jnp.float32) + e1_b[...])
        xproj_ref[...] = xp.reshape(Tc, Bp, 4 * H)

        # loop-invariant weight loads / bias broadcasts (hoisted; JAX does not
        # CSE broadcast_in_dim, so broadcast exactly once).
        e1_whv = e1_wh[...]
        e2_wxv, e2_whv = e2_wx[...], e2_wh[...]
        d1_wxv, d1_whv = d1_wx[...], d1_wh[...]
        d2_wxv, d2_whv = d2_wx[...], d2_wh[...]
        e2_bv = jnp.broadcast_to(e2_b[...], (Bp, 4 * L))
        d1_bv = jnp.broadcast_to(d1_b[...], (Bp, 4 * H))
        d2_bv = jnp.broadcast_to(d2_b[...], (Bp, 4 * L))

        # recurrent state carried in vregs within the chunk, persisted in
        # VMEM scratch across chunks.
        init = (hcH_ref[0], hcH_ref[1], hcL_ref[0], hcL_ref[1],   # encoder
                hcH_ref[2], hcH_ref[3], hcL_ref[2], hcL_ref[3])   # decoder

        def step(t, carry):
            eh1, ec1, eh2, ec2, dh1, dc1, dh2, dc2 = carry

            # encoder layer 1: x-projection precomputed; only h-projection here
            g1 = xproj_ref[t] + jnp.dot(eh1, e1_whv,
                                        preferred_element_type=jnp.float32)
            eh1, ec1 = gates_to_hc(g1, ec1, H)

            # encoder layer 2: two dots summed (no lane concat)
            g2 = (jnp.dot(eh1, e2_wxv, preferred_element_type=jnp.float32)
                  + jnp.dot(eh2, e2_whv, preferred_element_type=jnp.float32)
                  + e2_bv)
            eh2, ec2 = gates_to_hc(g2, ec2, L)

            # decoder layer 1: input is z_t = eh2
            g3 = (jnp.dot(eh2, d1_wxv, preferred_element_type=jnp.float32)
                  + jnp.dot(dh1, d1_whv, preferred_element_type=jnp.float32)
                  + d1_bv)
            dh1, dc1 = gates_to_hc(g3, dc1, H)

            # decoder layer 2
            g4 = (jnp.dot(dh1, d2_wxv, preferred_element_type=jnp.float32)
                  + jnp.dot(dh2, d2_whv, preferred_element_type=jnp.float32)
                  + d2_bv)
            dh2, dc2 = gates_to_hc(g4, dc2, L)

            dout_ref[t] = dh2
            return (eh1, ec1, eh2, ec2, dh1, dc1, dh2, dc2)

        carry = jax.lax.fori_loop(0, Tc, step, init, unroll=unroll)
        eh1, ec1, eh2, ec2, dh1, dc1, dh2, dc2 = carry

        # persist recurrent state for the next time-chunk
        hcH_ref[0] = eh1
        hcH_ref[1] = ec1
        hcH_ref[2] = dh1
        hcH_ref[3] = dc1
        hcL_ref[0] = eh2
        hcL_ref[1] = ec2
        hcL_ref[2] = dh2
        hcL_ref[3] = dc2

        # ---- hoisted, time-parallel head: fc1 -> relu -> fc2 (one slab) ----
        d_flat = dout_ref[...].reshape(Tc * Bp, L)
        y = jax.nn.relu(
            jnp.dot(d_flat, fc1_w[...], preferred_element_type=jnp.float32)
            + fc1_b[...])
        o = jnp.dot(y, fc2_w[...], preferred_element_type=jnp.float32)
        # obs padded to a 128-lane multiple in the wrapper -> unmasked stores
        # and a dense HBM writeback.
        out_ref[...] = o.reshape(Tc, Bp, obs_p).astype(out_ref.dtype)

    return kernel


def lstm_autoencoder_pallas(x, params, *, hidden_dim, latent_dim,
                            t_chunk=None, unroll=8, min_batch_rows=8):
    """x: (B, T, obs_dim) float32. Returns (B, T, obs_dim).

    For production throughput, pass batches packed to >=128 rows (>=256 on
    v6e/v7x) via min_batch_rows / sequence packing, and pick hidden/latent so
    4*H and 4*L land on 128 (v5e) / 256 (v6e, v7x) multiples.
    """
    B, T, obs_dim = x.shape
    H, L = hidden_dim, latent_dim

    # batch -> sublane tile (padded rows are independent; sliced off after)
    Bp = max(min_batch_rows, _round_up(B, 8))
    # time -> chunks streamed over the grid
    if t_chunk is None:
        t_chunk = min(T, 32)
    Tc = max(1, min(t_chunk, T))
    Tp = _round_up(T, Tc)
    n_chunks = Tp // Tc

    xpad = jnp.pad(x, ((0, Bp - B), (0, Tp - T), (0, 0)))
    xf = jnp.transpose(xpad, (1, 0, 2))          # time-major (Tp, Bp, obs)

    # lane-dense output: pad fc2 weight columns (fc2 has no bias -> exact)
    obs_p = _round_up(obs_dim, 128)
    fc2_w = params["fc2_w"]
    if obs_p != obs_dim:
        fc2_w = jnp.pad(fc2_w, ((0, 0), (0, obs_p - obs_dim)))

    # ---- weight prep: gate reorder (i,f,g,o) -> (i,f,o,g) ----
    def reorder(w, hd):
        return jnp.concatenate(
            [w[..., :2 * hd], w[..., 3 * hd:4 * hd], w[..., 2 * hd:3 * hd]],
            axis=-1)

    weight_args = (
        reorder(params["e1_wx"], H), reorder(params["e1_wh"], H), reorder(params["e1_b"], H),
        reorder(params["e2_wx"], L), reorder(params["e2_wh"], L), reorder(params["e2_b"], L),
        reorder(params["d1_wx"], H), reorder(params["d1_wh"], H), reorder(params["d1_b"], H),
        reorder(params["d2_wx"], L), reorder(params["d2_wh"], L), reorder(params["d2_b"], L),
        params["fc1_w"], params["fc1_b"], fc2_w,
    )

    kernel = _make_kernel(Tc, Bp, obs_dim, obs_p, H, L, min(unroll, Tc))

    def const_spec(w):
        nd = w.ndim
        return pl.BlockSpec(w.shape, lambda tc, _nd=nd: (0,) * _nd)

    out = pl.pallas_call(
        kernel,
        out_shape=jax.ShapeDtypeStruct((Tp, Bp, obs_p), x.dtype),
        grid_spec=pltpu.PrefetchScalarGridSpec(
            num_scalar_prefetch=0,
            grid=(n_chunks,),
            in_specs=[pl.BlockSpec((Tc, Bp, obs_dim), lambda tc: (tc, 0, 0))]
                     + [const_spec(w) for w in weight_args],
            out_specs=pl.BlockSpec((Tc, Bp, obs_p), lambda tc: (tc, 0, 0)),
            scratch_shapes=[
                pltpu.VMEM((Tc, Bp, 4 * H), jnp.float32),  # enc-L1 x-projection
                pltpu.VMEM((Tc, Bp, L), jnp.float32),      # decoder output slab
                pltpu.VMEM((4, Bp, H), jnp.float32),       # eh1, ec1, dh1, dc1
                pltpu.VMEM((4, Bp, L), jnp.float32),       # eh2, ec2, dh2, dc2
            ],
        ),
        compiler_params=pltpu.CompilerParams(
            dimension_semantics=("arbitrary",),
            vmem_limit_bytes=32 * 1024 * 1024,
        ),
    )(xf, *weight_args)

    out = jnp.transpose(out, (1, 0, 2))          # (Bp, Tp, obs_p)
    return out[:B, :T, :obs_dim]


# ---------------- pure-JAX reference (PyTorch semantics) ----------------
def _ref_cell(x, h, c, wx, wh, b, hdim):
    g = x @ wx + h @ wh + b
    i = jax.nn.sigmoid(g[:, 0 * hdim:1 * hdim])
    f = jax.nn.sigmoid(g[:, 1 * hdim:2 * hdim])
    gg = jnp.tanh(g[:, 2 * hdim:3 * hdim])
    o = jax.nn.sigmoid(g[:, 3 * hdim:4 * hdim])
    cn = f * c + i * gg
    hn = o * jnp.tanh(cn)
    return hn, cn


def lstm_autoencoder_ref(x, p, *, hidden_dim, latent_dim):
    B, T, _ = x.shape
    z = lambda d: jnp.zeros((B, d), jnp.float32)
    # encoder pass
    h1, c1, h2, c2 = z(hidden_dim), z(hidden_dim), z(latent_dim), z(latent_dim)
    zs = []
    for t in range(T):
        h1, c1 = _ref_cell(x[:, t, :], h1, c1, p["e1_wx"], p["e1_wh"], p["e1_b"], hidden_dim)
        h2, c2 = _ref_cell(h1, h2, c2, p["e2_wx"], p["e2_wh"], p["e2_b"], latent_dim)
        zs.append(h2)
    zseq = jnp.stack(zs, axis=1)
    # decoder pass
    h1, c1, h2, c2 = z(hidden_dim), z(hidden_dim), z(latent_dim), z(latent_dim)
    ds = []
    for t in range(T):
        h1, c1 = _ref_cell(zseq[:, t, :], h1, c1, p["d1_wx"], p["d1_wh"], p["d1_b"], hidden_dim)
        h2, c2 = _ref_cell(h1, h2, c2, p["d2_wx"], p["d2_wh"], p["d2_b"], latent_dim)
        ds.append(h2)
    dseq = jnp.stack(ds, axis=1)
    y = jax.nn.relu(dseq @ p["fc1_w"] + p["fc1_b"])
    return y @ p["fc2_w"]


def init_params(key, *, obs_dim, hidden_dim, latent_dim):
    """Deterministic synthetic weights, PyTorch LSTMCell gate order (i,f,g,o),
    stored pre-transposed for `x @ W` and with b_ih + b_hh pre-summed."""
    ks = iter(jax.random.split(key, 32))
    u = lambda shape, s=0.1: (jax.random.normal(next(ks), shape, jnp.float32) * s)

    def cell_params(in_dim, h_dim):
        return (u((in_dim, 4 * h_dim)),   # W_ih^T
                u((h_dim, 4 * h_dim)),    # W_hh^T
                u((1, 4 * h_dim)))        # b_ih + b_hh

    p = {}
    p["e1_wx"], p["e1_wh"], p["e1_b"] = cell_params(obs_dim, hidden_dim)
    p["e2_wx"], p["e2_wh"], p["e2_b"] = cell_params(hidden_dim, latent_dim)
    p["d1_wx"], p["d1_wh"], p["d1_b"] = cell_params(latent_dim, hidden_dim)
    p["d2_wx"], p["d2_wh"], p["d2_b"] = cell_params(hidden_dim, latent_dim)
    p["fc1_w"] = u((latent_dim, hidden_dim))   # fc1.weight^T
    p["fc1_b"] = u((1, hidden_dim))            # fc1.bias
    p["fc2_w"] = u((hidden_dim, obs_dim))      # fc2.weight^T (no bias)
    return p


if __name__ == "__main__":
    B, T = 2, 8
    OBS, HID, LAT = 16, 32, 8

    key = jax.random.PRNGKey(0)
    kx, kp = jax.random.split(key)
    x = jax.random.normal(kx, (B, T, OBS), jnp.float32)
    params = init_params(kp, obs_dim=OBS, hidden_dim=HID, latent_dim=LAT)

    fn = functools.partial(lstm_autoencoder_pallas, hidden_dim=HID,
                           latent_dim=LAT, t_chunk=4, unroll=8)
    out = jax.jit(fn)(x, params)
    out = jax.block_until_ready(out)

    ref = lstm_autoencoder_ref(x, params, hidden_dim=HID, latent_dim=LAT)
    assert out.shape == (B, T, OBS), out.shape
    assert jnp.allclose(out, ref, atol=2e-5, rtol=1e-4), \
        float(jnp.max(jnp.abs(out - ref)))

    print("KERNEL_OK")
</pallas_src>

<mosaic_0001>
module attributes {stable_mosaic.version = 11 : i64} {
  func.func @kernel(%arg0: i32, %arg1: memref<4x8x16xf32, #tpu.memory_space<vmem>>, %arg2: memref<16x128xf32, #tpu.memory_space<vmem>>, %arg3: memref<32x128xf32, #tpu.memory_space<vmem>>, %arg4: memref<1x128xf32, #tpu.memory_space<vmem>>, %arg5: memref<32x32xf32, #tpu.memory_space<vmem>>, %arg6: memref<8x32xf32, #tpu.memory_space<vmem>>, %arg7: memref<1x32xf32, #tpu.memory_space<vmem>>, %arg8: memref<8x128xf32, #tpu.memory_space<vmem>>, %arg9: memref<32x128xf32, #tpu.memory_space<vmem>>, %arg10: memref<1x128xf32, #tpu.memory_space<vmem>>, %arg11: memref<32x32xf32, #tpu.memory_space<vmem>>, %arg12: memref<8x32xf32, #tpu.memory_space<vmem>>, %arg13: memref<1x32xf32, #tpu.memory_space<vmem>>, %arg14: memref<8x32xf32, #tpu.memory_space<vmem>>, %arg15: memref<1x32xf32, #tpu.memory_space<vmem>>, %arg16: memref<32x128xf32, #tpu.memory_space<vmem>>, %arg17: memref<4x8x128xf32, #tpu.memory_space<vmem>>, %arg18: memref<4x8x128xf32, #tpu.memory_space<vmem>>, %arg19: memref<4x8x8xf32, #tpu.memory_space<vmem>>, %arg20: memref<4x8x32xf32, #tpu.memory_space<vmem>>, %arg21: memref<4x8x8xf32, #tpu.memory_space<vmem>>) attributes {dimension_semantics = [#tpu.dimension_semantics<arbitrary>], iteration_bounds = array<i64: 2>, scalar_prefetch = 0 : i64, scratch_operands = 4 : i64, tpu.core_type = #tpu.core_type<tc>, window_params = [{transform_indices = @transform_0, window_bounds = array<i64: 4, 8, 16>}, {pipeline_mode = #tpu.pipeline_mode<synchronous>, transform_indices = @transform_1, window_bounds = array<i64: 16, 128>}, {pipeline_mode = #tpu.pipeline_mode<synchronous>, transform_indices = @transform_2, window_bounds = array<i64: 32, 128>}, {pipeline_mode = #tpu.pipeline_mode<synchronous>, transform_indices = @transform_3, window_bounds = array<i64: 1, 128>}, {pipeline_mode = #tpu.pipeline_mode<synchronous>, transform_indices = @transform_4, window_bounds = array<i64: 32, 32>}, {pipeline_mode = #tpu.pipeline_mode<synchronous>, transform_indices = @transform_5, window_bounds = array<i64: 8, 32>}, {pipeline_mode = #tpu.pipeline_mode<synchronous>, transform_indices = @transform_6, window_bounds = array<i64: 1, 32>}, {pipeline_mode = #tpu.pipeline_mode<synchronous>, transform_indices = @transform_7, window_bounds = array<i64: 8, 128>}, {pipeline_mode = #tpu.pipeline_mode<synchronous>, transform_indices = @transform_8, window_bounds = array<i64: 32, 128>}, {pipeline_mode = #tpu.pipeline_mode<synchronous>, transform_indices = @transform_9, window_bounds = array<i64: 1, 128>}, {pipeline_mode = #tpu.pipeline_mode<synchronous>, transform_indices = @transform_10, window_bounds = array<i64: 32, 32>}, {pipeline_mode = #tpu.pipeline_mode<synchronous>, transform_indices = @transform_11, window_bounds = array<i64: 8, 32>}, {pipeline_mode = #tpu.pipeline_mode<synchronous>, transform_indices = @transform_12, window_bounds = array<i64: 1, 32>}, {pipeline_mode = #tpu.pipeline_mode<synchronous>, transform_indices = @transform_13, window_bounds = array<i64: 8, 32>}, {pipeline_mode = #tpu.pipeline_mode<synchronous>, transform_indices = @transform_14, window_bounds = array<i64: 1, 32>}, {pipeline_mode = #tpu.pipeline_mode<synchronous>, transform_indices = @transform_15, window_bounds = array<i64: 32, 128>}, {transform_indices = @transform_16, window_bounds = array<i64: 4, 8, 128>}]} {
    %c0_i32 = arith.constant 0 : i32
    %0 = arith.cmpi eq, %arg0, %c0_i32 : i32
    %1 = arith.extui %0 : i1 to i32
    %c0_i32_0 = arith.constant 0 : i32
    %2 = arith.cmpi ne, %1, %c0_i32_0 : i32
    scf.if %2 {
      %cst_183 = arith.constant 0.000000e+00 : f32
      %453 = vector.broadcast %cst_183 : f32 to vector<4x8x32xf32>
      %c0_184 = arith.constant 0 : index
      %c0_185 = arith.constant 0 : index
      %c0_186 = arith.constant 0 : index
      %454 = vector.load %arg20[%c0_184, %c0_185, %c0_186] : memref<4x8x32xf32, #tpu.memory_space<vmem>>, vector<4x8x32xf32>
      tpu.vector_store %arg20[%c0_184, %c0_185, %c0_186], %453 {strides = array<i32>} : memref<4x8x32xf32, #tpu.memory_space<vmem>>, vector<4x8x32xf32>,
      %cst_187 = arith.constant 0.000000e+00 : f32
      %455 = vector.broadcast %cst_187 : f32 to vector<4x8x8xf32>
      %c0_188 = arith.constant 0 : index
      %c0_189 = arith.constant 0 : index
      %c0_190 = arith.constant 0 : index
      %456 = vector.load %arg21[%c0_188, %c0_189, %c0_190] : memref<4x8x8xf32, #tpu.memory_space<vmem>>, vector<4x8x8xf32>
      tpu.vector_store %arg21[%c0_188, %c0_189, %c0_190], %455 {strides = array<i32>} : memref<4x8x8xf32, #tpu.memory_space<vmem>>, vector<4x8x8xf32>,
    } else {
    }
    %c0 = arith.constant 0 : index
    %c0_1 = arith.constant 0 : index
    %c0_2 = arith.constant 0 : index
    %3 = vector.load %arg1[%c0, %c0_1, %c0_2] : memref<4x8x16xf32, #tpu.memory_space<vmem>>, vector<4x8x16xf32>
    %4 = vector.shape_cast %3 : vector<4x8x16xf32> to vector<32x16xf32>
    %c0_3 = arith.constant 0 : index
    %c0_4 = arith.constant 0 : index
    %5 = vector.load %arg2[%c0_3, %c0_4] : memref<16x128xf32, #tpu.memory_space<vmem>>, vector<16x128xf32>
    %cst = arith.constant dense<0.000000e+00> : vector<32x128xf32>
    %6 = tpu.matmul %4, %5, %cst {dimension_numbers = #tpu.dot_dimension_numbers<[1], [0], [0], [1], [0, 0, 1, 1], [], []>} : vector<32x16xf32>, vector<16x128xf32>, vector<32x128xf32> -> vector<32x128xf32>
    %c0_5 = arith.constant 0 : index
    %c0_6 = arith.constant 0 : index
    %7 = vector.load %arg4[%c0_5, %c0_6] : memref<1x128xf32, #tpu.memory_space<vmem>>, vector<1x128xf32>
    %8 = vector.broadcast %7 : vector<1x128xf32> to vector<32x128xf32>
    %9 = arith.addf %6, %8 : vector<32x128xf32>
    %10 = vector.shape_cast %9 : vector<32x128xf32> to vector<4x8x128xf32>
    %c0_7 = arith.constant 0 : index
    %c0_8 = arith.constant 0 : index
    %c0_9 = arith.constant 0 : index
    %11 = vector.load %arg18[%c0_7, %c0_8, %c0_9] : memref<4x8x128xf32, #tpu.memory_space<vmem>>, vector<4x8x128xf32>
    tpu.vector_store %arg18[%c0_7, %c0_8, %c0_9], %10 {strides = array<i32>} : memref<4x8x128xf32, #tpu.memory_space<vmem>>, vector<4x8x128xf32>,
    %c0_10 = arith.constant 0 : index
    %c0_11 = arith.constant 0 : index
    %12 = vector.load %arg3[%c0_10, %c0_11] : memref<32x128xf32, #tpu.memory_space<vmem>>, vector<32x128xf32>
    %c0_12 = arith.constant 0 : index
    %c0_13 = arith.constant 0 : index
    %13 = vector.load %arg5[%c0_12, %c0_13] : memref<32x32xf32, #tpu.memory_space<vmem>>, vector<32x32xf32>
    %c0_14 = arith.constant 0 : index
    %c0_15 = arith.constant 0 : index
    %14 = vector.load %arg6[%c0_14, %c0_15] : memref<8x32xf32, #tpu.memory_space<vmem>>, vector<8x32xf32>
    %c0_16 = arith.constant 0 : index
    %c0_17 = arith.constant 0 : index
    %15 = vector.load %arg8[%c0_16, %c0_17] : memref<8x128xf32, #tpu.memory_space<vmem>>, vector<8x128xf32>
    %c0_18 = arith.constant 0 : index
    %c0_19 = arith.constant 0 : index
    %16 = vector.load %arg9[%c0_18, %c0_19] : memref<32x128xf32, #tpu.memory_space<vmem>>, vector<32x128xf32>
    %c0_20 = arith.constant 0 : index
    %c0_21 = arith.constant 0 : index
    %17 = vector.load %arg11[%c0_20, %c0_21] : memref<32x32xf32, #tpu.memory_space<vmem>>, vector<32x32xf32>
    %c0_22 = arith.constant 0 : index
    %c0_23 = arith.constant 0 : index
    %18 = vector.load %arg12[%c0_22, %c0_23] : memref<8x32xf32, #tpu.memory_space<vmem>>, vector<8x32xf32>
    %c0_24 = arith.constant 0 : index
    %c0_25 = arith.constant 0 : index
    %19 = vector.load %arg7[%c0_24, %c0_25] : memref<1x32xf32, #tpu.memory_space<vmem>>, vector<1x32xf32>
    %20 = vector.shape_cast %19 : vector<1x32xf32> to vector<1x32xf32>
    %21 = vector.broadcast %20 : vector<1x32xf32> to vector<8x32xf32>
    %c0_26 = arith.constant 0 : index
    %c0_27 = arith.constant 0 : index
    %22 = vector.load %arg10[%c0_26, %c0_27] : memref<1x128xf32, #tpu.memory_space<vmem>>, vector<1x128xf32>
    %23 = vector.shape_cast %22 : vector<1x128xf32> to vector<1x128xf32>
    %24 = vector.broadcast %23 : vector<1x128xf32> to vector<8x128xf32>
    %c0_28 = arith.constant 0 : index
    %c0_29 = arith.constant 0 : index
    %25 = vector.load %arg13[%c0_28, %c0_29] : memref<1x32xf32, #tpu.memory_space<vmem>>, vector<1x32xf32>
    %26 = vector.shape_cast %25 : vector<1x32xf32> to vector<1x32xf32>
    %27 = vector.broadcast %26 : vector<1x32xf32> to vector<8x32xf32>
    %c0_30 = arith.constant 0 : index
    %c0_31 = arith.constant 0 : index
    %c0_32 = arith.constant 0 : index
    %28 = vector.load %arg20[%c0_30, %c0_31, %c0_32] : memref<4x8x32xf32, #tpu.memory_space<vmem>>, vector<1x8x32xf32>
    %29 = vector.shape_cast %28 : vector<1x8x32xf32> to vector<8x32xf32>
    %c1 = arith.constant 1 : index
    %c0_33 = arith.constant 0 : index
    %c0_34 = arith.constant 0 : index
    %30 = vector.load %arg20[%c1, %c0_33, %c0_34] : memref<4x8x32xf32, #tpu.memory_space<vmem>>, vector<1x8x32xf32>
    %31 = vector.shape_cast %30 : vector<1x8x32xf32> to vector<8x32xf32>
    %c0_35 = arith.constant 0 : index
    %c0_36 = arith.constant 0 : index
    %c0_37 = arith.constant 0 : index
    %32 = vector.load %arg21[%c0_35, %c0_36, %c0_37] : memref<4x8x8xf32, #tpu.memory_space<vmem>>, vector<1x8x8xf32>
    %33 = vector.shape_cast %32 : vector<1x8x8xf32> to vector<8x8xf32>
    %c1_38 = arith.constant 1 : index
    %c0_39 = arith.constant 0 : index
    %c0_40 = arith.constant 0 : index
    %34 = vector.load %arg21[%c1_38, %c0_39, %c0_40] : memref<4x8x8xf32, #tpu.memory_space<vmem>>, vector<1x8x8xf32>
    %35 = vector.shape_cast %34 : vector<1x8x8xf32> to vector<8x8xf32>
    %c2 = arith.constant 2 : index
    %c0_41 = arith.constant 0 : index
    %c0_42 = arith.constant 0 : index
    %36 = vector.load %arg20[%c2, %c0_41, %c0_42] : memref<4x8x32xf32, #tpu.memory_space<vmem>>, vector<1x8x32xf32>
    %37 = vector.shape_cast %36 : vector<1x8x32xf32> to vector<8x32xf32>
    %c3 = arith.constant 3 : index
    %c0_43 = arith.constant 0 : index
    %c0_44 = arith.constant 0 : index
    %38 = vector.load %arg20[%c3, %c0_43, %c0_44] : memref<4x8x32xf32, #tpu.memory_space<vmem>>, vector<1x8x32xf32>
    %39 = vector.shape_cast %38 : vector<1x8x32xf32> to vector<8x32xf32>
    %c2_45 = arith.constant 2 : index
    %c0_46 = arith.constant 0 : index
    %c0_47 = arith.constant 0 : index
    %40 = vector.load %arg21[%c2_45, %c0_46, %c0_47] : memref<4x8x8xf32, #tpu.memory_space<vmem>>, vector<1x8x8xf32>
    %41 = vector.shape_cast %40 : vector<1x8x8xf32> to vector<8x8xf32>
    %c3_48 = arith.constant 3 : index
    %c0_49 = arith.constant 0 : index
    %c0_50 = arith.constant 0 : index
    %42 = vector.load %arg21[%c3_48, %c0_49, %c0_50] : memref<4x8x8xf32, #tpu.memory_space<vmem>>, vector<1x8x8xf32>
    %43 = vector.shape_cast %42 : vector<1x8x8xf32> to vector<8x8xf32>
    %c0_i32_51 = arith.constant 0 : i32
    %44 = arith.index_cast %c0_i32_51 : i32 to index
    %c0_52 = arith.constant 0 : index
    %c0_53 = arith.constant 0 : index
    %45 = vector.load %arg18[%44, %c0_52, %c0_53] : memref<4x8x128xf32, #tpu.memory_space<vmem>>, vector<1x8x128xf32>
    %46 = vector.shape_cast %45 : vector<1x8x128xf32> to vector<8x128xf32>
    %cst_54 = arith.constant dense<0.000000e+00> : vector<8x128xf32>
    %47 = tpu.matmul %29, %12, %cst_54 {dimension_numbers = #tpu.dot_dimension_numbers<[1], [0], [0], [1], [0, 0, 1, 1], [], []>} : vector<8x32xf32>, vector<32x128xf32>, vector<8x128xf32> -> vector<8x128xf32>
    %48 = arith.addf %46, %47 : vector<8x128xf32>
    %49 = vector.extract_strided_slice %48 {offsets = [0, 0], sizes = [8, 96], strides = [1, 1]} : vector<8x128xf32> to vector<8x96xf32>
    %cst_55 = arith.constant 5.000000e-01 : f32
    %50 = vector.broadcast %cst_55 : f32 to vector<8x96xf32>
    %51 = arith.mulf %50, %49 : vector<8x96xf32>
    %52 = math.tanh %51 : vector<8x96xf32>
    %cst_56 = arith.constant 5.000000e-01 : f32
    %53 = vector.broadcast %cst_56 : f32 to vector<8x96xf32>
    %54 = arith.mulf %53, %52 : vector<8x96xf32>
    %cst_57 = arith.constant 5.000000e-01 : f32
    %55 = vector.broadcast %cst_57 : f32 to vector<8x96xf32>
    %56 = arith.addf %54, %55 : vector<8x96xf32>
    %57 = vector.extract_strided_slice %56 {offsets = [0, 0], sizes = [8, 32], strides = [1, 1]} : vector<8x96xf32> to vector<8x32xf32>
    %58 = vector.extract_strided_slice %56 {offsets = [0, 32], sizes = [8, 32], strides = [1, 1]} : vector<8x96xf32> to vector<8x32xf32>
    %59 = vector.extract_strided_slice %56 {offsets = [0, 64], sizes = [8, 32], strides = [1, 1]} : vector<8x96xf32> to vector<8x32xf32>
    %60 = vector.extract_strided_slice %48 {offsets = [0, 96], sizes = [8, 32], strides = [1, 1]} : vector<8x128xf32> to vector<8x32xf32>
    %61 = math.tanh %60 : vector<8x32xf32>
    %62 = arith.mulf %58, %31 : vector<8x32xf32>
    %63 = arith.mulf %57, %61 : vector<8x32xf32>
    %64 = arith.addf %62, %63 : vector<8x32xf32>
    %65 = math.tanh %64 : vector<8x32xf32>
    %66 = arith.mulf %59, %65 : vector<8x32xf32>
    %cst_58 = arith.constant dense<0.000000e+00> : vector<8x32xf32>
    %67 = tpu.matmul %66, %13, %cst_58 {dimension_numbers = #tpu.dot_dimension_numbers<[1], [0], [0], [1], [0, 0, 1, 1], [], []>} : vector<8x32xf32>, vector<32x32xf32>, vector<8x32xf32> -> vector<8x32xf32>
    %cst_59 = arith.constant dense<0.000000e+00> : vector<8x32xf32>
    %68 = tpu.matmul %33, %14, %cst_59 {dimension_numbers = #tpu.dot_dimension_numbers<[1], [0], [0], [1], [0, 0, 1, 1], [], []>} : vector<8x8xf32>, vector<8x32xf32>, vector<8x32xf32> -> vector<8x32xf32>
    %69 = arith.addf %67, %68 : vector<8x32xf32>
    %70 = arith.addf %69, %21 : vector<8x32xf32>
    %71 = vector.extract_strided_slice %70 {offsets = [0, 0], sizes = [8, 24], strides = [1, 1]} : vector<8x32xf32> to vector<8x24xf32>
    %cst_60 = arith.constant 5.000000e-01 : f32
    %72 = vector.broadcast %cst_60 : f32 to vector<8x24xf32>
    %73 = arith.mulf %72, %71 : vector<8x24xf32>
    %74 = math.tanh %73 : vector<8x24xf32>
    %cst_61 = arith.constant 5.000000e-01 : f32
    %75 = vector.broadcast %cst_61 : f32 to vector<8x24xf32>
    %76 = arith.mulf %75, %74 : vector<8x24xf32>
    %cst_62 = arith.constant 5.000000e-01 : f32
    %77 = vector.broadcast %cst_62 : f32 to vector<8x24xf32>
    %78 = arith.addf %76, %77 : vector<8x24xf32>
    %79 = vector.extract_strided_slice %78 {offsets = [0, 0], sizes = [8, 8], strides = [1, 1]} : vector<8x24xf32> to vector<8x8xf32>
    %80 = vector.extract_strided_slice %78 {offsets = [0, 8], sizes = [8, 8], strides = [1, 1]} : vector<8x24xf32> to vector<8x8xf32>
    %81 = vector.extract_strided_slice %78 {offsets = [0, 16], sizes = [8, 8], strides = [1, 1]} : vector<8x24xf32> to vector<8x8xf32>
    %82 = vector.extract_strided_slice %70 {offsets = [0, 24], sizes = [8, 8], strides = [1, 1]} : vector<8x32xf32> to vector<8x8xf32>
    %83 = math.tanh %82 : vector<8x8xf32>
    %84 = arith.mulf %80, %35 : vector<8x8xf32>
    %85 = arith.mulf %79, %83 : vector<8x8xf32>
    %86 = arith.addf %84, %85 : vector<8x8xf32>
    %87 = math.tanh %86 : vector<8x8xf32>
    %88 = arith.mulf %81, %87 : vector<8x8xf32>
    %cst_63 = arith.constant dense<0.000000e+00> : vector<8x128xf32>
    %89 = tpu.matmul %88, %15, %cst_63 {dimension_numbers = #tpu.dot_dimension_numbers<[1], [0], [0], [1], [0, 0, 1, 1], [], []>} : vector<8x8xf32>, vector<8x128xf32>, vector<8x128xf32> -> vector<8x128xf32>
    %cst_64 = arith.constant dense<0.000000e+00> : vector<8x128xf32>
    %90 = tpu.matmul %37, %16, %cst_64 {dimension_numbers = #tpu.dot_dimension_numbers<[1], [0], [0], [1], [0, 0, 1, 1], [], []>} : vector<8x32xf32>, vector<32x128xf32>, vector<8x128xf32> -> vector<8x128xf32>
    %91 = arith.addf %89, %90 : vector<8x128xf32>
    %92 = arith.addf %91, %24 : vector<8x128xf32>
    %93 = vector.extract_strided_slice %92 {offsets = [0, 0], sizes = [8, 96], strides = [1, 1]} : vector<8x128xf32> to vector<8x96xf32>
    %cst_65 = arith.constant 5.000000e-01 : f32
    %94 = vector.broadcast %cst_65 : f32 to vector<8x96xf32>
    %95 = arith.mulf %94, %93 : vector<8x96xf32>
    %96 = math.tanh %95 : vector<8x96xf32>
    %cst_66 = arith.constant 5.000000e-01 : f32
    %97 = vector.broadcast %cst_66 : f32 to vector<8x96xf32>
    %98 = arith.mulf %97, %96 : vector<8x96xf32>
    %cst_67 = arith.constant 5.000000e-01 : f32
    %99 = vector.broadcast %cst_67 : f32 to vector<8x96xf32>
    %100 = arith.addf %98, %99 : vector<8x96xf32>
    %101 = vector.extract_strided_slice %100 {offsets = [0, 0], sizes = [8, 32], strides = [1, 1]} : vector<8x96xf32> to vector<8x32xf32>
    %102 = vector.extract_strided_slice %100 {offsets = [0, 32], sizes = [8, 32], strides = [1, 1]} : vector<8x96xf32> to vector<8x32xf32>
    %103 = vector.extract_strided_slice %100 {offsets = [0, 64], sizes = [8, 32], strides = [1, 1]} : vector<8x96xf32> to vector<8x32xf32>
    %104 = vector.extract_strided_slice %92 {offsets = [0, 96], sizes = [8, 32], strides = [1, 1]} : vector<8x128xf32> to vector<8x32xf32>
    %105 = math.tanh %104 : vector<8x32xf32>
    %106 = arith.mulf %102, %39 : vector<8x32xf32>
    %107 = arith.mulf %101, %105 : vector<8x32xf32>
    %108 = arith.addf %106, %107 : vector<8x32xf32>
    %109 = math.tanh %108 : vector<8x32xf32>
    %110 = arith.mulf %103, %109 : vector<8x32xf32>
    %cst_68 = arith.constant dense<0.000000e+00> : vector<8x32xf32>
    %111 = tpu.matmul %110, %17, %cst_68 {dimension_numbers = #tpu.dot_dimension_numbers<[1], [0], [0], [1], [0, 0, 1, 1], [], []>} : vector<8x32xf32>, vector<32x32xf32>, vector<8x32xf32> -> vector<8x32xf32>
    %cst_69 = arith.constant dense<0.000000e+00> : vector<8x32xf32>
    %112 = tpu.matmul %41, %18, %cst_69 {dimension_numbers = #tpu.dot_dimension_numbers<[1], [0], [0], [1], [0, 0, 1, 1], [], []>} : vector<8x8xf32>, vector<8x32xf32>, vector<8x32xf32> -> vector<8x32xf32>
    %113 = arith.addf %111, %112 : vector<8x32xf32>
    %114 = arith.addf %113, %27 : vector<8x32xf32>
    %115 = vector.extract_strided_slice %114 {offsets = [0, 0], sizes = [8, 24], strides = [1, 1]} : vector<8x32xf32> to vector<8x24xf32>
    %cst_70 = arith.constant 5.000000e-01 : f32
    %116 = vector.broadcast %cst_70 : f32 to vector<8x24xf32>
    %117 = arith.mulf %116, %115 : vector<8x24xf32>
    %118 = math.tanh %117 : vector<8x24xf32>
    %cst_71 = arith.constant 5.000000e-01 : f32
    %119 = vector.broadcast %cst_71 : f32 to vector<8x24xf32>
    %120 = arith.mulf %119, %118 : vector<8x24xf32>
    %cst_72 = arith.constant 5.000000e-01 : f32
    %121 = vector.broadcast %cst_72 : f32 to vector<8x24xf32>
    %122 = arith.addf %120, %121 : vector<8x24xf32>
    %123 = vector.extract_strided_slice %122 {offsets = [0, 0], sizes = [8, 8], strides = [1, 1]} : vector<8x24xf32> to vector<8x8xf32>
    %124 = vector.extract_strided_slice %122 {offsets = [0, 8], sizes = [8, 8], strides = [1, 1]} : vector<8x24xf32> to vector<8x8xf32>
    %125 = vector.extract_strided_slice %122 {offsets = [0, 16], sizes = [8, 8], strides = [1, 1]} : vector<8x24xf32> to vector<8x8xf32>
    %126 = vector.extract_strided_slice %114 {offsets = [0, 24], sizes = [8, 8], strides = [1, 1]} : vector<8x32xf32> to vector<8x8xf32>
    %127 = math.tanh %126 : vector<8x8xf32>
    %128 = arith.mulf %124, %43 : vector<8x8xf32>
    %129 = arith.mulf %123, %127 : vector<8x8xf32>
    %130 = arith.addf %128, %129 : vector<8x8xf32>
    %131 = math.tanh %130 : vector<8x8xf32>
    %132 = arith.mulf %125, %131 : vector<8x8xf32>
    %133 = arith.index_cast %c0_i32_51 : i32 to index
    %c0_73 = arith.constant 0 : index
    %c0_74 = arith.constant 0 : index
    %134 = vector.load %arg19[%133, %c0_73, %c0_74] : memref<4x8x8xf32, #tpu.memory_space<vmem>>, vector<1x8x8xf32>
    %135 = vector.shape_cast %134 : vector<1x8x8xf32> to vector<8x8xf32>
    %136 = vector.shape_cast %132 : vector<8x8xf32> to vector<1x8x8xf32>
    tpu.vector_store %arg19[%133, %c0_73, %c0_74], %136 {strides = array<i32>} : memref<4x8x8xf32, #tpu.memory_space<vmem>>, vector<1x8x8xf32>,
    %c1_i32 = arith.constant 1 : i32
    %137 = arith.index_cast %c1_i32 : i32 to index
    %c0_75 = arith.constant 0 : index
    %c0_76 = arith.constant 0 : index
    %138 = vector.load %arg18[%137, %c0_75, %c0_76] : memref<4x8x128xf32, #tpu.memory_space<vmem>>, vector<1x8x128xf32>
    %139 = vector.shape_cast %138 : vector<1x8x128xf32> to vector<8x128xf32>
    %cst_77 = arith.constant dense<0.000000e+00> : vector<8x128xf32>
    %140 = tpu.matmul %66, %12, %cst_77 {dimension_numbers = #tpu.dot_dimension_numbers<[1], [0], [0], [1], [0, 0, 1, 1], [], []>} : vector<8x32xf32>, vector<32x128xf32>, vector<8x128xf32> -> vector<8x128xf32>
    %141 = arith.addf %139, %140 : vector<8x128xf32>
    %142 = vector.extract_strided_slice %141 {offsets = [0, 0], sizes = [8, 96], strides = [1, 1]} : vector<8x128xf32> to vector<8x96xf32>
    %cst_78 = arith.constant 5.000000e-01 : f32
    %143 = vector.broadcast %cst_78 : f32 to vector<8x96xf32>
    %144 = arith.mulf %143, %142 : vector<8x96xf32>
    %145 = math.tanh %144 : vector<8x96xf32>
    %cst_79 = arith.constant 5.000000e-01 : f32
    %146 = vector.broadcast %cst_79 : f32 to vector<8x96xf32>
    %147 = arith.mulf %146, %145 : vector<8x96xf32>
    %cst_80 = arith.constant 5.000000e-01 : f32
    %148 = vector.broadcast %cst_80 : f32 to vector<8x96xf32>
    %149 = arith.addf %147, %148 : vector<8x96xf32>
    %150 = vector.extract_strided_slice %149 {offsets = [0, 0], sizes = [8, 32], strides = [1, 1]} : vector<8x96xf32> to vector<8x32xf32>
    %151 = vector.extract_strided_slice %149 {offsets = [0, 32], sizes = [8, 32], strides = [1, 1]} : vector<8x96xf32> to vector<8x32xf32>
    %152 = vector.extract_strided_slice %149 {offsets = [0, 64], sizes = [8, 32], strides = [1, 1]} : vector<8x96xf32> to vector<8x32xf32>
    %153 = vector.extract_strided_slice %141 {offsets = [0, 96], sizes = [8, 32], strides = [1, 1]} : vector<8x128xf32> to vector<8x32xf32>
    %154 = math.tanh %153 : vector<8x32xf32>
    %155 = arith.mulf %151, %64 : vector<8x32xf32>
    %156 = arith.mulf %150, %154 : vector<8x32xf32>
    %157 = arith.addf %155, %156 : vector<8x32xf32>
    %158 = math.tanh %157 : vector<8x32xf32>
    %159 = arith.mulf %152, %158 : vector<8x32xf32>
    %cst_81 = arith.constant dense<0.000000e+00> : vector<8x32xf32>
    %160 = tpu.matmul %159, %13, %cst_81 {dimension_numbers = #tpu.dot_dimension_numbers<[1], [0], [0], [1], [0, 0, 1, 1], [], []>} : vector<8x32xf32>, vector<32x32xf32>, vector<8x32xf32> -> vector<8x32xf32>
    %cst_82 = arith.constant dense<0.000000e+00> : vector<8x32xf32>
    %161 = tpu.matmul %88, %14, %cst_82 {dimension_numbers = #tpu.dot_dimension_numbers<[1], [0], [0], [1], [0, 0, 1, 1], [], []>} : vector<8x8xf32>, vector<8x32xf32>, vector<8x32xf32> -> vector<8x32xf32>
    %162 = arith.addf %160, %161 : vector<8x32xf32>
    %163 = arith.addf %162, %21 : vector<8x32xf32>
    %164 = vector.extract_strided_slice %163 {offsets = [0, 0], sizes = [8, 24], strides = [1, 1]} : vector<8x32xf32> to vector<8x24xf32>
    %cst_83 = arith.constant 5.000000e-01 : f32
    %165 = vector.broadcast %cst_83 : f32 to vector<8x24xf32>
    %166 = arith.mulf %165, %164 : vector<8x24xf32>
    %167 = math.tanh %166 : vector<8x24xf32>
    %cst_84 = arith.constant 5.000000e-01 : f32
    %168 = vector.broadcast %cst_84 : f32 to vector<8x24xf32>
    %169 = arith.mulf %168, %167 : vector<8x24xf32>
    %cst_85 = arith.constant 5.000000e-01 : f32
    %170 = vector.broadcast %cst_85 : f32 to vector<8x24xf32>
    %171 = arith.addf %169, %170 : vector<8x24xf32>
    %172 = vector.extract_strided_slice %171 {offsets = [0, 0], sizes = [8, 8], strides = [1, 1]} : vector<8x24xf32> to vector<8x8xf32>
    %173 = vector.extract_strided_slice %171 {offsets = [0, 8], sizes = [8, 8], strides = [1, 1]} : vector<8x24xf32> to vector<8x8xf32>
    %174 = vector.extract_strided_slice %171 {offsets = [0, 16], sizes = [8, 8], strides = [1, 1]} : vector<8x24xf32> to vector<8x8xf32>
    %175 = vector.extract_strided_slice %163 {offsets = [0, 24], sizes = [8, 8], strides = [1, 1]} : vector<8x32xf32> to vector<8x8xf32>
    %176 = math.tanh %175 : vector<8x8xf32>
    %177 = arith.mulf %173, %86 : vector<8x8xf32>
    %178 = arith.mulf %172, %176 : vector<8x8xf32>
    %179 = arith.addf %177, %178 : vector<8x8xf32>
    %180 = math.tanh %179 : vector<8x8xf32>
    %181 = arith.mulf %174, %180 : vector<8x8xf32>
    %cst_86 = arith.constant dense<0.000000e+00> : vector<8x128xf32>
    %182 = tpu.matmul %181, %15, %cst_86 {dimension_numbers = #tpu.dot_dimension_numbers<[1], [0], [0], [1], [0, 0, 1, 1], [], []>} : vector<8x8xf32>, vector<8x128xf32>, vector<8x128xf32> -> vector<8x128xf32>
    %cst_87 = arith.constant dense<0.000000e+00> : vector<8x128xf32>
    %183 = tpu.matmul %110, %16, %cst_87 {dimension_numbers = #tpu.dot_dimension_numbers<[1], [0], [0], [1], [0, 0, 1, 1], [], []>} : vector<8x32xf32>, vector<32x128xf32>, vector<8x128xf32> -> vector<8x128xf32>
    %184 = arith.addf %182, %183 : vector<8x128xf32>
    %185 = arith.addf %184, %24 : vector<8x128xf32>
    %186 = vector.extract_strided_slice %185 {offsets = [0, 0], sizes = [8, 96], strides = [1, 1]} : vector<8x128xf32> to vector<8x96xf32>
    %cst_88 = arith.constant 5.000000e-01 : f32
    %187 = vector.broadcast %cst_88 : f32 to vector<8x96xf32>
    %188 = arith.mulf %187, %186 : vector<8x96xf32>
    %189 = math.tanh %188 : vector<8x96xf32>
    %cst_89 = arith.constant 5.000000e-01 : f32
    %190 = vector.broadcast %cst_89 : f32 to vector<8x96xf32>
    %191 = arith.mulf %190, %189 : vector<8x96xf32>
    %cst_90 = arith.constant 5.000000e-01 : f32
    %192 = vector.broadcast %cst_90 : f32 to vector<8x96xf32>
    %193 = arith.addf %191, %192 : vector<8x96xf32>
    %194 = vector.extract_strided_slice %193 {offsets = [0, 0], sizes = [8, 32], strides = [1, 1]} : vector<8x96xf32> to vector<8x32xf32>
    %195 = vector.extract_strided_slice %193 {offsets = [0, 32], sizes = [8, 32], strides = [1, 1]} : vector<8x96xf32> to vector<8x32xf32>
    %196 = vector.extract_strided_slice %193 {offsets = [0, 64], sizes = [8, 32], strides = [1, 1]} : vector<8x96xf32> to vector<8x32xf32>
    %197 = vector.extract_strided_slice %185 {offsets = [0, 96], sizes = [8, 32], strides = [1, 1]} : vector<8x128xf32> to vector<8x32xf32>
    %198 = math.tanh %197 : vector<8x32xf32>
    %199 = arith.mulf %195, %108 : vector<8x32xf32>
    %200 = arith.mulf %194, %198 : vector<8x32xf32>
    %201 = arith.addf %199, %200 : vector<8x32xf32>
    %202 = math.tanh %201 : vector<8x32xf32>
    %203 = arith.mulf %196, %202 : vector<8x32xf32>
    %cst_91 = arith.constant dense<0.000000e+00> : vector<8x32xf32>
    %204 = tpu.matmul %203, %17, %cst_91 {dimension_numbers = #tpu.dot_dimension_numbers<[1], [0], [0], [1], [0, 0, 1, 1], [], []>} : vector<8x32xf32>, vector<32x32xf32>, vector<8x32xf32> -> vector<8x32xf32>
    %cst_92 = arith.constant dense<0.000000e+00> : vector<8x32xf32>
    %205 = tpu.matmul %132, %18, %cst_92 {dimension_numbers = #tpu.dot_dimension_numbers<[1], [0], [0], [1], [0, 0, 1, 1], [], []>} : vector<8x8xf32>, vector<8x32xf32>, vector<8x32xf32> -> vector<8x32xf32>
    %206 = arith.addf %204, %205 : vector<8x32xf32>
    %207 = arith.addf %206, %27 : vector<8x32xf32>
    %208 = vector.extract_strided_slice %207 {offsets = [0, 0], sizes = [8, 24], strides = [1, 1]} : vector<8x32xf32> to vector<8x24xf32>
    %cst_93 = arith.constant 5.000000e-01 : f32
    %209 = vector.broadcast %cst_93 : f32 to vector<8x24xf32>
    %210 = arith.mulf %209, %208 : vector<8x24xf32>
    %211 = math.tanh %210 : vector<8x24xf32>
    %cst_94 = arith.constant 5.000000e-01 : f32
    %212 = vector.broadcast %cst_94 : f32 to vector<8x24xf32>
    %213 = arith.mulf %212, %211 : vector<8x24xf32>
    %cst_95 = arith.constant 5.000000e-01 : f32
    %214 = vector.broadcast %cst_95 : f32 to vector<8x24xf32>
    %215 = arith.addf %213, %214 : vector<8x24xf32>
    %216 = vector.extract_strided_slice %215 {offsets = [0, 0], sizes = [8, 8], strides = [1, 1]} : vector<8x24xf32> to vector<8x8xf32>
    %217 = vector.extract_strided_slice %215 {offsets = [0, 8], sizes = [8, 8], strides = [1, 1]} : vector<8x24xf32> to vector<8x8xf32>
    %218 = vector.extract_strided_slice %215 {offsets = [0, 16], sizes = [8, 8], strides = [1, 1]} : vector<8x24xf32> to vector<8x8xf32>
    %219 = vector.extract_strided_slice %207 {offsets = [0, 24], sizes = [8, 8], strides = [1, 1]} : vector<8x32xf32> to vector<8x8xf32>
    %220 = math.tanh %219 : vector<8x8xf32>
    %221 = arith.mulf %217, %130 : vector<8x8xf32>
    %222 = arith.mulf %216, %220 : vector<8x8xf32>
    %223 = arith.addf %221, %222 : vector<8x8xf32>
    %224 = math.tanh %223 : vector<8x8xf32>
    %225 = arith.mulf %218, %224 : vector<8x8xf32>
    %226 = arith.index_cast %c1_i32 : i32 to index
    %c0_96 = arith.constant 0 : index
    %c0_97 = arith.constant 0 : index
    %227 = vector.load %arg19[%226, %c0_96, %c0_97] : memref<4x8x8xf32, #tpu.memory_space<vmem>>, vector<1x8x8xf32>
    %228 = vector.shape_cast %227 : vector<1x8x8xf32> to vector<8x8xf32>
    %229 = vector.shape_cast %225 : vector<8x8xf32> to vector<1x8x8xf32>
    tpu.vector_store %arg19[%226, %c0_96, %c0_97], %229 {strides = array<i32>} : memref<4x8x8xf32, #tpu.memory_space<vmem>>, vector<1x8x8xf32>,
    %c2_i32 = arith.constant 2 : i32
    %230 = arith.index_cast %c2_i32 : i32 to index
    %c0_98 = arith.constant 0 : index
    %c0_99 = arith.constant 0 : index
    %231 = vector.load %arg18[%230, %c0_98, %c0_99] : memref<4x8x128xf32, #tpu.memory_space<vmem>>, vector<1x8x128xf32>
    %232 = vector.shape_cast %231 : vector<1x8x128xf32> to vector<8x128xf32>
    %cst_100 = arith.constant dense<0.000000e+00> : vector<8x128xf32>
    %233 = tpu.matmul %159, %12, %cst_100 {dimension_numbers = #tpu.dot_dimension_numbers<[1], [0], [0], [1], [0, 0, 1, 1], [], []>} : vector<8x32xf32>, vector<32x128xf32>, vector<8x128xf32> -> vector<8x128xf32>
    %234 = arith.addf %232, %233 : vector<8x128xf32>
    %235 = vector.extract_strided_slice %234 {offsets = [0, 0], sizes = [8, 96], strides = [1, 1]} : vector<8x128xf32> to vector<8x96xf32>
    %cst_101 = arith.constant 5.000000e-01 : f32
    %236 = vector.broadcast %cst_101 : f32 to vector<8x96xf32>
    %237 = arith.mulf %236, %235 : vector<8x96xf32>
    %238 = math.tanh %237 : vector<8x96xf32>
    %cst_102 = arith.constant 5.000000e-01 : f32
    %239 = vector.broadcast %cst_102 : f32 to vector<8x96xf32>
    %240 = arith.mulf %239, %238 : vector<8x96xf32>
    %cst_103 = arith.constant 5.000000e-01 : f32
    %241 = vector.broadcast %cst_103 : f32 to vector<8x96xf32>
    %242 = arith.addf %240, %241 : vector<8x96xf32>
    %243 = vector.extract_strided_slice %242 {offsets = [0, 0], sizes = [8, 32], strides = [1, 1]} : vector<8x96xf32> to vector<8x32xf32>
    %244 = vector.extract_strided_slice %242 {offsets = [0, 32], sizes = [8, 32], strides = [1, 1]} : vector<8x96xf32> to vector<8x32xf32>
    %245 = vector.extract_strided_slice %242 {offsets = [0, 64], sizes = [8, 32], strides = [1, 1]} : vector<8x96xf32> to vector<8x32xf32>
    %246 = vector.extract_strided_slice %234 {offsets = [0, 96], sizes = [8, 32], strides = [1, 1]} : vector<8x128xf32> to vector<8x32xf32>
    %247 = math.tanh %246 : vector<8x32xf32>
    %248 = arith.mulf %244, %157 : vector<8x32xf32>
    %249 = arith.mulf %243, %247 : vector<8x32xf32>
    %250 = arith.addf %248, %249 : vector<8x32xf32>
    %251 = math.tanh %250 : vector<8x32xf32>
    %252 = arith.mulf %245, %251 : vector<8x32xf32>
    %cst_104 = arith.constant dense<0.000000e+00> : vector<8x32xf32>
    %253 = tpu.matmul %252, %13, %cst_104 {dimension_numbers = #tpu.dot_dimension_numbers<[1], [0], [0], [1], [0, 0, 1, 1], [], []>} : vector<8x32xf32>, vector<32x32xf32>, vector<8x32xf32> -> vector<8x32xf32>
    %cst_105 = arith.constant dense<0.000000e+00> : vector<8x32xf32>
    %254 = tpu.matmul %181, %14, %cst_105 {dimension_numbers = #tpu.dot_dimension_numbers<[1], [0], [0], [1], [0, 0, 1, 1], [], []>} : vector<8x8xf32>, vector<8x32xf32>, vector<8x32xf32> -> vector<8x32xf32>
    %255 = arith.addf %253, %254 : vector<8x32xf32>
    %256 = arith.addf %255, %21 : vector<8x32xf32>
    %257 = vector.extract_strided_slice %256 {offsets = [0, 0], sizes = [8, 24], strides = [1, 1]} : vector<8x32xf32> to vector<8x24xf32>
    %cst_106 = arith.constant 5.000000e-01 : f32
    %258 = vector.broadcast %cst_106 : f32 to vector<8x24xf32>
    %259 = arith.mulf %258, %257 : vector<8x24xf32>
    %260 = math.tanh %259 : vector<8x24xf32>
    %cst_107 = arith.constant 5.000000e-01 : f32
    %261 = vector.broadcast %cst_107 : f32 to vector<8x24xf32>
    %262 = arith.mulf %261, %260 : vector<8x24xf32>
    %cst_108 = arith.constant 5.000000e-01 : f32
    %263 = vector.broadcast %cst_108 : f32 to vector<8x24xf32>
    %264 = arith.addf %262, %263 : vector<8x24xf32>
    %265 = vector.extract_strided_slice %264 {offsets = [0, 0], sizes = [8, 8], strides = [1, 1]} : vector<8x24xf32> to vector<8x8xf32>
    %266 = vector.extract_strided_slice %264 {offsets = [0, 8], sizes = [8, 8], strides = [1, 1]} : vector<8x24xf32> to vector<8x8xf32>
    %267 = vector.extract_strided_slice %264 {offsets = [0, 16], sizes = [8, 8], strides = [1, 1]} : vector<8x24xf32> to vector<8x8xf32>
    %268 = vector.extract_strided_slice %256 {offsets = [0, 24], sizes = [8, 8], strides = [1, 1]} : vector<8x32xf32> to vector<8x8xf32>
    %269 = math.tanh %268 : vector<8x8xf32>
    %270 = arith.mulf %266, %179 : vector<8x8xf32>
    %271 = arith.mulf %265, %269 : vector<8x8xf32>
    %272 = arith.addf %270, %271 : vector<8x8xf32>
    %273 = math.tanh %272 : vector<8x8xf32>
    %274 = arith.mulf %267, %273 : vector<8x8xf32>
    %cst_109 = arith.constant dense<0.000000e+00> : vector<8x128xf32>
    %275 = tpu.matmul %274, %15, %cst_109 {dimension_numbers = #tpu.dot_dimension_numbers<[1], [0], [0], [1], [0, 0, 1, 1], [], []>} : vector<8x8xf32>, vector<8x128xf32>, vector<8x128xf32> -> vector<8x128xf32>
    %cst_110 = arith.constant dense<0.000000e+00> : vector<8x128xf32>
    %276 = tpu.matmul %203, %16, %cst_110 {dimension_numbers = #tpu.dot_dimension_numbers<[1], [0], [0], [1], [0, 0, 1, 1], [], []>} : vector<8x32xf32>, vector<32x128xf32>, vector<8x128xf32> -> vector<8x128xf32>
    %277 = arith.addf %275, %276 : vector<8x128xf32>
    %278 = arith.addf %277, %24 : vector<8x128xf32>
    %279 = vector.extract_strided_slice %278 {offsets = [0, 0], sizes = [8, 96], strides = [1, 1]} : vector<8x128xf32> to vector<8x96xf32>
    %cst_111 = arith.constant 5.000000e-01 : f32
    %280 = vector.broadcast %cst_111 : f32 to vector<8x96xf32>
    %281 = arith.mulf %280, %279 : vector<8x96xf32>
    %282 = math.tanh %281 : vector<8x96xf32>
    %cst_112 = arith.constant 5.000000e-01 : f32
    %283 = vector.broadcast %cst_112 : f32 to vector<8x96xf32>
    %284 = arith.mulf %283, %282 : vector<8x96xf32>
    %cst_113 = arith.constant 5.000000e-01 : f32
    %285 = vector.broadcast %cst_113 : f32 to vector<8x96xf32>
    %286 = arith.addf %284, %285 : vector<8x96xf32>
    %287 = vector.extract_strided_slice %286 {offsets = [0, 0], sizes = [8, 32], strides = [1, 1]} : vector<8x96xf32> to vector<8x32xf32>
    %288 = vector.extract_strided_slice %286 {offsets = [0, 32], sizes = [8, 32], strides = [1, 1]} : vector<8x96xf32> to vector<8x32xf32>
    %289 = vector.extract_strided_slice %286 {offsets = [0, 64], sizes = [8, 32], strides = [1, 1]} : vector<8x96xf32> to vector<8x32xf32>
    %290 = vector.extract_strided_slice %278 {offsets = [0, 96], sizes = [8, 32], strides = [1, 1]} : vector<8x128xf32> to vector<8x32xf32>
    %291 = math.tanh %290 : vector<8x32xf32>
    %292 = arith.mulf %288, %201 : vector<8x32xf32>
    %293 = arith.mulf %287, %291 : vector<8x32xf32>
    %294 = arith.addf %292, %293 : vector<8x32xf32>
    %295 = math.tanh %294 : vector<8x32xf32>
    %296 = arith.mulf %289, %295 : vector<8x32xf32>
    %cst_114 = arith.constant dense<0.000000e+00> : vector<8x32xf32>
    %297 = tpu.matmul %296, %17, %cst_114 {dimension_numbers = #tpu.dot_dimension_numbers<[1], [0], [0], [1], [0, 0, 1, 1], [], []>} : vector<8x32xf32>, vector<32x32xf32>, vector<8x32xf32> -> vector<8x32xf32>
    %cst_115 = arith.constant dense<0.000000e+00> : vector<8x32xf32>
    %298 = tpu.matmul %225, %18, %cst_115 {dimension_numbers = #tpu.dot_dimension_numbers<[1], [0], [0], [1], [0, 0, 1, 1], [], []>} : vector<8x8xf32>, vector<8x32xf32>, vector<8x32xf32> -> vector<8x32xf32>
    %299 = arith.addf %297, %298 : vector<8x32xf32>
    %300 = arith.addf %299, %27 : vector<8x32xf32>
    %301 = vector.extract_strided_slice %300 {offsets = [0, 0], sizes = [8, 24], strides = [1, 1]} : vector<8x32xf32> to vector<8x24xf32>
    %cst_116 = arith.constant 5.000000e-01 : f32
    %302 = vector.broadcast %cst_116 : f32 to vector<8x24xf32>
    %303 = arith.mulf %302, %301 : vector<8x24xf32>
    %304 = math.tanh %303 : vector<8x24xf32>
    %cst_117 = arith.constant 5.000000e-01 : f32
    %305 = vector.broadcast %cst_117 : f32 to vector<8x24xf32>
    %306 = arith.mulf %305, %304 : vector<8x24xf32>
    %cst_118 = arith.constant 5.000000e-01 : f32
    %307 = vector.broadcast %cst_118 : f32 to vector<8x24xf32>
    %308 = arith.addf %306, %307 : vector<8x24xf32>
    %309 = vector.extract_strided_slice %308 {offsets = [0, 0], sizes = [8, 8], strides = [1, 1]} : vector<8x24xf32> to vector<8x8xf32>
    %310 = vector.extract_strided_slice %308 {offsets = [0, 8], sizes = [8, 8], strides = [1, 1]} : vector<8x24xf32> to vector<8x8xf32>
    %311 = vector.extract_strided_slice %308 {offsets = [0, 16], sizes = [8, 8], strides = [1, 1]} : vector<8x24xf32> to vector<8x8xf32>
    %312 = vector.extract_strided_slice %300 {offsets = [0, 24], sizes = [8, 8], strides = [1, 1]} : vector<8x32xf32> to vector<8x8xf32>
    %313 = math.tanh %312 : vector<8x8xf32>
    %314 = arith.mulf %310, %223 : vector<8x8xf32>
    %315 = arith.mulf %309, %313 : vector<8x8xf32>
    %316 = arith.addf %314, %315 : vector<8x8xf32>
    %317 = math.tanh %316 : vector<8x8xf32>
    %318 = arith.mulf %311, %317 : vector<8x8xf32>
    %319 = arith.index_cast %c2_i32 : i32 to index
    %c0_119 = arith.constant 0 : index
    %c0_120 = arith.constant 0 : index
    %320 = vector.load %arg19[%319, %c0_119, %c0_120] : memref<4x8x8xf32, #tpu.memory_space<vmem>>, vector<1x8x8xf32>
    %321 = vector.shape_cast %320 : vector<1x8x8xf32> to vector<8x8xf32>
    %322 = vector.shape_cast %318 : vector<8x8xf32> to vector<1x8x8xf32>
    tpu.vector_store %arg19[%319, %c0_119, %c0_120], %322 {strides = array<i32>} : memref<4x8x8xf32, #tpu.memory_space<vmem>>, vector<1x8x8xf32>,
    %c3_i32 = arith.constant 3 : i32
    %323 = arith.index_cast %c3_i32 : i32 to index
    %c0_121 = arith.constant 0 : index
    %c0_122 = arith.constant 0 : index
    %324 = vector.load %arg18[%323, %c0_121, %c0_122] : memref<4x8x128xf32, #tpu.memory_space<vmem>>, vector<1x8x128xf32>
    %325 = vector.shape_cast %324 : vector<1x8x128xf32> to vector<8x128xf32>
    %cst_123 = arith.constant dense<0.000000e+00> : vector<8x128xf32>
    %326 = tpu.matmul %252, %12, %cst_123 {dimension_numbers = #tpu.dot_dimension_numbers<[1], [0], [0], [1], [0, 0, 1, 1], [], []>} : vector<8x32xf32>, vector<32x128xf32>, vector<8x128xf32> -> vector<8x128xf32>
    %327 = arith.addf %325, %326 : vector<8x128xf32>
    %328 = vector.extract_strided_slice %327 {offsets = [0, 0], sizes = [8, 96], strides = [1, 1]} : vector<8x128xf32> to vector<8x96xf32>
    %cst_124 = arith.constant 5.000000e-01 : f32
    %329 = vector.broadcast %cst_124 : f32 to vector<8x96xf32>
    %330 = arith.mulf %329, %328 : vector<8x96xf32>
    %331 = math.tanh %330 : vector<8x96xf32>
    %cst_125 = arith.constant 5.000000e-01 : f32
    %332 = vector.broadcast %cst_125 : f32 to vector<8x96xf32>
    %333 = arith.mulf %332, %331 : vector<8x96xf32>
    %cst_126 = arith.constant 5.000000e-01 : f32
    %334 = vector.broadcast %cst_126 : f32 to vector<8x96xf32>
    %335 = arith.addf %333, %334 : vector<8x96xf32>
    %336 = vector.extract_strided_slice %335 {offsets = [0, 0], sizes = [8, 32], strides = [1, 1]} : vector<8x96xf32> to vector<8x32xf32>
    %337 = vector.extract_strided_slice %335 {offsets = [0, 32], sizes = [8, 32], strides = [1, 1]} : vector<8x96xf32> to vector<8x32xf32>
    %338 = vector.extract_strided_slice %335 {offsets = [0, 64], sizes = [8, 32], strides = [1, 1]} : vector<8x96xf32> to vector<8x32xf32>
    %339 = vector.extract_strided_slice %327 {offsets = [0, 96], sizes = [8, 32], strides = [1, 1]} : vector<8x128xf32> to vector<8x32xf32>
    %340 = math.tanh %339 : vector<8x32xf32>
    %341 = arith.mulf %337, %250 : vector<8x32xf32>
    %342 = arith.mulf %336, %340 : vector<8x32xf32>
    %343 = arith.addf %341, %342 : vector<8x32xf32>
    %344 = math.tanh %343 : vector<8x32xf32>
    %345 = arith.mulf %338, %344 : vector<8x32xf32>
    %cst_127 = arith.constant dense<0.000000e+00> : vector<8x32xf32>
    %346 = tpu.matmul %345, %13, %cst_127 {dimension_numbers = #tpu.dot_dimension_numbers<[1], [0], [0], [1], [0, 0, 1, 1], [], []>} : vector<8x32xf32>, vector<32x32xf32>, vector<8x32xf32> -> vector<8x32xf32>
    %cst_128 = arith.constant dense<0.000000e+00> : vector<8x32xf32>
    %347 = tpu.matmul %274, %14, %cst_128 {dimension_numbers = #tpu.dot_dimension_numbers<[1], [0], [0], [1], [0, 0, 1, 1], [], []>} : vector<8x8xf32>, vector<8x32xf32>, vector<8x32xf32> -> vector<8x32xf32>
    %348 = arith.addf %346, %347 : vector<8x32xf32>
    %349 = arith.addf %348, %21 : vector<8x32xf32>
    %350 = vector.extract_strided_slice %349 {offsets = [0, 0], sizes = [8, 24], strides = [1, 1]} : vector<8x32xf32> to vector<8x24xf32>
    %cst_129 = arith.constant 5.000000e-01 : f32
    %351 = vector.broadcast %cst_129 : f32 to vector<8x24xf32>
    %352 = arith.mulf %351, %350 : vector<8x24xf32>
    %353 = math.tanh %352 : vector<8x24xf32>
    %cst_130 = arith.constant 5.000000e-01 : f32
    %354 = vector.broadcast %cst_130 : f32 to vector<8x24xf32>
    %355 = arith.mulf %354, %353 : vector<8x24xf32>
    %cst_131 = arith.constant 5.000000e-01 : f32
    %356 = vector.broadcast %cst_131 : f32 to vector<8x24xf32>
    %357 = arith.addf %355, %356 : vector<8x24xf32>
    %358 = vector.extract_strided_slice %357 {offsets = [0, 0], sizes = [8, 8], strides = [1, 1]} : vector<8x24xf32> to vector<8x8xf32>
    %359 = vector.extract_strided_slice %357 {offsets = [0, 8], sizes = [8, 8], strides = [1, 1]} : vector<8x24xf32> to vector<8x8xf32>
    %360 = vector.extract_strided_slice %357 {offsets = [0, 16], sizes = [8, 8], strides = [1, 1]} : vector<8x24xf32> to vector<8x8xf32>
    %361 = vector.extract_strided_slice %349 {offsets = [0, 24], sizes = [8, 8], strides = [1, 1]} : vector<8x32xf32> to vector<8x8xf32>
    %362 = math.tanh %361 : vector<8x8xf32>
    %363 = arith.mulf %359, %272 : vector<8x8xf32>
    %364 = arith.mulf %358, %362 : vector<8x8xf32>
    %365 = arith.addf %363, %364 : vector<8x8xf32>
    %366 = math.tanh %365 : vector<8x8xf32>
    %367 = arith.mulf %360, %366 : vector<8x8xf32>
    %cst_132 = arith.constant dense<0.000000e+00> : vector<8x128xf32>
    %368 = tpu.matmul %367, %15, %cst_132 {dimension_numbers = #tpu.dot_dimension_numbers<[1], [0], [0], [1], [0, 0, 1, 1], [], []>} : vector<8x8xf32>, vector<8x128xf32>, vector<8x128xf32> -> vector<8x128xf32>
    %cst_133 = arith.constant dense<0.000000e+00> : vector<8x128xf32>
    %369 = tpu.matmul %296, %16, %cst_133 {dimension_numbers = #tpu.dot_dimension_numbers<[1], [0], [0], [1], [0, 0, 1, 1], [], []>} : vector<8x32xf32>, vector<32x128xf32>, vector<8x128xf32> -> vector<8x128xf32>
    %370 = arith.addf %368, %369 : vector<8x128xf32>
    %371 = arith.addf %370, %24 : vector<8x128xf32>
    %372 = vector.extract_strided_slice %371 {offsets = [0, 0], sizes = [8, 96], strides = [1, 1]} : vector<8x128xf32> to vector<8x96xf32>
    %cst_134 = arith.constant 5.000000e-01 : f32
    %373 = vector.broadcast %cst_134 : f32 to vector<8x96xf32>
    %374 = arith.mulf %373, %372 : vector<8x96xf32>
    %375 = math.tanh %374 : vector<8x96xf32>
    %cst_135 = arith.constant 5.000000e-01 : f32
    %376 = vector.broadcast %cst_135 : f32 to vector<8x96xf32>
    %377 = arith.mulf %376, %375 : vector<8x96xf32>
    %cst_136 = arith.constant 5.000000e-01 : f32
    %378 = vector.broadcast %cst_136 : f32 to vector<8x96xf32>
    %379 = arith.addf %377, %378 : vector<8x96xf32>
    %380 = vector.extract_strided_slice %379 {offsets = [0, 0], sizes = [8, 32], strides = [1, 1]} : vector<8x96xf32> to vector<8x32xf32>
    %381 = vector.extract_strided_slice %379 {offsets = [0, 32], sizes = [8, 32], strides = [1, 1]} : vector<8x96xf32> to vector<8x32xf32>
    %382 = vector.extract_strided_slice %379 {offsets = [0, 64], sizes = [8, 32], strides = [1, 1]} : vector<8x96xf32> to vector<8x32xf32>
    %383 = vector.extract_strided_slice %371 {offsets = [0, 96], sizes = [8, 32], strides = [1, 1]} : vector<8x128xf32> to vector<8x32xf32>
    %384 = math.tanh %383 : vector<8x32xf32>
    %385 = arith.mulf %381, %294 : vector<8x32xf32>
    %386 = arith.mulf %380, %384 : vector<8x32xf32>
    %387 = arith.addf %385, %386 : vector<8x32xf32>
    %388 = math.tanh %387 : vector<8x32xf32>
    %389 = arith.mulf %382, %388 : vector<8x32xf32>
    %cst_137 = arith.constant dense<0.000000e+00> : vector<8x32xf32>
    %390 = tpu.matmul %389, %17, %cst_137 {dimension_numbers = #tpu.dot_dimension_numbers<[1], [0], [0], [1], [0, 0, 1, 1], [], []>} : vector<8x32xf32>, vector<32x32xf32>, vector<8x32xf32> -> vector<8x32xf32>
    %cst_138 = arith.constant dense<0.000000e+00> : vector<8x32xf32>
    %391 = tpu.matmul %318, %18, %cst_138 {dimension_numbers = #tpu.dot_dimension_numbers<[1], [0], [0], [1], [0, 0, 1, 1], [], []>} : vector<8x8xf32>, vector<8x32xf32>, vector<8x32xf32> -> vector<8x32xf32>
    %392 = arith.addf %390, %391 : vector<8x32xf32>
    %393 = arith.addf %392, %27 : vector<8x32xf32>
    %394 = vector.extract_strided_slice %393 {offsets = [0, 0], sizes = [8, 24], strides = [1, 1]} : vector<8x32xf32> to vector<8x24xf32>
    %cst_139 = arith.constant 5.000000e-01 : f32
    %395 = vector.broadcast %cst_139 : f32 to vector<8x24xf32>
    %396 = arith.mulf %395, %394 : vector<8x24xf32>
    %397 = math.tanh %396 : vector<8x24xf32>
    %cst_140 = arith.constant 5.000000e-01 : f32
    %398 = vector.broadcast %cst_140 : f32 to vector<8x24xf32>
    %399 = arith.mulf %398, %397 : vector<8x24xf32>
    %cst_141 = arith.constant 5.000000e-01 : f32
    %400 = vector.broadcast %cst_141 : f32 to vector<8x24xf32>
    %401 = arith.addf %399, %400 : vector<8x24xf32>
    %402 = vector.extract_strided_slice %401 {offsets = [0, 0], sizes = [8, 8], strides = [1, 1]} : vector<8x24xf32> to vector<8x8xf32>
    %403 = vector.extract_strided_slice %401 {offsets = [0, 8], sizes = [8, 8], strides = [1, 1]} : vector<8x24xf32> to vector<8x8xf32>
    %404 = vector.extract_strided_slice %401 {offsets = [0, 16], sizes = [8, 8], strides = [1, 1]} : vector<8x24xf32> to vector<8x8xf32>
    %405 = vector.extract_strided_slice %393 {offsets = [0, 24], sizes = [8, 8], strides = [1, 1]} : vector<8x32xf32> to vector<8x8xf32>
    %406 = math.tanh %405 : vector<8x8xf32>
    %407 = arith.mulf %403, %316 : vector<8x8xf32>
    %408 = arith.mulf %402, %406 : vector<8x8xf32>
    %409 = arith.addf %407, %408 : vector<8x8xf32>
    %410 = math.tanh %409 : vector<8x8xf32>
    %411 = arith.mulf %404, %410 : vector<8x8xf32>
    %412 = arith.index_cast %c3_i32 : i32 to index
    %c0_142 = arith.constant 0 : index
    %c0_143 = arith.constant 0 : index
    %413 = vector.load %arg19[%412, %c0_142, %c0_143] : memref<4x8x8xf32, #tpu.memory_space<vmem>>, vector<1x8x8xf32>
    %414 = vector.shape_cast %413 : vector<1x8x8xf32> to vector<8x8xf32>
    %415 = vector.shape_cast %411 : vector<8x8xf32> to vector<1x8x8xf32>
    tpu.vector_store %arg19[%412, %c0_142, %c0_143], %415 {strides = array<i32>} : memref<4x8x8xf32, #tpu.memory_space<vmem>>, vector<1x8x8xf32>,
    %c4_i32 = arith.constant 4 : i32
    %c0_144 = arith.constant 0 : index
    %c0_145 = arith.constant 0 : index
    %c0_146 = arith.constant 0 : index
    %416 = vector.load %arg20[%c0_144, %c0_145, %c0_146] : memref<4x8x32xf32, #tpu.memory_space<vmem>>, vector<1x8x32xf32>
    %417 = vector.shape_cast %416 : vector<1x8x32xf32> to vector<8x32xf32>
    %418 = vector.shape_cast %345 : vector<8x32xf32> to vector<1x8x32xf32>
    tpu.vector_store %arg20[%c0_144, %c0_145, %c0_146], %418 {strides = array<i32>} : memref<4x8x32xf32, #tpu.memory_space<vmem>>, vector<1x8x32xf32>,
    %c1_147 = arith.constant 1 : index
    %c0_148 = arith.constant 0 : index
    %c0_149 = arith.constant 0 : index
    %419 = vector.load %arg20[%c1_147, %c0_148, %c0_149] : memref<4x8x32xf32, #tpu.memory_space<vmem>>, vector<1x8x32xf32>
    %420 = vector.shape_cast %419 : vector<1x8x32xf32> to vector<8x32xf32>
    %421 = vector.shape_cast %343 : vector<8x32xf32> to vector<1x8x32xf32>
    tpu.vector_store %arg20[%c1_147, %c0_148, %c0_149], %421 {strides = array<i32>} : memref<4x8x32xf32, #tpu.memory_space<vmem>>, vector<1x8x32xf32>,
    %c2_150 = arith.constant 2 : index
    %c0_151 = arith.constant 0 : index
    %c0_152 = arith.constant 0 : index
    %422 = vector.load %arg20[%c2_150, %c0_151, %c0_152] : memref<4x8x32xf32, #tpu.memory_space<vmem>>, vector<1x8x32xf32>
    %423 = vector.shape_cast %422 : vector<1x8x32xf32> to vector<8x32xf32>
    %424 = vector.shape_cast %389 : vector<8x32xf32> to vector<1x8x32xf32>
    tpu.vector_store %arg20[%c2_150, %c0_151, %c0_152], %424 {strides = array<i32>} : memref<4x8x32xf32, #tpu.memory_space<vmem>>, vector<1x8x32xf32>,
    %c3_153 = arith.constant 3 : index
    %c0_154 = arith.constant 0 : index
    %c0_155 = arith.constant 0 : index
    %425 = vector.load %arg20[%c3_153, %c0_154, %c0_155] : memref<4x8x32xf32, #tpu.memory_space<vmem>>, vector<1x8x32xf32>
    %426 = vector.shape_cast %425 : vector<1x8x32xf32> to vector<8x32xf32>
    %427 = vector.shape_cast %387 : vector<8x32xf32> to vector<1x8x32xf32>
    tpu.vector_store %arg20[%c3_153, %c0_154, %c0_155], %427 {strides = array<i32>} : memref<4x8x32xf32, #tpu.memory_space<vmem>>, vector<1x8x32xf32>,
    %c0_156 = arith.constant 0 : index
    %c0_157 = arith.constant 0 : index
    %c0_158 = arith.constant 0 : index
    %428 = vector.load %arg21[%c0_156, %c0_157, %c0_158] : memref<4x8x8xf32, #tpu.memory_space<vmem>>, vector<1x8x8xf32>
    %429 = vector.shape_cast %428 : vector<1x8x8xf32> to vector<8x8xf32>
    %430 = vector.shape_cast %367 : vector<8x8xf32> to vector<1x8x8xf32>
    tpu.vector_store %arg21[%c0_156, %c0_157, %c0_158], %430 {strides = array<i32>} : memref<4x8x8xf32, #tpu.memory_space<vmem>>, vector<1x8x8xf32>,
    %c1_159 = arith.constant 1 : index
    %c0_160 = arith.constant 0 : index
    %c0_161 = arith.constant 0 : index
    %431 = vector.load %arg21[%c1_159, %c0_160, %c0_161] : memref<4x8x8xf32, #tpu.memory_space<vmem>>, vector<1x8x8xf32>
    %432 = vector.shape_cast %431 : vector<1x8x8xf32> to vector<8x8xf32>
    %433 = vector.shape_cast %365 : vector<8x8xf32> to vector<1x8x8xf32>
    tpu.vector_store %arg21[%c1_159, %c0_160, %c0_161], %433 {strides = array<i32>} : memref<4x8x8xf32, #tpu.memory_space<vmem>>, vector<1x8x8xf32>,
    %c2_162 = arith.constant 2 : index
    %c0_163 = arith.constant 0 : index
    %c0_164 = arith.constant 0 : index
    %434 = vector.load %arg21[%c2_162, %c0_163, %c0_164] : memref<4x8x8xf32, #tpu.memory_space<vmem>>, vector<1x8x8xf32>
    %435 = vector.shape_cast %434 : vector<1x8x8xf32> to vector<8x8xf32>
    %436 = vector.shape_cast %411 : vector<8x8xf32> to vector<1x8x8xf32>
    tpu.vector_store %arg21[%c2_162, %c0_163, %c0_164], %436 {strides = array<i32>} : memref<4x8x8xf32, #tpu.memory_space<vmem>>, vector<1x8x8xf32>,
    %c3_165 = arith.constant 3 : index
    %c0_166 = arith.constant 0 : index
    %c0_167 = arith.constant 0 : index
    %437 = vector.load %arg21[%c3_165, %c0_166, %c0_167] : memref<4x8x8xf32, #tpu.memory_space<vmem>>, vector<1x8x8xf32>
    %438 = vector.shape_cast %437 : vector<1x8x8xf32> to vector<8x8xf32>
    %439 = vector.shape_cast %409 : vector<8x8xf32> to vector<1x8x8xf32>
    tpu.vector_store %arg21[%c3_165, %c0_166, %c0_167], %439 {strides = array<i32>} : memref<4x8x8xf32, #tpu.memory_space<vmem>>, vector<1x8x8xf32>,
    %c0_168 = arith.constant 0 : index
    %c0_169 = arith.constant 0 : index
    %c0_170 = arith.constant 0 : index
    %440 = vector.load %arg19[%c0_168, %c0_169, %c0_170] : memref<4x8x8xf32, #tpu.memory_space<vmem>>, vector<4x8x8xf32>
    %441 = vector.shape_cast %440 : vector<4x8x8xf32> to vector<32x8xf32>
    %c0_171 = arith.constant 0 : index
    %c0_172 = arith.constant 0 : index
    %442 = vector.load %arg14[%c0_171, %c0_172] : memref<8x32xf32, #tpu.memory_space<vmem>>, vector<8x32xf32>
    %cst_173 = arith.constant dense<0.000000e+00> : vector<32x32xf32>
    %443 = tpu.matmul %441, %442, %cst_173 {dimension_numbers = #tpu.dot_dimension_numbers<[1], [0], [0], [1], [0, 0, 1, 1], [], []>} : vector<32x8xf32>, vector<8x32xf32>, vector<32x32xf32> -> vector<32x32xf32>
    %c0_174 = arith.constant 0 : index
    %c0_175 = arith.constant 0 : index
    %444 = vector.load %arg15[%c0_174, %c0_175] : memref<1x32xf32, #tpu.memory_space<vmem>>, vector<1x32xf32>
    %445 = vector.broadcast %444 : vector<1x32xf32> to vector<32x32xf32>
    %446 = arith.addf %443, %445 : vector<32x32xf32>
    %cst_176 = arith.constant 0.000000e+00 : f32
    %447 = vector.broadcast %cst_176 : f32 to vector<32x32xf32>
    %448 = arith.maximumf %446, %447 : vector<32x32xf32>
    %c0_177 = arith.constant 0 : index
    %c0_178 = arith.constant 0 : index
    %449 = vector.load %arg16[%c0_177, %c0_178] : memref<32x128xf32, #tpu.memory_space<vmem>>, vector<32x128xf32>
    %cst_179 = arith.constant dense<0.000000e+00> : vector<32x128xf32>
    %450 = tpu.matmul %448, %449, %cst_179 {dimension_numbers = #tpu.dot_dimension_numbers<[1], [0], [0], [1], [0, 0, 1, 1], [], []>} : vector<32x32xf32>, vector<32x128xf32>, vector<32x128xf32> -> vector<32x128xf32>
    %451 = vector.shape_cast %450 : vector<32x128xf32> to vector<4x8x128xf32>
    %c0_180 = arith.constant 0 : index
    %c0_181 = arith.constant 0 : index
    %c0_182 = arith.constant 0 : index
    %452 = vector.load %arg17[%c0_180, %c0_181, %c0_182] : memref<4x8x128xf32, #tpu.memory_space<vmem>>, vector<4x8x128xf32>
    tpu.vector_store %arg17[%c0_180, %c0_181, %c0_182], %451 {strides = array<i32>} : memref<4x8x128xf32, #tpu.memory_space<vmem>>, vector<4x8x128xf32>,
    return
  }
  func.func @transform_0(%arg0: i32) -> (i32, i32, i32) {
    %c0_i32 = arith.constant 0 : i32
    %c0_i32_0 = arith.constant 0 : i32
    %c0_i32_1 = arith.constant 0 : i32
    return %arg0, %c0_i32, %c0_i32_0 : i32, i32, i32
  }
  func.func @transform_1(%arg0: i32) -> (i32, i32) {
    %c0_i32 = arith.constant 0 : i32
    %c0_i32_0 = arith.constant 0 : i32
    %c0_i32_1 = arith.constant 0 : i32
    return %c0_i32, %c0_i32_0 : i32, i32
  }
  func.func @transform_2(%arg0: i32) -> (i32, i32) {
    %c0_i32 = arith.constant 0 : i32
    %c0_i32_0 = arith.constant 0 : i32
    %c0_i32_1 = arith.constant 0 : i32
    return %c0_i32, %c0_i32_0 : i32, i32
  }
  func.func @transform_3(%arg0: i32) -> (i32, i32) {
    %c0_i32 = arith.constant 0 : i32
    %c0_i32_0 = arith.constant 0 : i32
    %c0_i32_1 = arith.constant 0 : i32
    return %c0_i32, %c0_i32_0 : i32, i32
  }
  func.func @transform_4(%arg0: i32) -> (i32, i32) {
    %c0_i32 = arith.constant 0 : i32
    %c0_i32_0 = arith.constant 0 : i32
    %c0_i32_1 = arith.constant 0 : i32
    return %c0_i32, %c0_i32_0 : i32, i32
  }
  func.func @transform_5(%arg0: i32) -> (i32, i32) {
    %c0_i32 = arith.constant 0 : i32
    %c0_i32_0 = arith.constant 0 : i32
    %c0_i32_1 = arith.constant 0 : i32
    return %c0_i32, %c0_i32_0 : i32, i32
  }
  func.func @transform_6(%arg0: i32) -> (i32, i32) {
    %c0_i32 = arith.constant 0 : i32
    %c0_i32_0 = arith.constant 0 : i32
    %c0_i32_1 = arith.constant 0 : i32
    return %c0_i32, %c0_i32_0 : i32, i32
  }
  func.func @transform_7(%arg0: i32) -> (i32, i32) {
    %c0_i32 = arith.constant 0 : i32
    %c0_i32_0 = arith.constant 0 : i32
    %c0_i32_1 = arith.constant 0 : i32
    return %c0_i32, %c0_i32_0 : i32, i32
  }
  func.func @transform_8(%arg0: i32) -> (i32, i32) {
    %c0_i32 = arith.constant 0 : i32
    %c0_i32_0 = arith.constant 0 : i32
    %c0_i32_1 = arith.constant 0 : i32
    return %c0_i32, %c0_i32_0 : i32, i32
  }
  func.func @transform_9(%arg0: i32) -> (i32, i32) {
    %c0_i32 = arith.constant 0 : i32
    %c0_i32_0 = arith.constant 0 : i32
    %c0_i32_1 = arith.constant 0 : i32
    return %c0_i32, %c0_i32_0 : i32, i32
  }
  func.func @transform_10(%arg0: i32) -> (i32, i32) {
    %c0_i32 = arith.constant 0 : i32
    %c0_i32_0 = arith.constant 0 : i32
    %c0_i32_1 = arith.constant 0 : i32
    return %c0_i32, %c0_i32_0 : i32, i32
  }
  func.func @transform_11(%arg0: i32) -> (i32, i32) {
    %c0_i32 = arith.constant 0 : i32
    %c0_i32_0 = arith.constant 0 : i32
    %c0_i32_1 = arith.constant 0 : i32
    return %c0_i32, %c0_i32_0 : i32, i32
  }
  func.func @transform_12(%arg0: i32) -> (i32, i32) {
    %c0_i32 = arith.constant 0 : i32
    %c0_i32_0 = arith.constant 0 : i32
    %c0_i32_1 = arith.constant 0 : i32
    return %c0_i32, %c0_i32_0 : i32, i32
  }
  func.func @transform_13(%arg0: i32) -> (i32, i32) {
    %c0_i32 = arith.constant 0 : i32
    %c0_i32_0 = arith.constant 0 : i32
    %c0_i32_1 = arith.constant 0 : i32
    return %c0_i32, %c0_i32_0 : i32, i32
  }
  func.func @transform_14(%arg0: i32) -> (i32, i32) {
    %c0_i32 = arith.constant 0 : i32
    %c0_i32_0 = arith.constant 0 : i32
    %c0_i32_1 = arith.constant 0 : i32
    return %c0_i32, %c0_i32_0 : i32, i32
  }
  func.func @transform_15(%arg0: i32) -> (i32, i32) {
    %c0_i32 = arith.constant 0 : i32
    %c0_i32_0 = arith.constant 0 : i32
    %c0_i32_1 = arith.constant 0 : i32
    return %c0_i32, %c0_i32_0 : i32, i32
  }
  func.func @transform_16(%arg0: i32) -> (i32, i32, i32) {
    %c0_i32 = arith.constant 0 : i32
    %c0_i32_0 = arith.constant 0 : i32
    %c0_i32_1 = arith.constant 0 : i32
    return %arg0, %c0_i32, %c0_i32_0 : i32, i32, i32
  }
}

</mosaic_0001>

<llo_original>
// kernel: lstm_autoencoder_pallas.1
$region0: #{lstm_autoencoder_pallas.1}
  #allocation0 [shape = 'u32[]', space=smem, size = 0x4, offset = 0x4, fixed_abs, tag = 'smem constant byte address 0x4 - core index']
  #allocation1 [shape = 'u32[144,128]{1,0:T(1,128)}', space=vmem, size = 0x12000, scoped, tag = 'internal scratch']
  #allocation2 [shape = 'f32[4,8,128]{2,1,0:T(8,128)}', space=vmem, size = 0x4000, scoped, tag = 'scratch operand']
  #allocation3 [shape = 'f32[4,8,8]{2,1,0:T(8,128)}', space=vmem, size = 0x4000, scoped, tag = 'scratch operand']
  #allocation4 [shape = 'f32[4,8,32]{2,1,0:T(8,128)}', space=vmem, size = 0x4000, scoped, tag = 'scratch operand']
  #allocation5 [shape = 'f32[4,8,8]{2,1,0:T(8,128)}', space=vmem, size = 0x4000, scoped, tag = 'scratch operand']
  %s0 = inlined_call_operand.vmem [shape: f32[8,8,16], index: 0, kind: input, shape index: {}]
  %s1 = inlined_call_operand.vmem [shape: f32[16,128], index: 1, kind: input, shape index: {}]
  %s2 = inlined_call_operand.vmem [shape: f32[32,128], index: 2, kind: input, shape index: {}]
  %s3 = inlined_call_operand.vmem [shape: f32[1,128], index: 3, kind: input, shape index: {}]
  %s4 = inlined_call_operand.vmem [shape: f32[32,32], index: 4, kind: input, shape index: {}]
  %s5 = inlined_call_operand.vmem [shape: f32[8,32], index: 5, kind: input, shape index: {}]
  %s6 = inlined_call_operand.vmem [shape: f32[1,32], index: 6, kind: input, shape index: {}]
  %s7 = inlined_call_operand.vmem [shape: f32[8,128], index: 7, kind: input, shape index: {}]
  %s8 = inlined_call_operand.vmem [shape: f32[32,128], index: 8, kind: input, shape index: {}]
  %s9 = inlined_call_operand.vmem [shape: f32[1,128], index: 9, kind: input, shape index: {}]
  %s10 = inlined_call_operand.vmem [shape: f32[32,32], index: 10, kind: input, shape index: {}]
  %s11 = inlined_call_operand.vmem [shape: f32[8,32], index: 11, kind: input, shape index: {}]
  %s12 = inlined_call_operand.vmem [shape: f32[1,32], index: 12, kind: input, shape index: {}]
  %s13 = inlined_call_operand.vmem [shape: f32[8,32], index: 13, kind: input, shape index: {}]
  %s14 = inlined_call_operand.vmem [shape: f32[1,32], index: 14, kind: input, shape index: {}]
  %s15 = inlined_call_operand.vmem [shape: f32[32,128], index: 15, kind: input, shape index: {}]
  %s16 = inlined_call_operand.vmem [shape: f32[8,8,128], index: 16, kind: output, shape index: {}]
  %s17 = sld [smem:[#allocation0]]
  $region101: #{lstm_autoencoder_pallas.1} parent=0
    _
  %s19 = ssub.s32 1, %s17
  %s20 = scalar_select 0, %s19, %s17
  loop: start=0, step=1, limit=4
  $region2: #{lstm_autoencoder_pallas.1} parent=0 // loop_pre_header
    _
  $region3: #{lstm_autoencoder_pallas.1} parent=0 // loop_header
    %s22 = sphi 0, %s26
    %p23 = scmp.ge.s32.totalorder %s22, 4
    %s32 = sphi 0, %s34
    %s35 = sphi 0, %s32
    %s36 = sphi 0, %s35
    %s52 = sphi 0, %s36
    %s56 = sphi 0, %s56
    %s58 = sphi 0, %s56
    %s59 = sphi 0, %s58
    %s73 = sphi 0, %s59
    %s77 = sphi 0, %s77
    %s79 = sphi 0, %s77
    %s80 = sphi 0, %s79
    %s94 = sphi 0, %s80
    %s98 = sphi 0, %s98
    %s100 = sphi 0, %s98
    %s101 = sphi 0, %s100
    %s115 = sphi 0, %s101
    %s119 = sphi 0, %s119
    %s121 = sphi 0, %s119
    %s122 = sphi 0, %s121
    %s136 = sphi 0, %s122
    %s140 = sphi 0, %s140
    %s142 = sphi 0, %s140
    %s143 = sphi 0, %s142
    %s157 = sphi 0, %s143
    %s161 = sphi 0, %s161
    %s163 = sphi 0, %s161
    %s164 = sphi 0, %s163
    %s178 = sphi 0, %s164
    %s182 = sphi 0, %s182
    %s184 = sphi 0, %s182
    %s185 = sphi 0, %s184
    %s199 = sphi 0, %s185
    %s203 = sphi 0, %s203
    %s205 = sphi 0, %s203
    %s206 = sphi 0, %s205
    %s220 = sphi 0, %s206
    %s224 = sphi 0, %s224
    %s226 = sphi 0, %s224
    %s227 = sphi 0, %s226
    %s241 = sphi 0, %s227
    %s245 = sphi 0, %s245
    %s247 = sphi 0, %s245
    %s248 = sphi 0, %s247
    %s262 = sphi 0, %s248
    %s266 = sphi 0, %s266
    %s268 = sphi 0, %s266
    %s269 = sphi 0, %s268
    %s283 = sphi 0, %s269
    %s287 = sphi 0, %s287
    %s289 = sphi 0, %s287
    %s290 = sphi 0, %s289
    %s304 = sphi 0, %s290
    %s308 = sphi 0, %s308
    %s310 = sphi 0, %s308
    %s311 = sphi 0, %s310
    %s325 = sphi 0, %s311
    %s329 = sphi 0, %s329
    %s331 = sphi 0, %s329
    %s332 = sphi 0, %s331
    %s346 = sphi 0, %s332
    %s350 = sphi 0, %s350
    %s352 = sphi 0, %s350
    %s353 = sphi 0, %s352
    %s367 = sphi 0, %s353
    %s373 = sphi 0, %s375
    %s376 = sphi 0, %s373
    %s377 = sphi 0, %s376
    %s393 = sphi 0, %s377
  $region4: #{lstm_autoencoder_pallas.1} parent=0 // loop_header_branch
    %25 = sbr.rel (%p23) target = $region8
  $region5: #{lstm_autoencoder_pallas.1} parent=0 // loop_body
    %s27 = ssub.s32 %s22, 1
    %s28 = ssub.s32 %s22, 2
    %s29 = sadd.s32 %s22, 1
    %s30 = ssub.s32 %s22, %s29
    %p31 = scmp.eq.s32.totalorder %s30, 0
    %s33 = sadd.s32 %s32, 1
    %s34 = scalar_select %p31, %s32, %s33
    %p37 = pneg %p31
    %p38 = scmp.eq.s32.totalorder %s22, 1
    %p39 = por %p37, %p38
    %p40 = scmp.ne.s32.totalorder %s32, %s35
    %p41 = scmp.eq.s32.totalorder %s22, 0
    %p42 = por %p40, %p41
    %p43 = scmp.ne.s32.totalorder %s32, %s35
    %p44 = scmp.eq.s32.totalorder %s27, 1
    %p45 = por %p43, %p44
    %p46 = scmp.ne.s32.totalorder %s35, %s36
    %p47 = scmp.eq.s32.totalorder %s27, 0
    %p48 = por %p46, %p47
    %p49 = scmp.ne.s32.totalorder %s35, %s36
    %p50 = scmp.eq.s32.totalorder %s28, 1
    %p51 = por %p49, %p50
    %p53 = scmp.ne.s32.totalorder %s36, %s52
    %p54 = scmp.eq.s32.totalorder %s28, 0
    %p55 = por %p53, %p54
    %s57 = sadd.s32 %s56, 1
    %p60 = scmp.eq.s32.totalorder %s22, 1
    %p61 = scmp.ne.s32.totalorder %s56, %s58
    %p62 = scmp.eq.s32.totalorder %s22, 0
    %p63 = por %p61, %p62
    %p64 = scmp.ne.s32.totalorder %s56, %s58
    %p65 = scmp.eq.s32.totalorder %s27, 1
    %p66 = por %p64, %p65
    %p67 = scmp.ne.s32.totalorder %s58, %s59
    %p68 = scmp.eq.s32.totalorder %s27, 0
    %p69 = por %p67, %p68
    %p70 = scmp.ne.s32.totalorder %s58, %s59
    %p71 = scmp.eq.s32.totalorder %s28, 1
    %p72 = por %p70, %p71
    %p74 = scmp.ne.s32.totalorder %s59, %s73
    %p75 = scmp.eq.s32.totalorder %s28, 0
    %p76 = por %p74, %p75
    %s78 = sadd.s32 %s77, 1
    %p81 = scmp.eq.s32.totalorder %s22, 1
    %p82 = scmp.ne.s32.totalorder %s77, %s79
    %p83 = scmp.eq.s32.totalorder %s22, 0
    %p84 = por %p82, %p83
    %p85 = scmp.ne.s32.totalorder %s77, %s79
    %p86 = scmp.eq.s32.totalorder %s27, 1
    %p87 = por %p85, %p86
    %p88 = scmp.ne.s32.totalorder %s79, %s80
    %p89 = scmp.eq.s32.totalorder %s27, 0
    %p90 = por %p88, %p89
    %p91 = scmp.ne.s32.totalorder %s79, %s80
    %p92 = scmp.eq.s32.totalorder %s28, 1
    %p93 = por %p91, %p92
    %p95 = scmp.ne.s32.totalorder %s80, %s94
    %p96 = scmp.eq.s32.totalorder %s28, 0
    %p97 = por %p95, %p96
    %s99 = sadd.s32 %s98, 1
    %p102 = scmp.eq.s32.totalorder %s22, 1
    %p103 = scmp.ne.s32.totalorder %s98, %s100
    %p104 = scmp.eq.s32.totalorder %s22, 0
    %p105 = por %p103, %p104
    %p106 = scmp.ne.s32.totalorder %s98, %s100
    %p107 = scmp.eq.s32.totalorder %s27, 1
    %p108 = por %p106, %p107
    %p109 = scmp.ne.s32.totalorder %s100, %s101
    %p110 = scmp.eq.s32.totalorder %s27, 0
    %p111 = por %p109, %p110
    %p112 = scmp.ne.s32.totalorder %s100, %s101
    %p113 = scmp.eq.s32.totalorder %s28, 1
    %p114 = por %p112, %p113
    %p116 = scmp.ne.s32.totalorder %s101, %s115
    %p117 = scmp.eq.s32.totalorder %s28, 0
    %p118 = por %p116, %p117
    %s120 = sadd.s32 %s119, 1
    %p123 = scmp.eq.s32.totalorder %s22, 1
    %p124 = scmp.ne.s32.totalorder %s119, %s121
    %p125 = scmp.eq.s32.totalorder %s22, 0
    %p126 = por %p124, %p125
    %p127 = scmp.ne.s32.totalorder %s119, %s121
    %p128 = scmp.eq.s32.totalorder %s27, 1
    %p129 = por %p127, %p128
    %p130 = scmp.ne.s32.totalorder %s121, %s122
    %p131 = scmp.eq.s32.totalorder %s27, 0
    %p132 = por %p130, %p131
    %p133 = scmp.ne.s32.totalorder %s121, %s122
    %p134 = scmp.eq.s32.totalorder %s28, 1
    %p135 = por %p133, %p134
    %p137 = scmp.ne.s32.totalorder %s122, %s136
    %p138 = scmp.eq.s32.totalorder %s28, 0
    %p139 = por %p137, %p138
    %s141 = sadd.s32 %s140, 1
    %p144 = scmp.eq.s32.totalorder %s22, 1
    %p145 = scmp.ne.s32.totalorder %s140, %s142
    %p146 = scmp.eq.s32.totalorder %s22, 0
    %p147 = por %p145, %p146
    %p148 = scmp.ne.s32.totalorder %s140, %s142
    %p149 = scmp.eq.s32.totalorder %s27, 1
    %p150 = por %p148, %p149
    %p151 = scmp.ne.s32.totalorder %s142, %s143
    %p152 = scmp.eq.s32.totalorder %s27, 0
    %p153 = por %p151, %p152
    %p154 = scmp.ne.s32.totalorder %s142, %s143
    %p155 = scmp.eq.s32.totalorder %s28, 1
    %p156 = por %p154, %p155
    %p158 = scmp.ne.s32.totalorder %s143, %s157
    %p159 = scmp.eq.s32.totalorder %s28, 0
    %p160 = por %p158, %p159
    %s162 = sadd.s32 %s161, 1
    %p165 = scmp.eq.s32.totalorder %s22, 1
    %p166 = scmp.ne.s32.totalorder %s161, %s163
    %p167 = scmp.eq.s32.totalorder %s22, 0
    %p168 = por %p166, %p167
    %p169 = scmp.ne.s32.totalorder %s161, %s163
    %p170 = scmp.eq.s32.totalorder %s27, 1
    %p171 = por %p169, %p170
    %p172 = scmp.ne.s32.totalorder %s163, %s164
    %p173 = scmp.eq.s32.totalorder %s27, 0
    %p174 = por %p172, %p173
    %p175 = scmp.ne.s32.totalorder %s163, %s164
    %p176 = scmp.eq.s32.totalorder %s28, 1
    %p177 = por %p175, %p176
    %p179 = scmp.ne.s32.totalorder %s164, %s178
    %p180 = scmp.eq.s32.totalorder %s28, 0
    %p181 = por %p179, %p180
    %s183 = sadd.s32 %s182, 1
    %p186 = scmp.eq.s32.totalorder %s22, 1
    %p187 = scmp.ne.s32.totalorder %s182, %s184
    %p188 = scmp.eq.s32.totalorder %s22, 0
    %p189 = por %p187, %p188
    %p190 = scmp.ne.s32.totalorder %s182, %s184
    %p191 = scmp.eq.s32.totalorder %s27, 1
    %p192 = por %p190, %p191
    %p193 = scmp.ne.s32.totalorder %s184, %s185
    %p194 = scmp.eq.s32.totalorder %s27, 0
    %p195 = por %p193, %p194
    %p196 = scmp.ne.s32.totalorder %s184, %s185
    %p197 = scmp.eq.s32.totalorder %s28, 1
    %p198 = por %p196, %p197
    %p200 = scmp.ne.s32.totalorder %s185, %s199
    %p201 = scmp.eq.s32.totalorder %s28, 0
    %p202 = por %p200, %p201
    %s204 = sadd.s32 %s203, 1
    %p207 = scmp.eq.s32.totalorder %s22, 1
    %p208 = scmp.ne.s32.totalorder %s203, %s205
    %p209 = scmp.eq.s32.totalorder %s22, 0
    %p210 = por %p208, %p209
    %p211 = scmp.ne.s32.totalorder %s203, %s205
    %p212 = scmp.eq.s32.totalorder %s27, 1
    %p213 = por %p211, %p212
    %p214 = scmp.ne.s32.totalorder %s205, %s206
    %p215 = scmp.eq.s32.totalorder %s27, 0
    %p216 = por %p214, %p215
    %p217 = scmp.ne.s32.totalorder %s205, %s206
    %p218 = scmp.eq.s32.totalorder %s28, 1
    %p219 = por %p217, %p218
    %p221 = scmp.ne.s32.totalorder %s206, %s220
    %p222 = scmp.eq.s32.totalorder %s28, 0
    %p223 = por %p221, %p222
    %s225 = sadd.s32 %s224, 1
    %p228 = scmp.eq.s32.totalorder %s22, 1
    %p229 = scmp.ne.s32.totalorder %s224, %s226
    %p230 = scmp.eq.s32.totalorder %s22, 0
    %p231 = por %p229, %p230
    %p232 = scmp.ne.s32.totalorder %s224, %s226
    %p233 = scmp.eq.s32.totalorder %s27, 1
    %p234 = por %p232, %p233
    %p235 = scmp.ne.s32.totalorder %s226, %s227
    %p236 = scmp.eq.s32.totalorder %s27, 0
    %p237 = por %p235, %p236
    %p238 = scmp.ne.s32.totalorder %s226, %s227
    %p239 = scmp.eq.s32.totalorder %s28, 1
    %p240 = por %p238, %p239
    %p242 = scmp.ne.s32.totalorder %s227, %s241
    %p243 = scmp.eq.s32.totalorder %s28, 0
    %p244 = por %p242, %p243
    %s246 = sadd.s32 %s245, 1
    %p249 = scmp.eq.s32.totalorder %s22, 1
    %p250 = scmp.ne.s32.totalorder %s245, %s247
    %p251 = scmp.eq.s32.totalorder %s22, 0
    %p252 = por %p250, %p251
    %p253 = scmp.ne.s32.totalorder %s245, %s247
    %p254 = scmp.eq.s32.totalorder %s27, 1
    %p255 = por %p253, %p254
    %p256 = scmp.ne.s32.totalorder %s247, %s248
    %p257 = scmp.eq.s32.totalorder %s27, 0
    %p258 = por %p256, %p257
    %p259 = scmp.ne.s32.totalorder %s247, %s248
    %p260 = scmp.eq.s32.totalorder %s28, 1
    %p261 = por %p259, %p260
    %p263 = scmp.ne.s32.totalorder %s248, %s262
    %p264 = scmp.eq.s32.totalorder %s28, 0
    %p265 = por %p263, %p264
    %s267 = sadd.s32 %s266, 1
    %p270 = scmp.eq.s32.totalorder %s22, 1
    %p271 = scmp.ne.s32.totalorder %s266, %s268
    %p272 = scmp.eq.s32.totalorder %s22, 0
    %p273 = por %p271, %p272
    %p274 = scmp.ne.s32.totalorder %s266, %s268
    %p275 = scmp.eq.s32.totalorder %s27, 1
    %p276 = por %p274, %p275
    %p277 = scmp.ne.s32.totalorder %s268, %s269
    %p278 = scmp.eq.s32.totalorder %s27, 0
    %p279 = por %p277, %p278
    %p280 = scmp.ne.s32.totalorder %s268, %s269
    %p281 = scmp.eq.s32.totalorder %s28, 1
    %p282 = por %p280, %p281
    %p284 = scmp.ne.s32.totalorder %s269, %s283
    %p285 = scmp.eq.s32.totalorder %s28, 0
    %p286 = por %p284, %p285
    %s288 = sadd.s32 %s287, 1
    %p291 = scmp.eq.s32.totalorder %s22, 1
    %p292 = scmp.ne.s32.totalorder %s287, %s289
    %p293 = scmp.eq.s32.totalorder %s22, 0
    %p294 = por %p292, %p293
    %p295 = scmp.ne.s32.totalorder %s287, %s289
    %p296 = scmp.eq.s32.totalorder %s27, 1
    %p297 = por %p295, %p296
    %p298 = scmp.ne.s32.totalorder %s289, %s290
    %p299 = scmp.eq.s32.totalorder %s27, 0
    %p300 = por %p298, %p299
    %p301 = scmp.ne.s32.totalorder %s289, %s290
    %p302 = scmp.eq.s32.totalorder %s28, 1
    %p303 = por %p301, %p302
    %p305 = scmp.ne.s32.totalorder %s290, %s304
    %p306 = scmp.eq.s32.totalorder %s28, 0
    %p307 = por %p305, %p306
    %s309 = sadd.s32 %s308, 1
    %p312 = scmp.eq.s32.totalorder %s22, 1
    %p313 = scmp.ne.s32.totalorder %s308, %s310
    %p314 = scmp.eq.s32.totalorder %s22, 0
    %p315 = por %p313, %p314
    %p316 = scmp.ne.s32.totalorder %s308, %s310
    %p317 = scmp.eq.s32.totalorder %s27, 1
    %p318 = por %p316, %p317
    %p319 = scmp.ne.s32.totalorder %s310, %s311
    %p320 = scmp.eq.s32.totalorder %s27, 0
    %p321 = por %p319, %p320
    %p322 = scmp.ne.s32.totalorder %s310, %s311
    %p323 = scmp.eq.s32.totalorder %s28, 1
    %p324 = por %p322, %p323
    %p326 = scmp.ne.s32.totalorder %s311, %s325
    %p327 = scmp.eq.s32.totalorder %s28, 0
    %p328 = por %p326, %p327
    %s330 = sadd.s32 %s329, 1
    %p333 = scmp.eq.s32.totalorder %s22, 1
    %p334 = scmp.ne.s32.totalorder %s329, %s331
    %p335 = scmp.eq.s32.totalorder %s22, 0
    %p336 = por %p334, %p335
    %p337 = scmp.ne.s32.totalorder %s329, %s331
    %p338 = scmp.eq.s32.totalorder %s27, 1
    %p339 = por %p337, %p338
    %p340 = scmp.ne.s32.totalorder %s331, %s332
    %p341 = scmp.eq.s32.totalorder %s27, 0
    %p342 = por %p340, %p341
    %p343 = scmp.ne.s32.totalorder %s331, %s332
    %p344 = scmp.eq.s32.totalorder %s28, 1
    %p345 = por %p343, %p344
    %p347 = scmp.ne.s32.totalorder %s332, %s346
    %p348 = scmp.eq.s32.totalorder %s28, 0
    %p349 = por %p347, %p348
    %s351 = sadd.s32 %s350, 1
    %p354 = scmp.eq.s32.totalorder %s22, 1
    %p355 = scmp.ne.s32.totalorder %s350, %s352
    %p356 = scmp.eq.s32.totalorder %s22, 0
    %p357 = por %p355, %p356
    %p358 = scmp.ne.s32.totalorder %s350, %s352
    %p359 = scmp.eq.s32.totalorder %s27, 1
    %p360 = por %p358, %p359
    %p361 = scmp.ne.s32.totalorder %s352, %s353
    %p362 = scmp.eq.s32.totalorder %s27, 0
    %p363 = por %p361, %p362
    %p364 = scmp.ne.s32.totalorder %s352, %s353
    %p365 = scmp.eq.s32.totalorder %s28, 1
    %p366 = por %p364, %p365
    %p368 = scmp.ne.s32.totalorder %s353, %s367
    %p369 = scmp.eq.s32.totalorder %s28, 0
    %p370 = por %p368, %p369
    %s371 = ssub.s32 %s22, %s29
    %p372 = scmp.eq.s32.totalorder %s371, 0
    %s374 = sadd.s32 %s373, 1
    %s375 = scalar_select %p372, %s373, %s374
    %p378 = pneg %p372
    %p379 = scmp.eq.s32.totalorder %s22, 1
    %p380 = por %p378, %p379
    %p381 = scmp.ne.s32.totalorder %s373, %s376
    %p382 = scmp.eq.s32.totalorder %s22, 0
    %p383 = por %p381, %p382
    %p384 = scmp.ne.s32.totalorder %s373, %s376
    %p385 = scmp.eq.s32.totalorder %s27, 1
    %p386 = por %p384, %p385
    %p387 = scmp.ne.s32.totalorder %s376, %s377
    %p388 = scmp.eq.s32.totalorder %s27, 0
    %p389 = por %p387, %p388
    %p390 = scmp.ne.s32.totalorder %s376, %s377
    %p391 = scmp.eq.s32.totalorder %s28, 1
    %p392 = por %p390, %p391
    %p394 = scmp.ne.s32.totalorder %s377, %s393
    %p395 = scmp.eq.s32.totalorder %s28, 0
    %p396 = por %p394, %p395
    %p397 = scmp.le.s32.totalorder 1, %s22
    %p398 = scmp.lt.s32.totalorder %s22, 3
    %p399 = pnand %p397, %p398
    %p400 = pneg %p399
    // Predicated region
    $region9: #{lstm_autoencoder_pallas.1} parent=5 // pred_check
      _
    $region10: #{lstm_autoencoder_pallas.1} parent=5 // pred_check_branch
      %402 = sbr.rel (%p399) target = $region12
    $region11: #{lstm_autoencoder_pallas.1} parent=5 // pred_region
      %s403 = ssub.s32 %s22, 1
      // Predicated region
      $region13: #{lstm_autoencoder_pallas.1} parent=11 // pred_check
        %p404 = pneg %p69
      $region14: #{lstm_autoencoder_pallas.1} parent=11 // pred_check_branch
        %406 = sbr.rel (%p404) target = $region16
      $region15: #{lstm_autoencoder_pallas.1} parent=11 // pred_region
        _
      $region16: #{lstm_autoencoder_pallas.1} parent=11 // pred_fallthru
        _
      // Predicated region
      $region17: #{lstm_autoencoder_pallas.1} parent=11 // pred_check
        %p407 = pneg %p90
      $region18: #{lstm_autoencoder_pallas.1} parent=11 // pred_check_branch
        %409 = sbr.rel (%p407) target = $region20
      $region19: #{lstm_autoencoder_pallas.1} parent=11 // pred_region
        _
      $region20: #{lstm_autoencoder_pallas.1} parent=11 // pred_fallthru
        _
      // Predicated region
      $region21: #{lstm_autoencoder_pallas.1} parent=11 // pred_check
        %p410 = pneg %p111
      $region22: #{lstm_autoencoder_pallas.1} parent=11 // pred_check_branch
        %412 = sbr.rel (%p410) target = $region24
      $region23: #{lstm_autoencoder_pallas.1} parent=11 // pred_region
        _
      $region24: #{lstm_autoencoder_pallas.1} parent=11 // pred_fallthru
        _
      // Predicated region
      $region25: #{lstm_autoencoder_pallas.1} parent=11 // pred_check
        %p413 = pneg %p132
      $region26: #{lstm_autoencoder_pallas.1} parent=11 // pred_check_branch
        %415 = sbr.rel (%p413) target = $region28
      $region27: #{lstm_autoencoder_pallas.1} parent=11 // pred_region
        _
      $region28: #{lstm_autoencoder_pallas.1} parent=11 // pred_fallthru
        _
      // Predicated region
      $region29: #{lstm_autoencoder_pallas.1} parent=11 // pred_check
        %p416 = pneg %p153
      $region30: #{lstm_autoencoder_pallas.1} parent=11 // pred_check_branch
        %418 = sbr.rel (%p416) target = $region32
      $region31: #{lstm_autoencoder_pallas.1} parent=11 // pred_region
        _
      $region32: #{lstm_autoencoder_pallas.1} parent=11 // pred_fallthru
        _
      // Predicated region
      $region33: #{lstm_autoencoder_pallas.1} parent=11 // pred_check
        %p419 = pneg %p174
      $region34: #{lstm_autoencoder_pallas.1} parent=11 // pred_check_branch
        %421 = sbr.rel (%p419) target = $region36
      $region35: #{lstm_autoencoder_pallas.1} parent=11 // pred_region
        _
      $region36: #{lstm_autoencoder_pallas.1} parent=11 // pred_fallthru
        _
      // Predicated region
      $region37: #{lstm_autoencoder_pallas.1} parent=11 // pred_check
        %p422 = pneg %p195
      $region38: #{lstm_autoencoder_pallas.1} parent=11 // pred_check_branch
        %424 = sbr.rel (%p422) target = $region40
      $region39: #{lstm_autoencoder_pallas.1} parent=11 // pred_region
        _
      $region40: #{lstm_autoencoder_pallas.1} parent=11 // pred_fallthru
        _
      // Predicated region
      $region41: #{lstm_autoencoder_pallas.1} parent=11 // pred_check
        %p425 = pneg %p216
      $region42: #{lstm_autoencoder_pallas.1} parent=11 // pred_check_branch
        %427 = sbr.rel (%p425) target = $region44
      $region43: #{lstm_autoencoder_pallas.1} parent=11 // pred_region
        _
      $region44: #{lstm_autoencoder_pallas.1} parent=11 // pred_fallthru
        _
      // Predicated region
      $region45: #{lstm_autoencoder_pallas.1} parent=11 // pred_check
        %p428 = pneg %p237
      $region46: #{lstm_autoencoder_pallas.1} parent=11 // pred_check_branch
        %430 = sbr.rel (%p428) target = $region48
      $region47: #{lstm_autoencoder_pallas.1} parent=11 // pred_region
        _
      $region48: #{lstm_autoencoder_pallas.1} parent=11 // pred_fallthru
        _
      // Predicated region
      $region49: #{lstm_autoencoder_pallas.1} parent=11 // pred_check
        %p431 = pneg %p258
      $region50: #{lstm_autoencoder_pallas.1} parent=11 // pred_check_branch
        %433 = sbr.rel (%p431) target = $region52
      $region51: #{lstm_autoencoder_pallas.1} parent=11 // pred_region
        _
      $region52: #{lstm_autoencoder_pallas.1} parent=11 // pred_fallthru
        _
      // Predicated region
      $region53: #{lstm_autoencoder_pallas.1} parent=11 // pred_check
        %p434 = pneg %p279
      $region54: #{lstm_autoencoder_pallas.1} parent=11 // pred_check_branch
        %436 = sbr.rel (%p434) target = $region56
      $region55: #{lstm_autoencoder_pallas.1} parent=11 // pred_region
        _
      $region56: #{lstm_autoencoder_pallas.1} parent=11 // pred_fallthru
        _
      // Predicated region
      $region57: #{lstm_autoencoder_pallas.1} parent=11 // pred_check
        %p437 = pneg %p300
      $region58: #{lstm_autoencoder_pallas.1} parent=11 // pred_check_branch
        %439 = sbr.rel (%p437) target = $region60
      $region59: #{lstm_autoencoder_pallas.1} parent=11 // pred_region
        _
      $region60: #{lstm_autoencoder_pallas.1} parent=11 // pred_fallthru
        _
      // Predicated region
      $region61: #{lstm_autoencoder_pallas.1} parent=11 // pred_check
        %p440 = pneg %p321
      $region62: #{lstm_autoencoder_pallas.1} parent=11 // pred_check_branch
        %442 = sbr.rel (%p440) target = $region64
      $region63: #{lstm_autoencoder_pallas.1} parent=11 // pred_region
        _
      $region64: #{lstm_autoencoder_pallas.1} parent=11 // pred_fallthru
        _
      // Predicated region
      $region65: #{lstm_autoencoder_pallas.1} parent=11 // pred_check
        %p443 = pneg %p342
      $region66: #{lstm_autoencoder_pallas.1} parent=11 // pred_check_branch
        %445 = sbr.rel (%p443) target = $region68
      $region67: #{lstm_autoencoder_pallas.1} parent=11 // pred_region
        _
      $region68: #{lstm_autoencoder_pallas.1} parent=11 // pred_fallthru
        _
      // Predicated region
      $region69: #{lstm_autoencoder_pallas.1} parent=11 // pred_check
        %p446 = pneg %p363
      $region70: #{lstm_autoencoder_pallas.1} parent=11 // pred_check_branch
        %448 = sbr.rel (%p446) target = $region72
      $region71: #{lstm_autoencoder_pallas.1} parent=11 // pred_region
        _
      $region72: #{lstm_autoencoder_pallas.1} parent=11 // pred_fallthru
        _
    $region12: #{lstm_autoencoder_pallas.1} parent=5 // pred_fallthru
      _
    %p449 = scmp.lt.s32.totalorder %s22, 2
    // Predicated region
    $region73: #{lstm_autoencoder_pallas.1} parent=5 // pred_check
      %p450 = pneg %p449
    $region74: #{lstm_autoencoder_pallas.1} parent=5 // pred_check_branch
      %452 = sbr.rel (%p450) target = $region76
    $region75: #{lstm_autoencoder_pallas.1} parent=5 // pred_region
      // Predicated region
      $region77: #{lstm_autoencoder_pallas.1} parent=75 // pred_check
        %p453 = pneg %p42
      $region78: #{lstm_autoencoder_pallas.1} parent=75 // pred_check_branch
        %455 = sbr.rel (%p453) target = $region80
      $region79: #{lstm_autoencoder_pallas.1} parent=75 // pred_region
        %s456 = smul.u32 4, %s22
        %p457 = scmp.lt.s32.totalorder %s456, 7
        %s458 = scalar_select %p457, %s456, 7
        %s459 = smul.addr %s458, 8
        %s460 = scalar_lea.vmem %s0, %s459
        %s461 = smul.u32 4, %s22
      $region80: #{lstm_autoencoder_pallas.1} parent=75 // pred_fallthru
        _
    $region76: #{lstm_autoencoder_pallas.1} parent=5 // pred_fallthru
      _
    %p462 = scmp.le.s32.totalorder 1, %s22
    %p463 = scmp.lt.s32.totalorder %s22, 3
    %p464 = pnand %p462, %p463
    %p465 = pneg %p464
    // Predicated region
    $region81: #{lstm_autoencoder_pallas.1} parent=5 // pred_check
      _
    $region82: #{lstm_autoencoder_pallas.1} parent=5 // pred_check_branch
      %467 = sbr.rel (%p464) target = $region84
    $region83: #{lstm_autoencoder_pallas.1} parent=5 // pred_region
      %s468 = ssub.s32 %s22, 1
      %s469 = smul.u32 4, %s27
      %p470 = scmp.lt.s32.totalorder %s469, 7
      %s471 = scalar_select %p470, %s469, 7
      %s472 = smul.addr %s471, 8
      %s473 = scalar_lea.vmem %s0, %s472
      %p474 = pneg %p48
      %p475 = pneg %p45
      %p476 = pneg %p69
      %p477 = pneg %p66
      %p478 = pneg %p90
      %p479 = pneg %p87
      %p480 = pneg %p111
      %p481 = pneg %p108
      %p482 = pneg %p132
      %p483 = pneg %p129
      %p484 = pneg %p153
      %p485 = pneg %p150
      %p486 = pneg %p174
      %p487 = pneg %p171
      %p488 = pneg %p195
      %p489 = pneg %p192
      %p490 = pneg %p216
      %p491 = pneg %p213
      %p492 = pneg %p237
      %p493 = pneg %p234
      %p494 = pneg %p258
      %p495 = pneg %p255
      %p496 = pneg %p279
      %p497 = pneg %p276
      %p498 = pneg %p300
      %p499 = pneg %p297
      %p500 = pneg %p321
      %p501 = pneg %p318
      %p502 = pneg %p342
      %p503 = pneg %p339
      %p504 = pneg %p363
      %p505 = pneg %p360
      %p506 = pneg %p389
      %p507 = pneg %p386
      %s508 = smul.u32 4, %s27
      %p509 = scmp.lt.s32.totalorder %s508, 7
      %s510 = scalar_select %p509, %s508, 7
      %s511 = smul.addr %s510, 8
      %s512 = scalar_lea.vmem %s16, %s511
      %s513 = smul.u32 4, %s27
      %p514 = scmp.lt.s32.totalorder %s513, 7
      %s515 = scalar_select %p514, %s513, 7
      %s516 = smul.addr %s515, 8
      %s517 = scalar_lea.vmem %s0, %s516
      %s518 = smul.u32 4, %s27
      %s519 = smul.u32 4, %s27
      %p520 = scmp.lt.s32.totalorder %s519, 7
      %s521 = scalar_select %p520, %s519, 7
      %s522 = smul.addr %s521, 8
      %s523 = scalar_lea.vmem %s16, %s522
      %s524 = smul.u32 4, %s27
      %p525 = scmp.eq.s32.totalorder %s27, 0
      // Predicated region
      $region85: #{lstm_autoencoder_pallas.1} parent=83 // pred_check
        %p526 = pneg %p525
      $region86: #{lstm_autoencoder_pallas.1} parent=83 // pred_check_branch
        %528 = sbr.rel (%p526) target = $region88
      $region87: #{lstm_autoencoder_pallas.1} parent=83 // pred_region
        %vm529 = vcmask 261120
        %530 = vst.msk [vmem:[#allocation4] sm:$0xff] %vm529, 0.0
        %531 = vst.msk [vmem:[#allocation4 + $0x8] sm:$0xff] %vm529, 0.0
        %532 = vst.msk [vmem:[#allocation4 + $0x10] sm:$0xff] %vm529, 0.0
        %533 = vst.msk [vmem:[#allocation4 + $0x18] sm:$0xff] %vm529, 0.0
        %vm534 = vcmask 64512
        %535 = vst.msk [vmem:[#allocation5] sm:$0xff] %vm534, 0.0
        %536 = vst.msk [vmem:[#allocation5 + $0x8] sm:$0xff] %vm534, 0.0
        %537 = vst.msk [vmem:[#allocation5 + $0x10] sm:$0xff] %vm534, 0.0
        %538 = vst.msk [vmem:[#allocation5 + $0x18] sm:$0xff] %vm534, 0.0
      $region88: #{lstm_autoencoder_pallas.1} parent=83 // pred_fallthru
        _
      %v539 = vld [vmem:[%s517] sm:$0xff]
      %v540 = vld [vmem:[%s517 + $0x8] sm:$0xff]
      %v541 = vld [vmem:[%s517 + $0x10] sm:$0xff]
      %v542 = vld [vmem:[%s517 + $0x18] sm:$0xff]
      %v543 = vld [vmem:[%s1] sm:$0xff]
      %v544 = vld [vmem:[%s1 + $0x8] sm:$0xff]
      %v545 = vld [vmem:[%s3] sm:$0x1]
      %v547 = vlaneseq
      %v548 = vshrl.u32 %v547, 7
      %v549 = vsub.s32 0, %v548
      %v550 = vrot.slane %v545, %v549
      %vm552 = vcmask 130048
      %v554 = vsel %vm552, %v539, 0
      %v557 = vsel %vm552, %v540, 0
      %v560 = vsel %vm552, %v541, 0
      %v563 = vsel %vm552, %v542, 0
      %565 = vmatprep.subr.mxu0 0.0
      %566 = vmatpush1.msra.mxu0 0.0
      %567 = vmatprep.subr.mxu0 0.0
      %568 = vmatpush1.msra.mxu0 0.0
      %569 = vmatprep.subr.mxu0 0.0
      %570 = vmatpush1.msra.mxu0 0.0
      %571 = vmatprep.subr.mxu0 0.0
      %572 = vmatpush1.msra.mxu0 0.0
      %573 = vmatprep.subr.mxu0 0.0
      %574 = vmatpush1.msra.mxu0 0.0
      %575 = vmatprep.subr.mxu0 0.0
      %576 = vmatpush1.msra.mxu0 0.0
      %577 = vmatprep.subr.mxu0 0.0
      %578 = vmatpush1.msra.mxu0 0.0
      %579 = vmatprep.subr.mxu0 0.0
      %580 = vmatpush1.msra.mxu0 0.0
      %581 = vmatprep.subr.mxu0 0.0
      %582 = vmatpush1.msra.mxu0 0.0
      %583 = vmatprep.subr.mxu0 0.0
      %584 = vmatpush1.msra.mxu0 0.0
      %585 = vmatprep.subr.mxu0 0.0
      %586 = vmatpush1.msra.mxu0 0.0
      %587 = vmatprep.subr.mxu0 0.0
      %588 = vmatpush1.msra.mxu0 0.0
      %589 = vmatprep.subr.mxu0 0.0
      %590 = vmatpush1.msra.mxu0 0.0
      %591 = vmatprep.subr.mxu0 0.0
      %592 = vmatpush1.msra.mxu0 0.0
      %593 = vmatprep.subr.mxu0 0.0
      %594 = vmatpush1.msra.mxu0 %v544
      %595 = vmatprep.subr.mxu0 0.0
      %596 = vmatpush1.msra.mxu0 %v543
      %597 = vmatprep.subr.mxu0 0.0
      %598 = vmatpush2.msra.mxu0 0.0
      %599 = vmatprep.subr.mxu0 0.0
      %600 = vmatpush2.msra.mxu0 0.0
      %601 = vmatprep.subr.mxu0 0.0
      %602 = vmatpush2.msra.mxu0 0.0
      %603 = vmatprep.subr.mxu0 0.0
      %604 = vmatpush2.msra.mxu0 0.0
      %605 = vmatprep.subr.mxu0 0.0
      %606 = vmatpush2.msra.mxu0 0.0
      %607 = vmatprep.subr.mxu0 0.0
      %608 = vmatpush2.msra.mxu0 0.0
      %609 = vmatprep.subr.mxu0 0.0
      %610 = vmatpush2.msra.mxu0 0.0
      %611 = vmatprep.subr.mxu0 0.0
      %612 = vmatpush2.msra.mxu0 0.0
      %613 = vmatprep.subr.mxu0 0.0
      %614 = vmatpush2.msra.mxu0 0.0
      %615 = vmatprep.subr.mxu0 0.0
      %616 = vmatpush2.msra.mxu0 0.0
      %617 = vmatprep.subr.mxu0 0.0
      %618 = vmatpush2.msra.mxu0 0.0
      %619 = vmatprep.subr.mxu0 0.0
      %620 = vmatpush2.msra.mxu0 0.0
      %621 = vmatprep.subr.mxu0 0.0
      %622 = vmatpush2.msra.mxu0 0.0
      %623 = vmatprep.subr.mxu0 0.0
      %624 = vmatpush2.msra.mxu0 0.0
      %625 = vmatprep.subr.mxu0 0.0
      %626 = vmatpush2.msra.mxu0 0.0
      %627 = vmatprep.subr.mxu0 0.0
      %628 = vmatpush2.msra.mxu0 0.0
      %629 = vmatprep.mubr.f32.mxu0 0.0
      %630 = vmatmul.mubr.f32.gmra.mxu0 %v554
      %v631 = vpop.f32.mrf.mxu0
      %v632 = vadd.f32 %v550, %v631
      %v633 = vpop.f32.mrf.mxu0
      %634 = vmatprep.mubr.f32.mxu0 0.0
      %635 = vmatmul.mubr.f32.gmra.mxu0 %v557
      %v636 = vpop.f32.mrf.mxu0
      %v637 = vadd.f32 %v550, %v636
      %v638 = vpop.f32.mrf.mxu0
      %639 = vmatprep.mubr.f32.mxu0 0.0
      %640 = vmatmul.mubr.f32.gmra.mxu0 %v560
      %v641 = vpop.f32.mrf.mxu0
      %v642 = vadd.f32 %v550, %v641
      %v643 = vpop.f32.mrf.mxu0
      %644 = vmatprep.mubr.f32.mxu0 0.0
      %645 = vmatmul.mubr.f32.gmra.mxu0 %v563
      %v646 = vpop.f32.mrf.mxu0
      %v647 = vadd.f32 %v550, %v646
      %v648 = vpop.f32.mrf.mxu0
      %649 = vdwg.mxu0
      %650 = vst [vmem:[#allocation2] sm:$0xff] %v632
      %651 = vst [vmem:[#allocation2 + $0x8] sm:$0xff] %v637
      %652 = vst [vmem:[#allocation2 + $0x10] sm:$0xff] %v642
      %653 = vst [vmem:[#allocation2 + $0x18] sm:$0xff] %v647
      %v654 = vld [vmem:[%s2] sm:$0xff]
      %v655 = vld [vmem:[%s2 + $0x8] sm:$0xff]
      %v656 = vld [vmem:[%s2 + $0x10] sm:$0xff]
      %v657 = vld [vmem:[%s2 + $0x18] sm:$0xff]
      %v658 = vld [vmem:[%s4] sm:$0xff]
      %v659 = vld [vmem:[%s4 + $0x8] sm:$0xff]
      %v660 = vld [vmem:[%s4 + $0x10] sm:$0xff]
      %v661 = vld [vmem:[%s4 + $0x18] sm:$0xff]
      %v662 = vld [vmem:[%s5] sm:$0xff]
      %v663 = vld [vmem:[%s7] sm:$0xff]
      %v664 = vld [vmem:[%s8] sm:$0xff]
      %v665 = vld [vmem:[%s8 + $0x8] sm:$0xff]
      %v666 = vld [vmem:[%s8 + $0x10] sm:$0xff]
      %v667 = vld [vmem:[%s8 + $0x18] sm:$0xff]
      %v668 = vld [vmem:[%s10] sm:$0xff]
      %v669 = vld [vmem:[%s10 + $0x8] sm:$0xff]
      %v670 = vld [vmem:[%s10 + $0x10] sm:$0xff]
      %v671 = vld [vmem:[%s10 + $0x18] sm:$0xff]
      %v672 = vld [vmem:[%s11] sm:$0xff]
      %v673 = vld [vmem:[%s6] sm:$0x1]
      %v675 = vlaneseq
      %v676 = vshrl.u32 %v675, 7
      %v677 = vsub.s32 0, %v676
      %v678 = vrot.slane %v673, %v677
      %v680 = vld [vmem:[%s9] sm:$0x1]
      %v682 = vlaneseq
      %v683 = vshrl.u32 %v682, 7
      %v684 = vsub.s32 0, %v683
      %v685 = vrot.slane %v680, %v684
      %v687 = vld [vmem:[%s12] sm:$0x1]
      %v689 = vlaneseq
      %v690 = vshrl.u32 %v689, 7
      %v691 = vsub.s32 0, %v690
      %v692 = vrot.slane %v687, %v691
      %v694 = vld [vmem:[#allocation4] sm:$0xff]
      %s695 = scalar_lea.vmem [#allocation4], 8
      %v696 = vld [vmem:[%s695] sm:$0xff]
      %v697 = vld [vmem:[#allocation5] sm:$0xff]
      %s698 = scalar_lea.vmem [#allocation5], 8
      %v699 = vld [vmem:[%s698] sm:$0xff]
      %s700 = scalar_lea.vmem [#allocation4], 16
      %v701 = vld [vmem:[%s700] sm:$0xff]
      %s702 = scalar_lea.vmem [#allocation4], 24
      %v703 = vld [vmem:[%s702] sm:$0xff]
      %s704 = scalar_lea.vmem [#allocation5], 16
      %v705 = vld [vmem:[%s704] sm:$0xff]
      %s706 = scalar_lea.vmem [#allocation5], 24
      %v707 = vld [vmem:[%s706] sm:$0xff]
      %v708 = vld [vmem:[#allocation2] sm:$0xff]
      %vm709 = vcmask 261120
      %v711 = vsel %vm709, %v694, 0
      %713 = vmatprep.subr.mxu0 0.0
      %714 = vmatpush1.msra.mxu0 0.0
      %715 = vmatprep.subr.mxu0 0.0
      %716 = vmatpush1.msra.mxu0 0.0
      %717 = vmatprep.subr.mxu0 0.0
      %718 = vmatpush1.msra.mxu0 0.0
      %719 = vmatprep.subr.mxu0 0.0
      %720 = vmatpush1.msra.mxu0 0.0
      %721 = vmatprep.subr.mxu0 0.0
      %722 = vmatpush1.msra.mxu0 0.0
      %723 = vmatprep.subr.mxu0 0.0
      %724 = vmatpush1.msra.mxu0 0.0
      %725 = vmatprep.subr.mxu0 0.0
      %726 = vmatpush1.msra.mxu0 0.0
      %727 = vmatprep.subr.mxu0 0.0
      %728 = vmatpush1.msra.mxu0 0.0
      %729 = vmatprep.subr.mxu0 0.0
      %730 = vmatpush1.msra.mxu0 0.0
      %731 = vmatprep.subr.mxu0 0.0
      %732 = vmatpush1.msra.mxu0 0.0
      %733 = vmatprep.subr.mxu0 0.0
      %734 = vmatpush1.msra.mxu0 0.0
      %735 = vmatprep.subr.mxu0 0.0
      %736 = vmatpush1.msra.mxu0 0.0
      %737 = vmatprep.subr.mxu0 0.0
      %738 = vmatpush1.msra.mxu0 %v657
      %739 = vmatprep.subr.mxu0 0.0
      %740 = vmatpush1.msra.mxu0 %v656
      %741 = vmatprep.subr.mxu0 0.0
      %742 = vmatpush1.msra.mxu0 %v655
      %743 = vmatprep.subr.mxu0 0.0
      %744 = vmatpush1.msra.mxu0 %v654
      %745 = vmatprep.subr.mxu0 0.0
      %746 = vmatpush2.msra.mxu0 0.0
      %747 = vmatprep.subr.mxu0 0.0
      %748 = vmatpush2.msra.mxu0 0.0
      %749 = vmatprep.subr.mxu0 0.0
      %750 = vmatpush2.msra.mxu0 0.0
      %751 = vmatprep.subr.mxu0 0.0
      %752 = vmatpush2.msra.mxu0 0.0
      %753 = vmatprep.subr.mxu0 0.0
      %754 = vmatpush2.msra.mxu0 0.0
      %755 = vmatprep.subr.mxu0 0.0
      %756 = vmatpush2.msra.mxu0 0.0
      %757 = vmatprep.subr.mxu0 0.0
      %758 = vmatpush2.msra.mxu0 0.0
      %759 = vmatprep.subr.mxu0 0.0
      %760 = vmatpush2.msra.mxu0 0.0
      %761 = vmatprep.subr.mxu0 0.0
      %762 = vmatpush2.msra.mxu0 0.0
      %763 = vmatprep.subr.mxu0 0.0
      %764 = vmatpush2.msra.mxu0 0.0
      %765 = vmatprep.subr.mxu0 0.0
      %766 = vmatpush2.msra.mxu0 0.0
      %767 = vmatprep.subr.mxu0 0.0
      %768 = vmatpush2.msra.mxu0 0.0
      %769 = vmatprep.subr.mxu0 0.0
      %770 = vmatpush2.msra.mxu0 0.0
      %771 = vmatprep.subr.mxu0 0.0
      %772 = vmatpush2.msra.mxu0 0.0
      %773 = vmatprep.subr.mxu0 0.0
      %774 = vmatpush2.msra.mxu0 0.0
      %775 = vmatprep.subr.mxu0 0.0
      %776 = vmatpush2.msra.mxu0 0.0
      %777 = vmatprep.mubr.f32.mxu0 0.0
      %778 = vmatmul.mubr.f32.gmra.mxu0 %v711
      %v779 = vpop.f32.mrf.mxu0
      %v780 = vadd.f32 0.0, %v779
      %v781 = vpop.f32.mrf.mxu0
      %782 = vdwg.mxu0
      %v783 = vadd.f32 %v708, %v780
      %v784 = vmul.f32 %v783, 0.5
      %v785 = vtanh.pop %v784
      %v786 = vmul.f32 %v785, 0.5
      %v787 = vadd.f32 %v786, 0.5
      %v788 = vtanh.pop %v783
      %790 = vrot.lane.b32.xlu0 %v696, 32
      %v791 = vpop.permute.xlu0 %790
      %v793 = vmul.f32 %v787, %v791
      %795 = vrot.lane.b32.xlu0 %v788, 32
      %v796 = vpop.permute.xlu0 %795
      %v798 = vmul.f32 %v787, %v796
      %800 = vrot.lane.b32.xlu0 %v798, 32
      %v801 = vpop.permute.xlu0 %800
      %v803 = vadd.f32 %v793, %v801
      %v804 = vtanh.pop %v803
      %806 = vrot.lane.b32.xlu0 %v804, 32
      %v807 = vpop.permute.xlu0 %806
      %v809 = vmul.f32 %v787, %v807
      %vm810 = vcmask 64512
      %v812 = vsel %vm810, %v697, 0
      %814 = vmatprep.subr.mxu0 0.0
      %815 = vmatpush1.msra.mxu0 0.0
      %816 = vmatprep.subr.mxu0 0.0
      %817 = vmatpush1.msra.mxu0 0.0
      %818 = vmatprep.subr.mxu0 0.0
      %819 = vmatpush1.msra.mxu0 0.0
      %820 = vmatprep.subr.mxu0 0.0
      %821 = vmatpush1.msra.mxu0 0.0
      %822 = vmatprep.subr.mxu0 0.0
      %823 = vmatpush1.msra.mxu0 0.0
      %824 = vmatprep.subr.mxu0 0.0
      %825 = vmatpush1.msra.mxu0 0.0
      %826 = vmatprep.subr.mxu0 0.0
      %827 = vmatpush1.msra.mxu0 0.0
      %828 = vmatprep.subr.mxu0 0.0
      %829 = vmatpush1.msra.mxu0 0.0
      %830 = vmatprep.subr.mxu0 0.0
      %831 = vmatpush1.msra.mxu0 0.0
      %832 = vmatprep.subr.mxu0 0.0
      %833 = vmatpush1.msra.mxu0 0.0
      %834 = vmatprep.subr.mxu0 0.0
      %835 = vmatpush1.msra.mxu0 0.0
      %836 = vmatprep.subr.mxu0 0.0
      %837 = vmatpush1.msra.mxu0 0.0
      %838 = vmatprep.subr.mxu0 0.0
      %839 = vmatpush1.msra.mxu0 0.0
      %840 = vmatprep.subr.mxu0 0.0
      %841 = vmatpush1.msra.mxu0 0.0
      %842 = vmatprep.subr.mxu0 0.0
      %843 = vmatpush1.msra.mxu0 0.0
      %844 = vmatprep.subr.mxu0 0.0
      %845 = vmatpush1.msra.mxu0 %v662
      %846 = vmatprep.subr.mxu0 0.0
      %847 = vmatpush2.msra.mxu0 0.0
      %848 = vmatprep.subr.mxu0 0.0
      %849 = vmatpush2.msra.mxu0 0.0
      %850 = vmatprep.subr.mxu0 0.0
      %851 = vmatpush2.msra.mxu0 0.0
      %852 = vmatprep.subr.mxu0 0.0
      %853 = vmatpush2.msra.mxu0 0.0
      %854 = vmatprep.subr.mxu0 0.0
      %855 = vmatpush2.msra.mxu0 0.0
      %856 = vmatprep.subr.mxu0 0.0
      %857 = vmatpush2.msra.mxu0 0.0
      %858 = vmatprep.subr.mxu0 0.0
      %859 = vmatpush2.msra.mxu0 0.0
      %860 = vmatprep.subr.mxu0 0.0
      %861 = vmatpush2.msra.mxu0 0.0
      %862 = vmatprep.subr.mxu0 0.0
      %863 = vmatpush2.msra.mxu0 0.0
      %864 = vmatprep.subr.mxu0 0.0
      %865 = vmatpush2.msra.mxu0 0.0
      %866 = vmatprep.subr.mxu0 0.0
      %867 = vmatpush2.msra.mxu0 0.0
      %868 = vmatprep.subr.mxu0 0.0
      %869 = vmatpush2.msra.mxu0 0.0
      %870 = vmatprep.subr.mxu0 0.0
      %871 = vmatpush2.msra.mxu0 0.0
      %872 = vmatprep.subr.mxu0 0.0
      %873 = vmatpush2.msra.mxu0 0.0
      %874 = vmatprep.subr.mxu0 0.0
      %875 = vmatpush2.msra.mxu0 0.0
      %876 = vmatprep.subr.mxu0 0.0
      %877 = vmatpush2.msra.mxu0 0.0
      %878 = vmatprep.mubr.f32.mxu0 0.0
      %879 = vmatmul.mubr.f32.gmra.mxu0 %v812
      %v880 = vpop.f32.mrf.mxu0
      %v881 = vadd.f32 0.0, %v880
      %v882 = vpop.f32.mrf.mxu0
      %883 = vdwg.mxu0
      %885 = vrot.lane.b32.xlu0 %v809, 64
      %v886 = vpop.permute.xlu0 %885
      %v887 = vsel %vm709, %v886, 0
      %889 = vmatprep.subr.mxu0 0.0
      %890 = vmatpush1.msra.mxu0 0.0
      %891 = vmatprep.subr.mxu0 0.0
      %892 = vmatpush1.msra.mxu0 0.0
      %893 = vmatprep.subr.mxu0 0.0
      %894 = vmatpush1.msra.mxu0 0.0
      %895 = vmatprep.subr.mxu0 0.0
      %896 = vmatpush1.msra.mxu0 0.0
      %897 = vmatprep.subr.mxu0 0.0
      %898 = vmatpush1.msra.mxu0 0.0
      %899 = vmatprep.subr.mxu0 0.0
      %900 = vmatpush1.msra.mxu0 0.0
      %901 = vmatprep.subr.mxu0 0.0
      %902 = vmatpush1.msra.mxu0 0.0
      %903 = vmatprep.subr.mxu0 0.0
      %904 = vmatpush1.msra.mxu0 0.0
      %905 = vmatprep.subr.mxu0 0.0
      %906 = vmatpush1.msra.mxu0 0.0
      %907 = vmatprep.subr.mxu0 0.0
      %908 = vmatpush1.msra.mxu0 0.0
      %909 = vmatprep.subr.mxu0 0.0
      %910 = vmatpush1.msra.mxu0 0.0
      %911 = vmatprep.subr.mxu0 0.0
      %912 = vmatpush1.msra.mxu0 0.0
      %913 = vmatprep.subr.mxu0 0.0
      %914 = vmatpush1.msra.mxu0 %v661
      %915 = vmatprep.subr.mxu0 0.0
      %916 = vmatpush1.msra.mxu0 %v660
      %917 = vmatprep.subr.mxu0 0.0
      %918 = vmatpush1.msra.mxu0 %v659
      %919 = vmatprep.subr.mxu0 0.0
      %920 = vmatpush1.msra.mxu0 %v658
      %921 = vmatprep.subr.mxu0 0.0
      %922 = vmatpush2.msra.mxu0 0.0
      %923 = vmatprep.subr.mxu0 0.0
      %924 = vmatpush2.msra.mxu0 0.0
      %925 = vmatprep.subr.mxu0 0.0
      %926 = vmatpush2.msra.mxu0 0.0
      %927 = vmatprep.subr.mxu0 0.0
      %928 = vmatpush2.msra.mxu0 0.0
      %929 = vmatprep.subr.mxu0 0.0
      %930 = vmatpush2.msra.mxu0 0.0
      %931 = vmatprep.subr.mxu0 0.0
      %932 = vmatpush2.msra.mxu0 0.0
      %933 = vmatprep.subr.mxu0 0.0
      %934 = vmatpush2.msra.mxu0 0.0
      %935 = vmatprep.subr.mxu0 0.0
      %936 = vmatpush2.msra.mxu0 0.0
      %937 = vmatprep.subr.mxu0 0.0
      %938 = vmatpush2.msra.mxu0 0.0
      %939 = vmatprep.subr.mxu0 0.0
      %940 = vmatpush2.msra.mxu0 0.0
      %941 = vmatprep.subr.mxu0 0.0
      %942 = vmatpush2.msra.mxu0 0.0
      %943 = vmatprep.subr.mxu0 0.0
      %944 = vmatpush2.msra.mxu0 0.0
      %945 = vmatprep.subr.mxu0 0.0
      %946 = vmatpush2.msra.mxu0 0.0
      %947 = vmatprep.subr.mxu0 0.0
      %948 = vmatpush2.msra.mxu0 0.0
      %949 = vmatprep.subr.mxu0 0.0
      %950 = vmatpush2.msra.mxu0 0.0
      %951 = vmatprep.subr.mxu0 0.0
      %952 = vmatpush2.msra.mxu0 0.0
      %953 = vmatprep.mubr.f32.mxu0 0.0
      %954 = vmatmul.mubr.f32.gmra.mxu0 %v887
      %v955 = vpop.f32.mrf.mxu0
      %v956 = vadd.f32 %v881, %v955
      %v957 = vpop.f32.mrf.mxu0
      %958 = vdwg.mxu0
      %v959 = vadd.f32 %v956, %v678
      %v960 = vmul.f32 %v959, 0.5
      %v961 = vtanh.pop %v960
      %v962 = vmul.f32 %v961, 0.5
      %v963 = vadd.f32 %v962, 0.5
      %v964 = vtanh.pop %v959
      %966 = vrot.lane.b32.xlu0 %v699, 8
      %v967 = vpop.permute.xlu0 %966
      %v969 = vmul.f32 %v963, %v967
      %971 = vrot.lane.b32.xlu0 %v964, 104
      %v972 = vpop.permute.xlu0 %971
      %v974 = vmul.f32 %v963, %v972
      %976 = vrot.lane.b32.xlu0 %v974, 8
      %v977 = vpop.permute.xlu0 %976
      %v979 = vadd.f32 %v969, %v977
      %v980 = vtanh.pop %v979
      %982 = vrot.lane.b32.xlu0 %v980, 8
      %v983 = vpop.permute.xlu0 %982
      %v985 = vmul.f32 %v963, %v983
      %v987 = vsel %vm709, %v701, 0
      %989 = vmatprep.subr.mxu0 0.0
      %990 = vmatpush1.msra.mxu0 0.0
      %991 = vmatprep.subr.mxu0 0.0
      %992 = vmatpush1.msra.mxu0 0.0
      %993 = vmatprep.subr.mxu0 0.0
      %994 = vmatpush1.msra.mxu0 0.0
      %995 = vmatprep.subr.mxu0 0.0
      %996 = vmatpush1.msra.mxu0 0.0
      %997 = vmatprep.subr.mxu0 0.0
      %998 = vmatpush1.msra.mxu0 0.0
      %999 = vmatprep.subr.mxu0 0.0
      %1000 = vmatpush1.msra.mxu0 0.0
      %1001 = vmatprep.subr.mxu0 0.0
      %1002 = vmatpush1.msra.mxu0 0.0
      %1003 = vmatprep.subr.mxu0 0.0
      %1004 = vmatpush1.msra.mxu0 0.0
      %1005 = vmatprep.subr.mxu0 0.0
      %1006 = vmatpush1.msra.mxu0 0.0
      %1007 = vmatprep.subr.mxu0 0.0
      %1008 = vmatpush1.msra.mxu0 0.0
      %1009 = vmatprep.subr.mxu0 0.0
      %1010 = vmatpush1.msra.mxu0 0.0
      %1011 = vmatprep.subr.mxu0 0.0
      %1012 = vmatpush1.msra.mxu0 0.0
      %1013 = vmatprep.subr.mxu0 0.0
      %1014 = vmatpush1.msra.mxu0 %v667
      %1015 = vmatprep.subr.mxu0 0.0
      %1016 = vmatpush1.msra.mxu0 %v666
      %1017 = vmatprep.subr.mxu0 0.0
      %1018 = vmatpush1.msra.mxu0 %v665
      %1019 = vmatprep.subr.mxu0 0.0
      %1020 = vmatpush1.msra.mxu0 %v664
      %1021 = vmatprep.subr.mxu0 0.0
      %1022 = vmatpush2.msra.mxu0 0.0
      %1023 = vmatprep.subr.mxu0 0.0
      %1024 = vmatpush2.msra.mxu0 0.0
      %1025 = vmatprep.subr.mxu0 0.0
      %1026 = vmatpush2.msra.mxu0 0.0
      %1027 = vmatprep.subr.mxu0 0.0
      %1028 = vmatpush2.msra.mxu0 0.0
      %1029 = vmatprep.subr.mxu0 0.0
      %1030 = vmatpush2.msra.mxu0 0.0
      %1031 = vmatprep.subr.mxu0 0.0
      %1032 = vmatpush2.msra.mxu0 0.0
      %1033 = vmatprep.subr.mxu0 0.0
      %1034 = vmatpush2.msra.mxu0 0.0
      %1035 = vmatprep.subr.mxu0 0.0
      %1036 = vmatpush2.msra.mxu0 0.0
      %1037 = vmatprep.subr.mxu0 0.0
      %1038 = vmatpush2.msra.mxu0 0.0
      %1039 = vmatprep.subr.mxu0 0.0
      %1040 = vmatpush2.msra.mxu0 0.0
      %1041 = vmatprep.subr.mxu0 0.0
      %1042 = vmatpush2.msra.mxu0 0.0
      %1043 = vmatprep.subr.mxu0 0.0
      %1044 = vmatpush2.msra.mxu0 0.0
      %1045 = vmatprep.subr.mxu0 0.0
      %1046 = vmatpush2.msra.mxu0 0.0
      %1047 = vmatprep.subr.mxu0 0.0
      %1048 = vmatpush2.msra.mxu0 0.0
      %1049 = vmatprep.subr.mxu0 0.0
      %1050 = vmatpush2.msra.mxu0 0.0
      %1051 = vmatprep.subr.mxu0 0.0
      %1052 = vmatpush2.msra.mxu0 0.0
      %1053 = vmatprep.mubr.f32.mxu0 0.0
      %1054 = vmatmul.mubr.f32.gmra.mxu0 %v987
      %v1055 = vpop.f32.mrf.mxu0
      %v1056 = vadd.f32 0.0, %v1055
      %v1057 = vpop.f32.mrf.mxu0
      %1058 = vdwg.mxu0
      %1060 = vrot.lane.b32.xlu0 %v985, 112
      %v1061 = vpop.permute.xlu0 %1060
      %v1062 = vsel %vm810, %v1061, 0
      %1064 = vmatprep.subr.mxu0 0.0
      %1065 = vmatpush1.msra.mxu0 0.0
      %1066 = vmatprep.subr.mxu0 0.0
      %1067 = vmatpush1.msra.mxu0 0.0
      %1068 = vmatprep.subr.mxu0 0.0
      %1069 = vmatpush1.msra.mxu0 0.0
      %1070 = vmatprep.subr.mxu0 0.0
      %1071 = vmatpush1.msra.mxu0 0.0
      %1072 = vmatprep.subr.mxu0 0.0
      %1073 = vmatpush1.msra.mxu0 0.0
      %1074 = vmatprep.subr.mxu0 0.0
      %1075 = vmatpush1.msra.mxu0 0.0
      %1076 = vmatprep.subr.mxu0 0.0
      %1077 = vmatpush1.msra.mxu0 0.0
      %1078 = vmatprep.subr.mxu0 0.0
      %1079 = vmatpush1.msra.mxu0 0.0
      %1080 = vmatprep.subr.mxu0 0.0
      %1081 = vmatpush1.msra.mxu0 0.0
      %1082 = vmatprep.subr.mxu0 0.0
      %1083 = vmatpush1.msra.mxu0 0.0
      %1084 = vmatprep.subr.mxu0 0.0
      %1085 = vmatpush1.msra.mxu0 0.0
      %1086 = vmatprep.subr.mxu0 0.0
      %1087 = vmatpush1.msra.mxu0 0.0
      %1088 = vmatprep.subr.mxu0 0.0
      %1089 = vmatpush1.msra.mxu0 0.0
      %1090 = vmatprep.subr.mxu0 0.0
      %1091 = vmatpush1.msra.mxu0 0.0
      %1092 = vmatprep.subr.mxu0 0.0
      %1093 = vmatpush1.msra.mxu0 0.0
      %1094 = vmatprep.subr.mxu0 0.0
      %1095 = vmatpush1.msra.mxu0 %v663
      %1096 = vmatprep.subr.mxu0 0.0
      %1097 = vmatpush2.msra.mxu0 0.0
      %1098 = vmatprep.subr.mxu0 0.0
      %1099 = vmatpush2.msra.mxu0 0.0
      %1100 = vmatprep.subr.mxu0 0.0
      %1101 = vmatpush2.msra.mxu0 0.0
      %1102 = vmatprep.subr.mxu0 0.0
      %1103 = vmatpush2.msra.mxu0 0.0
      %1104 = vmatprep.subr.mxu0 0.0
      %1105 = vmatpush2.msra.mxu0 0.0
      %1106 = vmatprep.subr.mxu0 0.0
      %1107 = vmatpush2.msra.mxu0 0.0
      %1108 = vmatprep.subr.mxu0 0.0
      %1109 = vmatpush2.msra.mxu0 0.0
      %1110 = vmatprep.subr.mxu0 0.0
      %1111 = vmatpush2.msra.mxu0 0.0
      %1112 = vmatprep.subr.mxu0 0.0
      %1113 = vmatpush2.msra.mxu0 0.0
      %1114 = vmatprep.subr.mxu0 0.0
      %1115 = vmatpush2.msra.mxu0 0.0
      %1116 = vmatprep.subr.mxu0 0.0
      %1117 = vmatpush2.msra.mxu0 0.0
      %1118 = vmatprep.subr.mxu0 0.0
      %1119 = vmatpush2.msra.mxu0 0.0
      %1120 = vmatprep.subr.mxu0 0.0
      %1121 = vmatpush2.msra.mxu0 0.0
      %1122 = vmatprep.subr.mxu0 0.0
      %1123 = vmatpush2.msra.mxu0 0.0
      %1124 = vmatprep.subr.mxu0 0.0
      %1125 = vmatpush2.msra.mxu0 0.0
      %1126 = vmatprep.subr.mxu0 0.0
      %1127 = vmatpush2.msra.mxu0 0.0
      %1128 = vmatprep.mubr.f32.mxu0 0.0
      %1129 = vmatmul.mubr.f32.gmra.mxu0 %v1062
      %v1130 = vpop.f32.mrf.mxu0
      %v1131 = vadd.f32 %v1056, %v1130
      %v1132 = vpop.f32.mrf.mxu0
      %1133 = vdwg.mxu0
      %v1134 = vadd.f32 %v1131, %v685
      %v1135 = vmul.f32 %v1134, 0.5
      %v1136 = vtanh.pop %v1135
      %v1137 = vmul.f32 %v1136, 0.5
      %v1138 = vadd.f32 %v1137, 0.5
      %v1139 = vtanh.pop %v1134
      %1141 = vrot.lane.b32.xlu0 %v703, 32
      %v1142 = vpop.permute.xlu0 %1141
      %v1144 = vmul.f32 %v1138, %v1142
      %1146 = vrot.lane.b32.xlu0 %v1139, 32
      %v1147 = vpop.permute.xlu0 %1146
      %v1149 = vmul.f32 %v1138, %v1147
      %1151 = vrot.lane.b32.xlu0 %v1149, 32
      %v1152 = vpop.permute.xlu0 %1151
      %v1154 = vadd.f32 %v1144, %v1152
      %v1155 = vtanh.pop %v1154
      %1157 = vrot.lane.b32.xlu0 %v1155, 32
      %v1158 = vpop.permute.xlu0 %1157
      %v1160 = vmul.f32 %v1138, %v1158
      %v1162 = vsel %vm810, %v705, 0
      %1164 = vmatprep.subr.mxu0 0.0
      %1165 = vmatpush1.msra.mxu0 0.0
      %1166 = vmatprep.subr.mxu0 0.0
      %1167 = vmatpush1.msra.mxu0 0.0
      %1168 = vmatprep.subr.mxu0 0.0
      %1169 = vmatpush1.msra.mxu0 0.0
      %1170 = vmatprep.subr.mxu0 0.0
      %1171 = vmatpush1.msra.mxu0 0.0
      %1172 = vmatprep.subr.mxu0 0.0
      %1173 = vmatpush1.msra.mxu0 0.0
      %1174 = vmatprep.subr.mxu0 0.0
      %1175 = vmatpush1.msra.mxu0 0.0
      %1176 = vmatprep.subr.mxu0 0.0
      %1177 = vmatpush1.msra.mxu0 0.0
      %1178 = vmatprep.subr.mxu0 0.0
      %1179 = vmatpush1.msra.mxu0 0.0
      %1180 = vmatprep.subr.mxu0 0.0
      %1181 = vmatpush1.msra.mxu0 0.0
      %1182 = vmatprep.subr.mxu0 0.0
      %1183 = vmatpush1.msra.mxu0 0.0
      %1184 = vmatprep.subr.mxu0 0.0
      %1185 = vmatpush1.msra.mxu0 0.0
      %1186 = vmatprep.subr.mxu0 0.0
      %1187 = vmatpush1.msra.mxu0 0.0
      %1188 = vmatprep.subr.mxu0 0.0
      %1189 = vmatpush1.msra.mxu0 0.0
      %1190 = vmatprep.subr.mxu0 0.0
      %1191 = vmatpush1.msra.mxu0 0.0
      %1192 = vmatprep.subr.mxu0 0.0
      %1193 = vmatpush1.msra.mxu0 0.0
      %1194 = vmatprep.subr.mxu0 0.0
      %1195 = vmatpush1.msra.mxu0 %v672
      %1196 = vmatprep.subr.mxu0 0.0
      %1197 = vmatpush2.msra.mxu0 0.0
      %1198 = vmatprep.subr.mxu0 0.0
      %1199 = vmatpush2.msra.mxu0 0.0
      %1200 = vmatprep.subr.mxu0 0.0
      %1201 = vmatpush2.msra.mxu0 0.0
      %1202 = vmatprep.subr.mxu0 0.0
      %1203 = vmatpush2.msra.mxu0 0.0
      %1204 = vmatprep.subr.mxu0 0.0
      %1205 = vmatpush2.msra.mxu0 0.0
      %1206 = vmatprep.subr.mxu0 0.0
      %1207 = vmatpush2.msra.mxu0 0.0
      %1208 = vmatprep.subr.mxu0 0.0
      %1209 = vmatpush2.msra.mxu0 0.0
      %1210 = vmatprep.subr.mxu0 0.0
      %1211 = vmatpush2.msra.mxu0 0.0
      %1212 = vmatprep.subr.mxu0 0.0
      %1213 = vmatpush2.msra.mxu0 0.0
      %1214 = vmatprep.subr.mxu0 0.0
      %1215 = vmatpush2.msra.mxu0 0.0
      %1216 = vmatprep.subr.mxu0 0.0
      %1217 = vmatpush2.msra.mxu0 0.0
      %1218 = vmatprep.subr.mxu0 0.0
      %1219 = vmatpush2.msra.mxu0 0.0
      %1220 = vmatprep.subr.mxu0 0.0
      %1221 = vmatpush2.msra.mxu0 0.0
      %1222 = vmatprep.subr.mxu0 0.0
      %1223 = vmatpush2.msra.mxu0 0.0
      %1224 = vmatprep.subr.mxu0 0.0
      %1225 = vmatpush2.msra.mxu0 0.0
      %1226 = vmatprep.subr.mxu0 0.0
      %1227 = vmatpush2.msra.mxu0 0.0
      %1228 = vmatprep.mubr.f32.mxu0 0.0
      %1229 = vmatmul.mubr.f32.gmra.mxu0 %v1162
      %v1230 = vpop.f32.mrf.mxu0
      %v1231 = vadd.f32 0.0, %v1230
      %v1232 = vpop.f32.mrf.mxu0
      %1233 = vdwg.mxu0
      %1235 = vrot.lane.b32.xlu0 %v1160, 64
      %v1236 = vpop.permute.xlu0 %1235
      %v1237 = vsel %vm709, %v1236, 0
      %1239 = vmatprep.subr.mxu0 0.0
      %1240 = vmatpush1.msra.mxu0 0.0
      %1241 = vmatprep.subr.mxu0 0.0
      %1242 = vmatpush1.msra.mxu0 0.0
      %1243 = vmatprep.subr.mxu0 0.0
      %1244 = vmatpush1.msra.mxu0 0.0
      %1245 = vmatprep.subr.mxu0 0.0
      %1246 = vmatpush1.msra.mxu0 0.0
      %1247 = vmatprep.subr.mxu0 0.0
      %1248 = vmatpush1.msra.mxu0 0.0
      %1249 = vmatprep.subr.mxu0 0.0
      %1250 = vmatpush1.msra.mxu0 0.0
      %1251 = vmatprep.subr.mxu0 0.0
      %1252 = vmatpush1.msra.mxu0 0.0
      %1253 = vmatprep.subr.mxu0 0.0
      %1254 = vmatpush1.msra.mxu0 0.0
      %1255 = vmatprep.subr.mxu0 0.0
      %1256 = vmatpush1.msra.mxu0 0.0
      %1257 = vmatprep.subr.mxu0 0.0
      %1258 = vmatpush1.msra.mxu0 0.0
      %1259 = vmatprep.subr.mxu0 0.0
      %1260 = vmatpush1.msra.mxu0 0.0
      %1261 = vmatprep.subr.mxu0 0.0
      %1262 = vmatpush1.msra.mxu0 0.0
      %1263 = vmatprep.subr.mxu0 0.0
      %1264 = vmatpush1.msra.mxu0 %v671
      %1265 = vmatprep.subr.mxu0 0.0
      %1266 = vmatpush1.msra.mxu0 %v670
      %1267 = vmatprep.subr.mxu0 0.0
      %1268 = vmatpush1.msra.mxu0 %v669
      %1269 = vmatprep.subr.mxu0 0.0
      %1270 = vmatpush1.msra.mxu0 %v668
      %1271 = vmatprep.subr.mxu0 0.0
      %1272 = vmatpush2.msra.mxu0 0.0
      %1273 = vmatprep.subr.mxu0 0.0
      %1274 = vmatpush2.msra.mxu0 0.0
      %1275 = vmatprep.subr.mxu0 0.0
      %1276 = vmatpush2.msra.mxu0 0.0
      %1277 = vmatprep.subr.mxu0 0.0
      %1278 = vmatpush2.msra.mxu0 0.0
      %1279 = vmatprep.subr.mxu0 0.0
      %1280 = vmatpush2.msra.mxu0 0.0
      %1281 = vmatprep.subr.mxu0 0.0
      %1282 = vmatpush2.msra.mxu0 0.0
      %1283 = vmatprep.subr.mxu0 0.0
      %1284 = vmatpush2.msra.mxu0 0.0
      %1285 = vmatprep.subr.mxu0 0.0
      %1286 = vmatpush2.msra.mxu0 0.0
      %1287 = vmatprep.subr.mxu0 0.0
      %1288 = vmatpush2.msra.mxu0 0.0
      %1289 = vmatprep.subr.mxu0 0.0
      %1290 = vmatpush2.msra.mxu0 0.0
      %1291 = vmatprep.subr.mxu0 0.0
      %1292 = vmatpush2.msra.mxu0 0.0
      %1293 = vmatprep.subr.mxu0 0.0
      %1294 = vmatpush2.msra.mxu0 0.0
      %1295 = vmatprep.subr.mxu0 0.0
      %1296 = vmatpush2.msra.mxu0 0.0
      %1297 = vmatprep.subr.mxu0 0.0
      %1298 = vmatpush2.msra.mxu0 0.0
      %1299 = vmatprep.subr.mxu0 0.0
      %1300 = vmatpush2.msra.mxu0 0.0
      %1301 = vmatprep.subr.mxu0 0.0
      %1302 = vmatpush2.msra.mxu0 0.0
      %1303 = vmatprep.mubr.f32.mxu0 0.0
      %1304 = vmatmul.mubr.f32.gmra.mxu0 %v1237
      %v1305 = vpop.f32.mrf.mxu0
      %v1306 = vadd.f32 %v1231, %v1305
      %v1307 = vpop.f32.mrf.mxu0
      %1308 = vdwg.mxu0
      %v1309 = vadd.f32 %v1306, %v692
      %v1310 = vmul.f32 %v1309, 0.5
      %v1311 = vtanh.pop %v1310
      %v1312 = vmul.f32 %v1311, 0.5
      %v1313 = vadd.f32 %v1312, 0.5
      %v1314 = vtanh.pop %v1309
      %1316 = vrot.lane.b32.xlu0 %v707, 8
      %v1317 = vpop.permute.xlu0 %1316
      %v1319 = vmul.f32 %v1313, %v1317
      %1321 = vrot.lane.b32.xlu0 %v1314, 104
      %v1322 = vpop.permute.xlu0 %1321
      %v1324 = vmul.f32 %v1313, %v1322
      %1326 = vrot.lane.b32.xlu0 %v1324, 8
      %v1327 = vpop.permute.xlu0 %1326
      %v1329 = vadd.f32 %v1319, %v1327
      %v1330 = vtanh.pop %v1329
      %1332 = vrot.lane.b32.xlu0 %v1330, 8
      %v1333 = vpop.permute.xlu0 %1332
      %v1335 = vmul.f32 %v1313, %v1333
      %1337 = vrot.lane.b32.xlu0 %v1335, 112
      %v1338 = vpop.permute.xlu0 %1337
      %1340 = vst.msk [vmem:[#allocation3] sm:$0xff] %vm810, %v1338
      %s1341 = scalar_lea.vmem [#allocation2], 8
      %v1342 = vld [vmem:[%s1341] sm:$0xff]
      %1343 = vmatprep.subr.mxu0 0.0
      %1344 = vmatpush1.msra.mxu0 0.0
      %1345 = vmatprep.subr.mxu0 0.0
      %1346 = vmatpush1.msra.mxu0 0.0
      %1347 = vmatprep.subr.mxu0 0.0
      %1348 = vmatpush1.msra.mxu0 0.0
      %1349 = vmatprep.subr.mxu0 0.0
      %1350 = vmatpush1.msra.mxu0 0.0
      %1351 = vmatprep.subr.mxu0 0.0
      %1352 = vmatpush1.msra.mxu0 0.0
      %1353 = vmatprep.subr.mxu0 0.0
      %1354 = vmatpush1.msra.mxu0 0.0
      %1355 = vmatprep.subr.mxu0 0.0
      %1356 = vmatpush1.msra.mxu0 0.0
      %1357 = vmatprep.subr.mxu0 0.0
      %1358 = vmatpush1.msra.mxu0 0.0
      %1359 = vmatprep.subr.mxu0 0.0
      %1360 = vmatpush1.msra.mxu0 0.0
      %1361 = vmatprep.subr.mxu0 0.0
      %1362 = vmatpush1.msra.mxu0 0.0
      %1363 = vmatprep.subr.mxu0 0.0
      %1364 = vmatpush1.msra.mxu0 0.0
      %1365 = vmatprep.subr.mxu0 0.0
      %1366 = vmatpush1.msra.mxu0 0.0
      %1367 = vmatprep.subr.mxu0 0.0
      %1368 = vmatpush1.msra.mxu0 %v657
      %1369 = vmatprep.subr.mxu0 0.0
      %1370 = vmatpush1.msra.mxu0 %v656
      %1371 = vmatprep.subr.mxu0 0.0
      %1372 = vmatpush1.msra.mxu0 %v655
      %1373 = vmatprep.subr.mxu0 0.0
      %1374 = vmatpush1.msra.mxu0 %v654
      %1375 = vmatprep.subr.mxu0 0.0
      %1376 = vmatpush2.msra.mxu0 0.0
      %1377 = vmatprep.subr.mxu0 0.0
      %1378 = vmatpush2.msra.mxu0 0.0
      %1379 = vmatprep.subr.mxu0 0.0
      %1380 = vmatpush2.msra.mxu0 0.0
      %1381 = vmatprep.subr.mxu0 0.0
      %1382 = vmatpush2.msra.mxu0 0.0
      %1383 = vmatprep.subr.mxu0 0.0
      %1384 = vmatpush2.msra.mxu0 0.0
      %1385 = vmatprep.subr.mxu0 0.0
      %1386 = vmatpush2.msra.mxu0 0.0
      %1387 = vmatprep.subr.mxu0 0.0
      %1388 = vmatpush2.msra.mxu0 0.0
      %1389 = vmatprep.subr.mxu0 0.0
      %1390 = vmatpush2.msra.mxu0 0.0
      %1391 = vmatprep.subr.mxu0 0.0
      %1392 = vmatpush2.msra.mxu0 0.0
      %1393 = vmatprep.subr.mxu0 0.0
      %1394 = vmatpush2.msra.mxu0 0.0
      %1395 = vmatprep.subr.mxu0 0.0
      %1396 = vmatpush2.msra.mxu0 0.0
      %1397 = vmatprep.subr.mxu0 0.0
      %1398 = vmatpush2.msra.mxu0 0.0
      %1399 = vmatprep.subr.mxu0 0.0
      %1400 = vmatpush2.msra.mxu0 0.0
      %1401 = vmatprep.subr.mxu0 0.0
      %1402 = vmatpush2.msra.mxu0 0.0
      %1403 = vmatprep.subr.mxu0 0.0
      %1404 = vmatpush2.msra.mxu0 0.0
      %1405 = vmatprep.subr.mxu0 0.0
      %1406 = vmatpush2.msra.mxu0 0.0
      %1407 = vmatprep.mubr.f32.mxu0 0.0
      %1408 = vmatmul.mubr.f32.gmra.mxu0 %v887
      %v1409 = vpop.f32.mrf.mxu0
      %v1410 = vadd.f32 0.0, %v1409
      %v1411 = vpop.f32.mrf.mxu0
      %1412 = vdwg.mxu0
      %v1413 = vadd.f32 %v1342, %v1410
      %v1414 = vmul.f32 %v1413, 0.5
      %v1415 = vtanh.pop %v1414
      %v1416 = vmul.f32 %v1415, 0.5
      %v1417 = vadd.f32 %v1416, 0.5
      %v1418 = vtanh.pop %v1413
      %v1419 = vmul.f32 %v1417, %v803
      %1421 = vrot.lane.b32.xlu0 %v1418, 32
      %v1422 = vpop.permute.xlu0 %1421
      %v1424 = vmul.f32 %v1417, %v1422
      %1426 = vrot.lane.b32.xlu0 %v1424, 32
      %v1427 = vpop.permute.xlu0 %1426
      %v1429 = vadd.f32 %v1419, %v1427
      %v1430 = vtanh.pop %v1429
      %1432 = vrot.lane.b32.xlu0 %v1430, 32
      %v1433 = vpop.permute.xlu0 %1432
      %v1435 = vmul.f32 %v1417, %v1433
      %1436 = vmatprep.subr.mxu0 0.0
      %1437 = vmatpush1.msra.mxu0 0.0
      %1438 = vmatprep.subr.mxu0 0.0
      %1439 = vmatpush1.msra.mxu0 0.0
      %1440 = vmatprep.subr.mxu0 0.0
      %1441 = vmatpush1.msra.mxu0 0.0
      %1442 = vmatprep.subr.mxu0 0.0
      %1443 = vmatpush1.msra.mxu0 0.0
      %1444 = vmatprep.subr.mxu0 0.0
      %1445 = vmatpush1.msra.mxu0 0.0
      %1446 = vmatprep.subr.mxu0 0.0
      %1447 = vmatpush1.msra.mxu0 0.0
      %1448 = vmatprep.subr.mxu0 0.0
      %1449 = vmatpush1.msra.mxu0 0.0
      %1450 = vmatprep.subr.mxu0 0.0
      %1451 = vmatpush1.msra.mxu0 0.0
      %1452 = vmatprep.subr.mxu0 0.0
      %1453 = vmatpush1.msra.mxu0 0.0
      %1454 = vmatprep.subr.mxu0 0.0
      %1455 = vmatpush1.msra.mxu0 0.0
      %1456 = vmatprep.subr.mxu0 0.0
      %1457 = vmatpush1.msra.mxu0 0.0
      %1458 = vmatprep.subr.mxu0 0.0
      %1459 = vmatpush1.msra.mxu0 0.0
      %1460 = vmatprep.subr.mxu0 0.0
      %1461 = vmatpush1.msra.mxu0 0.0
      %1462 = vmatprep.subr.mxu0 0.0
      %1463 = vmatpush1.msra.mxu0 0.0
      %1464 = vmatprep.subr.mxu0 0.0
      %1465 = vmatpush1.msra.mxu0 0.0
      %1466 = vmatprep.subr.mxu0 0.0
      %1467 = vmatpush1.msra.mxu0 %v662
      %1468 = vmatprep.subr.mxu0 0.0
      %1469 = vmatpush2.msra.mxu0 0.0
      %1470 = vmatprep.subr.mxu0 0.0
      %1471 = vmatpush2.msra.mxu0 0.0
      %1472 = vmatprep.subr.mxu0 0.0
      %1473 = vmatpush2.msra.mxu0 0.0
      %1474 = vmatprep.subr.mxu0 0.0
      %1475 = vmatpush2.msra.mxu0 0.0
      %1476 = vmatprep.subr.mxu0 0.0
      %1477 = vmatpush2.msra.mxu0 0.0
      %1478 = vmatprep.subr.mxu0 0.0
      %1479 = vmatpush2.msra.mxu0 0.0
      %1480 = vmatprep.subr.mxu0 0.0
      %1481 = vmatpush2.msra.mxu0 0.0
      %1482 = vmatprep.subr.mxu0 0.0
      %1483 = vmatpush2.msra.mxu0 0.0
      %1484 = vmatprep.subr.mxu0 0.0
      %1485 = vmatpush2.msra.mxu0 0.0
      %1486 = vmatprep.subr.mxu0 0.0
      %1487 = vmatpush2.msra.mxu0 0.0
      %1488 = vmatprep.subr.mxu0 0.0
      %1489 = vmatpush2.msra.mxu0 0.0
      %1490 = vmatprep.subr.mxu0 0.0
      %1491 = vmatpush2.msra.mxu0 0.0
      %1492 = vmatprep.subr.mxu0 0.0
      %1493 = vmatpush2.msra.mxu0 0.0
      %1494 = vmatprep.subr.mxu0 0.0
      %1495 = vmatpush2.msra.mxu0 0.0
      %1496 = vmatprep.subr.mxu0 0.0
      %1497 = vmatpush2.msra.mxu0 0.0
      %1498 = vmatprep.subr.mxu0 0.0
      %1499 = vmatpush2.msra.mxu0 0.0
      %1500 = vmatprep.mubr.f32.mxu0 0.0
      %1501 = vmatmul.mubr.f32.gmra.mxu0 %v1062
      %v1502 = vpop.f32.mrf.mxu0
      %v1503 = vadd.f32 0.0, %v1502
      %v1504 = vpop.f32.mrf.mxu0
      %1505 = vdwg.mxu0
      %1507 = vrot.lane.b32.xlu0 %v1435, 64
      %v1508 = vpop.permute.xlu0 %1507
      %v1509 = vsel %vm709, %v1508, 0
      %1511 = vmatprep.subr.mxu0 0.0
      %1512 = vmatpush1.msra.mxu0 0.0
      %1513 = vmatprep.subr.mxu0 0.0
      %1514 = vmatpush1.msra.mxu0 0.0
      %1515 = vmatprep.subr.mxu0 0.0
      %1516 = vmatpush1.msra.mxu0 0.0
      %1517 = vmatprep.subr.mxu0 0.0
      %1518 = vmatpush1.msra.mxu0 0.0
      %1519 = vmatprep.subr.mxu0 0.0
      %1520 = vmatpush1.msra.mxu0 0.0
      %1521 = vmatprep.subr.mxu0 0.0
      %1522 = vmatpush1.msra.mxu0 0.0
      %1523 = vmatprep.subr.mxu0 0.0
      %1524 = vmatpush1.msra.mxu0 0.0
      %1525 = vmatprep.subr.mxu0 0.0
      %1526 = vmatpush1.msra.mxu0 0.0
      %1527 = vmatprep.subr.mxu0 0.0
      %1528 = vmatpush1.msra.mxu0 0.0
      %1529 = vmatprep.subr.mxu0 0.0
      %1530 = vmatpush1.msra.mxu0 0.0
      %1531 = vmatprep.subr.mxu0 0.0
      %1532 = vmatpush1.msra.mxu0 0.0
      %1533 = vmatprep.subr.mxu0 0.0
      %1534 = vmatpush1.msra.mxu0 0.0
      %1535 = vmatprep.subr.mxu0 0.0
      %1536 = vmatpush1.msra.mxu0 %v661
      %1537 = vmatprep.subr.mxu0 0.0
      %1538 = vmatpush1.msra.mxu0 %v660
      %1539 = vmatprep.subr.mxu0 0.0
      %1540 = vmatpush1.msra.mxu0 %v659
      %1541 = vmatprep.subr.mxu0 0.0
      %1542 = vmatpush1.msra.mxu0 %v658
      %1543 = vmatprep.subr.mxu0 0.0
      %1544 = vmatpush2.msra.mxu0 0.0
      %1545 = vmatprep.subr.mxu0 0.0
      %1546 = vmatpush2.msra.mxu0 0.0
      %1547 = vmatprep.subr.mxu0 0.0
      %1548 = vmatpush2.msra.mxu0 0.0
      %1549 = vmatprep.subr.mxu0 0.0
      %1550 = vmatpush2.msra.mxu0 0.0
      %1551 = vmatprep.subr.mxu0 0.0
      %1552 = vmatpush2.msra.mxu0 0.0
      %1553 = vmatprep.subr.mxu0 0.0
      %1554 = vmatpush2.msra.mxu0 0.0
      %1555 = vmatprep.subr.mxu0 0.0
      %1556 = vmatpush2.msra.mxu0 0.0
      %1557 = vmatprep.subr.mxu0 0.0
      %1558 = vmatpush2.msra.mxu0 0.0
      %1559 = vmatprep.subr.mxu0 0.0
      %1560 = vmatpush2.msra.mxu0 0.0
      %1561 = vmatprep.subr.mxu0 0.0
      %1562 = vmatpush2.msra.mxu0 0.0
      %1563 = vmatprep.subr.mxu0 0.0
      %1564 = vmatpush2.msra.mxu0 0.0
      %1565 = vmatprep.subr.mxu0 0.0
      %1566 = vmatpush2.msra.mxu0 0.0
      %1567 = vmatprep.subr.mxu0 0.0
      %1568 = vmatpush2.msra.mxu0 0.0
      %1569 = vmatprep.subr.mxu0 0.0
      %1570 = vmatpush2.msra.mxu0 0.0
      %1571 = vmatprep.subr.mxu0 0.0
      %1572 = vmatpush2.msra.mxu0 0.0
      %1573 = vmatprep.subr.mxu0 0.0
      %1574 = vmatpush2.msra.mxu0 0.0
      %1575 = vmatprep.mubr.f32.mxu0 0.0
      %1576 = vmatmul.mubr.f32.gmra.mxu0 %v1509
      %v1577 = vpop.f32.mrf.mxu0
      %v1578 = vadd.f32 %v1503, %v1577
      %v1579 = vpop.f32.mrf.mxu0
      %1580 = vdwg.mxu0
      %v1581 = vadd.f32 %v1578, %v678
      %v1582 = vmul.f32 %v1581, 0.5
      %v1583 = vtanh.pop %v1582
      %v1584 = vmul.f32 %v1583, 0.5
      %v1585 = vadd.f32 %v1584, 0.5
      %v1586 = vtanh.pop %v1581
      %v1587 = vmul.f32 %v1585, %v979
      %1589 = vrot.lane.b32.xlu0 %v1586, 104
      %v1590 = vpop.permute.xlu0 %1589
      %v1592 = vmul.f32 %v1585, %v1590
      %1594 = vrot.lane.b32.xlu0 %v1592, 8
      %v1595 = vpop.permute.xlu0 %1594
      %v1597 = vadd.f32 %v1587, %v1595
      %v1598 = vtanh.pop %v1597
      %1600 = vrot.lane.b32.xlu0 %v1598, 8
      %v1601 = vpop.permute.xlu0 %1600
      %v1603 = vmul.f32 %v1585, %v1601
      %1604 = vmatprep.subr.mxu0 0.0
      %1605 = vmatpush1.msra.mxu0 0.0
      %1606 = vmatprep.subr.mxu0 0.0
      %1607 = vmatpush1.msra.mxu0 0.0
      %1608 = vmatprep.subr.mxu0 0.0
      %1609 = vmatpush1.msra.mxu0 0.0
      %1610 = vmatprep.subr.mxu0 0.0
      %1611 = vmatpush1.msra.mxu0 0.0
      %1612 = vmatprep.subr.mxu0 0.0
      %1613 = vmatpush1.msra.mxu0 0.0
      %1614 = vmatprep.subr.mxu0 0.0
      %1615 = vmatpush1.msra.mxu0 0.0
      %1616 = vmatprep.subr.mxu0 0.0
      %1617 = vmatpush1.msra.mxu0 0.0
      %1618 = vmatprep.subr.mxu0 0.0
      %1619 = vmatpush1.msra.mxu0 0.0
      %1620 = vmatprep.subr.mxu0 0.0
      %1621 = vmatpush1.msra.mxu0 0.0
      %1622 = vmatprep.subr.mxu0 0.0
      %1623 = vmatpush1.msra.mxu0 0.0
      %1624 = vmatprep.subr.mxu0 0.0
      %1625 = vmatpush1.msra.mxu0 0.0
      %1626 = vmatprep.subr.mxu0 0.0
      %1627 = vmatpush1.msra.mxu0 0.0
      %1628 = vmatprep.subr.mxu0 0.0
      %1629 = vmatpush1.msra.mxu0 %v667
      %1630 = vmatprep.subr.mxu0 0.0
      %1631 = vmatpush1.msra.mxu0 %v666
      %1632 = vmatprep.subr.mxu0 0.0
      %1633 = vmatpush1.msra.mxu0 %v665
      %1634 = vmatprep.subr.mxu0 0.0
      %1635 = vmatpush1.msra.mxu0 %v664
      %1636 = vmatprep.subr.mxu0 0.0
      %1637 = vmatpush2.msra.mxu0 0.0
      %1638 = vmatprep.subr.mxu0 0.0
      %1639 = vmatpush2.msra.mxu0 0.0
      %1640 = vmatprep.subr.mxu0 0.0
      %1641 = vmatpush2.msra.mxu0 0.0
      %1642 = vmatprep.subr.mxu0 0.0
      %1643 = vmatpush2.msra.mxu0 0.0
      %1644 = vmatprep.subr.mxu0 0.0
      %1645 = vmatpush2.msra.mxu0 0.0
      %1646 = vmatprep.subr.mxu0 0.0
      %1647 = vmatpush2.msra.mxu0 0.0
      %1648 = vmatprep.subr.mxu0 0.0
      %1649 = vmatpush2.msra.mxu0 0.0
      %1650 = vmatprep.subr.mxu0 0.0
      %1651 = vmatpush2.msra.mxu0 0.0
      %1652 = vmatprep.subr.mxu0 0.0
      %1653 = vmatpush2.msra.mxu0 0.0
      %1654 = vmatprep.subr.mxu0 0.0
      %1655 = vmatpush2.msra.mxu0 0.0
      %1656 = vmatprep.subr.mxu0 0.0
      %1657 = vmatpush2.msra.mxu0 0.0
      %1658 = vmatprep.subr.mxu0 0.0
      %1659 = vmatpush2.msra.mxu0 0.0
      %1660 = vmatprep.subr.mxu0 0.0
      %1661 = vmatpush2.msra.mxu0 0.0
      %1662 = vmatprep.subr.mxu0 0.0
      %1663 = vmatpush2.msra.mxu0 0.0
      %1664 = vmatprep.subr.mxu0 0.0
      %1665 = vmatpush2.msra.mxu0 0.0
      %1666 = vmatprep.subr.mxu0 0.0
      %1667 = vmatpush2.msra.mxu0 0.0
      %1668 = vmatprep.mubr.f32.mxu0 0.0
      %1669 = vmatmul.mubr.f32.gmra.mxu0 %v1237
      %v1670 = vpop.f32.mrf.mxu0
      %v1671 = vadd.f32 0.0, %v1670
      %v1672 = vpop.f32.mrf.mxu0
      %1673 = vdwg.mxu0
      %1675 = vrot.lane.b32.xlu0 %v1603, 112
      %v1676 = vpop.permute.xlu0 %1675
      %v1677 = vsel %vm810, %v1676, 0
      %1679 = vmatprep.subr.mxu0 0.0
      %1680 = vmatpush1.msra.mxu0 0.0
      %1681 = vmatprep.subr.mxu0 0.0
      %1682 = vmatpush1.msra.mxu0 0.0
      %1683 = vmatprep.subr.mxu0 0.0
      %1684 = vmatpush1.msra.mxu0 0.0
      %1685 = vmatprep.subr.mxu0 0.0
      %1686 = vmatpush1.msra.mxu0 0.0
      %1687 = vmatprep.subr.mxu0 0.0
      %1688 = vmatpush1.msra.mxu0 0.0
      %1689 = vmatprep.subr.mxu0 0.0
      %1690 = vmatpush1.msra.mxu0 0.0
      %1691 = vmatprep.subr.mxu0 0.0
      %1692 = vmatpush1.msra.mxu0 0.0
      %1693 = vmatprep.subr.mxu0 0.0
      %1694 = vmatpush1.msra.mxu0 0.0
      %1695 = vmatprep.subr.mxu0 0.0
      %1696 = vmatpush1.msra.mxu0 0.0
      %1697 = vmatprep.subr.mxu0 0.0
      %1698 = vmatpush1.msra.mxu0 0.0
      %1699 = vmatprep.subr.mxu0 0.0
      %1700 = vmatpush1.msra.mxu0 0.0
      %1701 = vmatprep.subr.mxu0 0.0
      %1702 = vmatpush1.msra.mxu0 0.0
      %1703 = vmatprep.subr.mxu0 0.0
      %1704 = vmatpush1.msra.mxu0 0.0
      %1705 = vmatprep.subr.mxu0 0.0
      %1706 = vmatpush1.msra.mxu0 0.0
      %1707 = vmatprep.subr.mxu0 0.0
      %1708 = vmatpush1.msra.mxu0 0.0
      %1709 = vmatprep.subr.mxu0 0.0
      %1710 = vmatpush1.msra.mxu0 %v663
      %1711 = vmatprep.subr.mxu0 0.0
      %1712 = vmatpush2.msra.mxu0 0.0
      %1713 = vmatprep.subr.mxu0 0.0
      %1714 = vmatpush2.msra.mxu0 0.0
      %1715 = vmatprep.subr.mxu0 0.0
      %1716 = vmatpush2.msra.mxu0 0.0
      %1717 = vmatprep.subr.mxu0 0.0
      %1718 = vmatpush2.msra.mxu0 0.0
      %1719 = vmatprep.subr.mxu0 0.0
      %1720 = vmatpush2.msra.mxu0 0.0
      %1721 = vmatprep.subr.mxu0 0.0
      %1722 = vmatpush2.msra.mxu0 0.0
      %1723 = vmatprep.subr.mxu0 0.0
      %1724 = vmatpush2.msra.mxu0 0.0
      %1725 = vmatprep.subr.mxu0 0.0
      %1726 = vmatpush2.msra.mxu0 0.0
      %1727 = vmatprep.subr.mxu0 0.0
      %1728 = vmatpush2.msra.mxu0 0.0
      %1729 = vmatprep.subr.mxu0 0.0
      %1730 = vmatpush2.msra.mxu0 0.0
      %1731 = vmatprep.subr.mxu0 0.0
      %1732 = vmatpush2.msra.mxu0 0.0
      %1733 = vmatprep.subr.mxu0 0.0
      %1734 = vmatpush2.msra.mxu0 0.0
      %1735 = vmatprep.subr.mxu0 0.0
      %1736 = vmatpush2.msra.mxu0 0.0
      %1737 = vmatprep.subr.mxu0 0.0
      %1738 = vmatpush2.msra.mxu0 0.0
      %1739 = vmatprep.subr.mxu0 0.0
      %1740 = vmatpush2.msra.mxu0 0.0
      %1741 = vmatprep.subr.mxu0 0.0
      %1742 = vmatpush2.msra.mxu0 0.0
      %1743 = vmatprep.mubr.f32.mxu0 0.0
      %1744 = vmatmul.mubr.f32.gmra.mxu0 %v1677
      %v1745 = vpop.f32.mrf.mxu0
      %v1746 = vadd.f32 %v1671, %v1745
      %v1747 = vpop.f32.mrf.mxu0
      %1748 = vdwg.mxu0
      %v1749 = vadd.f32 %v1746, %v685
      %v1750 = vmul.f32 %v1749, 0.5
      %v1751 = vtanh.pop %v1750
      %v1752 = vmul.f32 %v1751, 0.5
      %v1753 = vadd.f32 %v1752, 0.5
      %v1754 = vtanh.pop %v1749
      %v1755 = vmul.f32 %v1753, %v1154
      %1757 = vrot.lane.b32.xlu0 %v1754, 32
      %v1758 = vpop.permute.xlu0 %1757
      %v1760 = vmul.f32 %v1753, %v1758
      %1762 = vrot.lane.b32.xlu0 %v1760, 32
      %v1763 = vpop.permute.xlu0 %1762
      %v1765 = vadd.f32 %v1755, %v1763
      %v1766 = vtanh.pop %v1765
      %1768 = vrot.lane.b32.xlu0 %v1766, 32
      %v1769 = vpop.permute.xlu0 %1768
      %v1771 = vmul.f32 %v1753, %v1769
      %v1772 = vsel %vm810, %v1338, 0
      %1774 = vmatprep.subr.mxu0 0.0
      %1775 = vmatpush1.msra.mxu0 0.0
      %1776 = vmatprep.subr.mxu0 0.0
      %1777 = vmatpush1.msra.mxu0 0.0
      %1778 = vmatprep.subr.mxu0 0.0
      %1779 = vmatpush1.msra.mxu0 0.0
      %1780 = vmatprep.subr.mxu0 0.0
      %1781 = vmatpush1.msra.mxu0 0.0
      %1782 = vmatprep.subr.mxu0 0.0
      %1783 = vmatpush1.msra.mxu0 0.0
      %1784 = vmatprep.subr.mxu0 0.0
      %1785 = vmatpush1.msra.mxu0 0.0
      %1786 = vmatprep.subr.mxu0 0.0
      %1787 = vmatpush1.msra.mxu0 0.0
      %1788 = vmatprep.subr.mxu0 0.0
      %1789 = vmatpush1.msra.mxu0 0.0
      %1790 = vmatprep.subr.mxu0 0.0
      %1791 = vmatpush1.msra.mxu0 0.0
      %1792 = vmatprep.subr.mxu0 0.0
      %1793 = vmatpush1.msra.mxu0 0.0
      %1794 = vmatprep.subr.mxu0 0.0
      %1795 = vmatpush1.msra.mxu0 0.0
      %1796 = vmatprep.subr.mxu0 0.0
      %1797 = vmatpush1.msra.mxu0 0.0
      %1798 = vmatprep.subr.mxu0 0.0
      %1799 = vmatpush1.msra.mxu0 0.0
      %1800 = vmatprep.subr.mxu0 0.0
      %1801 = vmatpush1.msra.mxu0 0.0
      %1802 = vmatprep.subr.mxu0 0.0
      %1803 = vmatpush1.msra.mxu0 0.0
      %1804 = vmatprep.subr.mxu0 0.0
      %1805 = vmatpush1.msra.mxu0 %v672
      %1806 = vmatprep.subr.mxu0 0.0
      %1807 = vmatpush2.msra.mxu0 0.0
      %1808 = vmatprep.subr.mxu0 0.0
      %1809 = vmatpush2.msra.mxu0 0.0
      %1810 = vmatprep.subr.mxu0 0.0
      %1811 = vmatpush2.msra.mxu0 0.0
      %1812 = vmatprep.subr.mxu0 0.0
      %1813 = vmatpush2.msra.mxu0 0.0
      %1814 = vmatprep.subr.mxu0 0.0
      %1815 = vmatpush2.msra.mxu0 0.0
      %1816 = vmatprep.subr.mxu0 0.0
      %1817 = vmatpush2.msra.mxu0 0.0
      %1818 = vmatprep.subr.mxu0 0.0
      %1819 = vmatpush2.msra.mxu0 0.0
      %1820 = vmatprep.subr.mxu0 0.0
      %1821 = vmatpush2.msra.mxu0 0.0
      %1822 = vmatprep.subr.mxu0 0.0
      %1823 = vmatpush2.msra.mxu0 0.0
      %1824 = vmatprep.subr.mxu0 0.0
      %1825 = vmatpush2.msra.mxu0 0.0
      %1826 = vmatprep.subr.mxu0 0.0
      %1827 = vmatpush2.msra.mxu0 0.0
      %1828 = vmatprep.subr.mxu0 0.0
      %1829 = vmatpush2.msra.mxu0 0.0
      %1830 = vmatprep.subr.mxu0 0.0
      %1831 = vmatpush2.msra.mxu0 0.0
      %1832 = vmatprep.subr.mxu0 0.0
      %1833 = vmatpush2.msra.mxu0 0.0
      %1834 = vmatprep.subr.mxu0 0.0
      %1835 = vmatpush2.msra.mxu0 0.0
      %1836 = vmatprep.subr.mxu0 0.0
      %1837 = vmatpush2.msra.mxu0 0.0
      %1838 = vmatprep.mubr.f32.mxu0 0.0
      %1839 = vmatmul.mubr.f32.gmra.mxu0 %v1772
      %v1840 = vpop.f32.mrf.mxu0
      %v1841 = vadd.f32 0.0, %v1840
      %v1842 = vpop.f32.mrf.mxu0
      %1843 = vdwg.mxu0
      %1845 = vrot.lane.b32.xlu0 %v1771, 64
      %v1846 = vpop.permute.xlu0 %1845
      %v1847 = vsel %vm709, %v1846, 0
      %1849 = vmatprep.subr.mxu0 0.0
      %1850 = vmatpush1.msra.mxu0 0.0
      %1851 = vmatprep.subr.mxu0 0.0
      %1852 = vmatpush1.msra.mxu0 0.0
      %1853 = vmatprep.subr.mxu0 0.0
      %1854 = vmatpush1.msra.mxu0 0.0
      %1855 = vmatprep.subr.mxu0 0.0
      %1856 = vmatpush1.msra.mxu0 0.0
      %1857 = vmatprep.subr.mxu0 0.0
      %1858 = vmatpush1.msra.mxu0 0.0
      %1859 = vmatprep.subr.mxu0 0.0
      %1860 = vmatpush1.msra.mxu0 0.0
      %1861 = vmatprep.subr.mxu0 0.0
      %1862 = vmatpush1.msra.mxu0 0.0
      %1863 = vmatprep.subr.mxu0 0.0
      %1864 = vmatpush1.msra.mxu0 0.0
      %1865 = vmatprep.subr.mxu0 0.0
      %1866 = vmatpush1.msra.mxu0 0.0
      %1867 = vmatprep.subr.mxu0 0.0
      %1868 = vmatpush1.msra.mxu0 0.0
      %1869 = vmatprep.subr.mxu0 0.0
      %1870 = vmatpush1.msra.mxu0 0.0
      %1871 = vmatprep.subr.mxu0 0.0
      %1872 = vmatpush1.msra.mxu0 0.0
      %1873 = vmatprep.subr.mxu0 0.0
      %1874 = vmatpush1.msra.mxu0 %v671
      %1875 = vmatprep.subr.mxu0 0.0
      %1876 = vmatpush1.msra.mxu0 %v670
      %1877 = vmatprep.subr.mxu0 0.0
      %1878 = vmatpush1.msra.mxu0 %v669
      %1879 = vmatprep.subr.mxu0 0.0
      %1880 = vmatpush1.msra.mxu0 %v668
      %1881 = vmatprep.subr.mxu0 0.0
      %1882 = vmatpush2.msra.mxu0 0.0
      %1883 = vmatprep.subr.mxu0 0.0
      %1884 = vmatpush2.msra.mxu0 0.0
      %1885 = vmatprep.subr.mxu0 0.0
      %1886 = vmatpush2.msra.mxu0 0.0
      %1887 = vmatprep.subr.mxu0 0.0
      %1888 = vmatpush2.msra.mxu0 0.0
      %1889 = vmatprep.subr.mxu0 0.0
      %1890 = vmatpush2.msra.mxu0 0.0
      %1891 = vmatprep.subr.mxu0 0.0
      %1892 = vmatpush2.msra.mxu0 0.0
      %1893 = vmatprep.subr.mxu0 0.0
      %1894 = vmatpush2.msra.mxu0 0.0
      %1895 = vmatprep.subr.mxu0 0.0
      %1896 = vmatpush2.msra.mxu0 0.0
      %1897 = vmatprep.subr.mxu0 0.0
      %1898 = vmatpush2.msra.mxu0 0.0
      %1899 = vmatprep.subr.mxu0 0.0
      %1900 = vmatpush2.msra.mxu0 0.0
      %1901 = vmatprep.subr.mxu0 0.0
      %1902 = vmatpush2.msra.mxu0 0.0
      %1903 = vmatprep.subr.mxu0 0.0
      %1904 = vmatpush2.msra.mxu0 0.0
      %1905 = vmatprep.subr.mxu0 0.0
      %1906 = vmatpush2.msra.mxu0 0.0
      %1907 = vmatprep.subr.mxu0 0.0
      %1908 = vmatpush2.msra.mxu0 0.0
      %1909 = vmatprep.subr.mxu0 0.0
      %1910 = vmatpush2.msra.mxu0 0.0
      %1911 = vmatprep.subr.mxu0 0.0
      %1912 = vmatpush2.msra.mxu0 0.0
      %1913 = vmatprep.mubr.f32.mxu0 0.0
      %1914 = vmatmul.mubr.f32.gmra.mxu0 %v1847
      %v1915 = vpop.f32.mrf.mxu0
      %v1916 = vadd.f32 %v1841, %v1915
      %v1917 = vpop.f32.mrf.mxu0
      %1918 = vdwg.mxu0
      %v1919 = vadd.f32 %v1916, %v692
      %v1920 = vmul.f32 %v1919, 0.5
      %v1921 = vtanh.pop %v1920
      %v1922 = vmul.f32 %v1921, 0.5
      %v1923 = vadd.f32 %v1922, 0.5
      %v1924 = vtanh.pop %v1919
      %v1925 = vmul.f32 %v1923, %v1329
      %1927 = vrot.lane.b32.xlu0 %v1924, 104
      %v1928 = vpop.permute.xlu0 %1927
      %v1930 = vmul.f32 %v1923, %v1928
      %1932 = vrot.lane.b32.xlu0 %v1930, 8
      %v1933 = vpop.permute.xlu0 %1932
      %v1935 = vadd.f32 %v1925, %v1933
      %v1936 = vtanh.pop %v1935
      %1938 = vrot.lane.b32.xlu0 %v1936, 8
      %v1939 = vpop.permute.xlu0 %1938
      %v1941 = vmul.f32 %v1923, %v1939
      %1943 = vrot.lane.b32.xlu0 %v1941, 112
      %v1944 = vpop.permute.xlu0 %1943
      %s1946 = scalar_lea.vmem [#allocation3], 8
      %1947 = vst.msk [vmem:[%s1946] sm:$0xff] %vm810, %v1944
      %s1948 = scalar_lea.vmem [#allocation2], 16
      %v1949 = vld [vmem:[%s1948] sm:$0xff]
      %1950 = vmatprep.subr.mxu0 0.0
      %1951 = vmatpush1.msra.mxu0 0.0
      %1952 = vmatprep.subr.mxu0 0.0
      %1953 = vmatpush1.msra.mxu0 0.0
      %1954 = vmatprep.subr.mxu0 0.0
      %1955 = vmatpush1.msra.mxu0 0.0
      %1956 = vmatprep.subr.mxu0 0.0
      %1957 = vmatpush1.msra.mxu0 0.0
      %1958 = vmatprep.subr.mxu0 0.0
      %1959 = vmatpush1.msra.mxu0 0.0
      %1960 = vmatprep.subr.mxu0 0.0
      %1961 = vmatpush1.msra.mxu0 0.0
      %1962 = vmatprep.subr.mxu0 0.0
      %1963 = vmatpush1.msra.mxu0 0.0
      %1964 = vmatprep.subr.mxu0 0.0
      %1965 = vmatpush1.msra.mxu0 0.0
      %1966 = vmatprep.subr.mxu0 0.0
      %1967 = vmatpush1.msra.mxu0 0.0
      %1968 = vmatprep.subr.mxu0 0.0
      %1969 = vmatpush1.msra.mxu0 0.0
      %1970 = vmatprep.subr.mxu0 0.0
      %1971 = vmatpush1.msra.mxu0 0.0
      %1972 = vmatprep.subr.mxu0 0.0
      %1973 = vmatpush1.msra.mxu0 0.0
      %1974 = vmatprep.subr.mxu0 0.0
      %1975 = vmatpush1.msra.mxu0 %v657
      %1976 = vmatprep.subr.mxu0 0.0
      %1977 = vmatpush1.msra.mxu0 %v656
      %1978 = vmatprep.subr.mxu0 0.0
      %1979 = vmatpush1.msra.mxu0 %v655
      %1980 = vmatprep.subr.mxu0 0.0
      %1981 = vmatpush1.msra.mxu0 %v654
      %1982 = vmatprep.subr.mxu0 0.0
      %1983 = vmatpush2.msra.mxu0 0.0
      %1984 = vmatprep.subr.mxu0 0.0
      %1985 = vmatpush2.msra.mxu0 0.0
      %1986 = vmatprep.subr.mxu0 0.0
      %1987 = vmatpush2.msra.mxu0 0.0
      %1988 = vmatprep.subr.mxu0 0.0
      %1989 = vmatpush2.msra.mxu0 0.0
      %1990 = vmatprep.subr.mxu0 0.0
      %1991 = vmatpush2.msra.mxu0 0.0
      %1992 = vmatprep.subr.mxu0 0.0
      %1993 = vmatpush2.msra.mxu0 0.0
      %1994 = vmatprep.subr.mxu0 0.0
      %1995 = vmatpush2.msra.mxu0 0.0
      %1996 = vmatprep.subr.mxu0 0.0
      %1997 = vmatpush2.msra.mxu0 0.0
      %1998 = vmatprep.subr.mxu0 0.0
      %1999 = vmatpush2.msra.mxu0 0.0
      %2000 = vmatprep.subr.mxu0 0.0
      %2001 = vmatpush2.msra.mxu0 0.0
      %2002 = vmatprep.subr.mxu0 0.0
      %2003 = vmatpush2.msra.mxu0 0.0
      %2004 = vmatprep.subr.mxu0 0.0
      %2005 = vmatpush2.msra.mxu0 0.0
      %2006 = vmatprep.subr.mxu0 0.0
      %2007 = vmatpush2.msra.mxu0 0.0
      %2008 = vmatprep.subr.mxu0 0.0
      %2009 = vmatpush2.msra.mxu0 0.0
      %2010 = vmatprep.subr.mxu0 0.0
      %2011 = vmatpush2.msra.mxu0 0.0
      %2012 = vmatprep.subr.mxu0 0.0
      %2013 = vmatpush2.msra.mxu0 0.0
      %2014 = vmatprep.mubr.f32.mxu0 0.0
      %2015 = vmatmul.mubr.f32.gmra.mxu0 %v1509
      %v2016 = vpop.f32.mrf.mxu0
      %v2017 = vadd.f32 0.0, %v2016
      %v2018 = vpop.f32.mrf.mxu0
      %2019 = vdwg.mxu0
      %v2020 = vadd.f32 %v1949, %v2017
      %v2021 = vmul.f32 %v2020, 0.5
      %v2022 = vtanh.pop %v2021
      %v2023 = vmul.f32 %v2022, 0.5
      %v2024 = vadd.f32 %v2023, 0.5
      %v2025 = vtanh.pop %v2020
      %v2026 = vmul.f32 %v2024, %v1429
      %2028 = vrot.lane.b32.xlu0 %v2025, 32
      %v2029 = vpop.permute.xlu0 %2028
      %v2031 = vmul.f32 %v2024, %v2029
      %2033 = vrot.lane.b32.xlu0 %v2031, 32
      %v2034 = vpop.permute.xlu0 %2033
      %v2036 = vadd.f32 %v2026, %v2034
      %v2037 = vtanh.pop %v2036
      %2039 = vrot.lane.b32.xlu0 %v2037, 32
      %v2040 = vpop.permute.xlu0 %2039
      %v2042 = vmul.f32 %v2024, %v2040
      %2043 = vmatprep.subr.mxu0 0.0
      %2044 = vmatpush1.msra.mxu0 0.0
      %2045 = vmatprep.subr.mxu0 0.0
      %2046 = vmatpush1.msra.mxu0 0.0
      %2047 = vmatprep.subr.mxu0 0.0
      %2048 = vmatpush1.msra.mxu0 0.0
      %2049 = vmatprep.subr.mxu0 0.0
      %2050 = vmatpush1.msra.mxu0 0.0
      %2051 = vmatprep.subr.mxu0 0.0
      %2052 = vmatpush1.msra.mxu0 0.0
      %2053 = vmatprep.subr.mxu0 0.0
      %2054 = vmatpush1.msra.mxu0 0.0
      %2055 = vmatprep.subr.mxu0 0.0
      %2056 = vmatpush1.msra.mxu0 0.0
      %2057 = vmatprep.subr.mxu0 0.0
      %2058 = vmatpush1.msra.mxu0 0.0
      %2059 = vmatprep.subr.mxu0 0.0
      %2060 = vmatpush1.msra.mxu0 0.0
      %2061 = vmatprep.subr.mxu0 0.0
      %2062 = vmatpush1.msra.mxu0 0.0
      %2063 = vmatprep.subr.mxu0 0.0
      %2064 = vmatpush1.msra.mxu0 0.0
      %2065 = vmatprep.subr.mxu0 0.0
      %2066 = vmatpush1.msra.mxu0 0.0
      %2067 = vmatprep.subr.mxu0 0.0
      %2068 = vmatpush1.msra.mxu0 0.0
      %2069 = vmatprep.subr.mxu0 0.0
      %2070 = vmatpush1.msra.mxu0 0.0
      %2071 = vmatprep.subr.mxu0 0.0
      %2072 = vmatpush1.msra.mxu0 0.0
      %2073 = vmatprep.subr.mxu0 0.0
      %2074 = vmatpush1.msra.mxu0 %v662
      %2075 = vmatprep.subr.mxu0 0.0
      %2076 = vmatpush2.msra.mxu0 0.0
      %2077 = vmatprep.subr.mxu0 0.0
      %2078 = vmatpush2.msra.mxu0 0.0
      %2079 = vmatprep.subr.mxu0 0.0
      %2080 = vmatpush2.msra.mxu0 0.0
      %2081 = vmatprep.subr.mxu0 0.0
      %2082 = vmatpush2.msra.mxu0 0.0
      %2083 = vmatprep.subr.mxu0 0.0
      %2084 = vmatpush2.msra.mxu0 0.0
      %2085 = vmatprep.subr.mxu0 0.0
      %2086 = vmatpush2.msra.mxu0 0.0
      %2087 = vmatprep.subr.mxu0 0.0
      %2088 = vmatpush2.msra.mxu0 0.0
      %2089 = vmatprep.subr.mxu0 0.0
      %2090 = vmatpush2.msra.mxu0 0.0
      %2091 = vmatprep.subr.mxu0 0.0
      %2092 = vmatpush2.msra.mxu0 0.0
      %2093 = vmatprep.subr.mxu0 0.0
      %2094 = vmatpush2.msra.mxu0 0.0
      %2095 = vmatprep.subr.mxu0 0.0
      %2096 = vmatpush2.msra.mxu0 0.0
      %2097 = vmatprep.subr.mxu0 0.0
      %2098 = vmatpush2.msra.mxu0 0.0
      %2099 = vmatprep.subr.mxu0 0.0
      %2100 = vmatpush2.msra.mxu0 0.0
      %2101 = vmatprep.subr.mxu0 0.0
      %2102 = vmatpush2.msra.mxu0 0.0
      %2103 = vmatprep.subr.mxu0 0.0
      %2104 = vmatpush2.msra.mxu0 0.0
      %2105 = vmatprep.subr.mxu0 0.0
      %2106 = vmatpush2.msra.mxu0 0.0
      %2107 = vmatprep.mubr.f32.mxu0 0.0
      %2108 = vmatmul.mubr.f32.gmra.mxu0 %v1677
      %v2109 = vpop.f32.mrf.mxu0
      %v2110 = vadd.f32 0.0, %v2109
      %v2111 = vpop.f32.mrf.mxu0
      %2112 = vdwg.mxu0
      %2114 = vrot.lane.b32.xlu0 %v2042, 64
      %v2115 = vpop.permute.xlu0 %2114
      %v2116 = vsel %vm709, %v2115, 0
      %2118 = vmatprep.subr.mxu0 0.0
      %2119 = vmatpush1.msra.mxu0 0.0
      %2120 = vmatprep.subr.mxu0 0.0
      %2121 = vmatpush1.msra.mxu0 0.0
      %2122 = vmatprep.subr.mxu0 0.0
      %2123 = vmatpush1.msra.mxu0 0.0
      %2124 = vmatprep.subr.mxu0 0.0
      %2125 = vmatpush1.msra.mxu0 0.0
      %2126 = vmatprep.subr.mxu0 0.0
      %2127 = vmatpush1.msra.mxu0 0.0
      %2128 = vmatprep.subr.mxu0 0.0
      %2129 = vmatpush1.msra.mxu0 0.0
      %2130 = vmatprep.subr.mxu0 0.0
      %2131 = vmatpush1.msra.mxu0 0.0
      %2132 = vmatprep.subr.mxu0 0.0
      %2133 = vmatpush1.msra.mxu0 0.0
      %2134 = vmatprep.subr.mxu0 0.0
      %2135 = vmatpush1.msra.mxu0 0.0
      %2136 = vmatprep.subr.mxu0 0.0
      %2137 = vmatpush1.msra.mxu0 0.0
      %2138 = vmatprep.subr.mxu0 0.0
      %2139 = vmatpush1.msra.mxu0 0.0
      %2140 = vmatprep.subr.mxu0 0.0
      %2141 = vmatpush1.msra.mxu0 0.0
      %2142 = vmatprep.subr.mxu0 0.0
      %2143 = vmatpush1.msra.mxu0 %v661
      %2144 = vmatprep.subr.mxu0 0.0
      %2145 = vmatpush1.msra.mxu0 %v660
      %2146 = vmatprep.subr.mxu0 0.0
      %2147 = vmatpush1.msra.mxu0 %v659
      %2148 = vmatprep.subr.mxu0 0.0
      %2149 = vmatpush1.msra.mxu0 %v658
      %2150 = vmatprep.subr.mxu0 0.0
      %2151 = vmatpush2.msra.mxu0 0.0
      %2152 = vmatprep.subr.mxu0 0.0
      %2153 = vmatpush2.msra.mxu0 0.0
      %2154 = vmatprep.subr.mxu0 0.0
      %2155 = vmatpush2.msra.mxu0 0.0
      %2156 = vmatprep.subr.mxu0 0.0
      %2157 = vmatpush2.msra.mxu0 0.0
      %2158 = vmatprep.subr.mxu0 0.0
      %2159 = vmatpush2.msra.mxu0 0.0
      %2160 = vmatprep.subr.mxu0 0.0
      %2161 = vmatpush2.msra.mxu0 0.0
      %2162 = vmatprep.subr.mxu0 0.0
      %2163 = vmatpush2.msra.mxu0 0.0
      %2164 = vmatprep.subr.mxu0 0.0
      %2165 = vmatpush2.msra.mxu0 0.0
      %2166 = vmatprep.subr.mxu0 0.0
      %2167 = vmatpush2.msra.mxu0 0.0
      %2168 = vmatprep.subr.mxu0 0.0
      %2169 = vmatpush2.msra.mxu0 0.0
      %2170 = vmatprep.subr.mxu0 0.0
      %2171 = vmatpush2.msra.mxu0 0.0
      %2172 = vmatprep.subr.mxu0 0.0
      %2173 = vmatpush2.msra.mxu0 0.0
      %2174 = vmatprep.subr.mxu0 0.0
      %2175 = vmatpush2.msra.mxu0 0.0
      %2176 = vmatprep.subr.mxu0 0.0
      %2177 = vmatpush2.msra.mxu0 0.0
      %2178 = vmatprep.subr.mxu0 0.0
      %2179 = vmatpush2.msra.mxu0 0.0
      %2180 = vmatprep.subr.mxu0 0.0
      %2181 = vmatpush2.msra.mxu0 0.0
      %2182 = vmatprep.mubr.f32.mxu0 0.0
      %2183 = vmatmul.mubr.f32.gmra.mxu0 %v2116
      %v2184 = vpop.f32.mrf.mxu0
      %v2185 = vadd.f32 %v2110, %v2184
      %v2186 = vpop.f32.mrf.mxu0
      %2187 = vdwg.mxu0
      %v2188 = vadd.f32 %v2185, %v678
      %v2189 = vmul.f32 %v2188, 0.5
      %v2190 = vtanh.pop %v2189
      %v2191 = vmul.f32 %v2190, 0.5
      %v2192 = vadd.f32 %v2191, 0.5
      %v2193 = vtanh.pop %v2188
      %v2194 = vmul.f32 %v2192, %v1597
      %2196 = vrot.lane.b32.xlu0 %v2193, 104
      %v2197 = vpop.permute.xlu0 %2196
      %v2199 = vmul.f32 %v2192, %v2197
      %2201 = vrot.lane.b32.xlu0 %v2199, 8
      %v2202 = vpop.permute.xlu0 %2201
      %v2204 = vadd.f32 %v2194, %v2202
      %v2205 = vtanh.pop %v2204
      %2207 = vrot.lane.b32.xlu0 %v2205, 8
      %v2208 = vpop.permute.xlu0 %2207
      %v2210 = vmul.f32 %v2192, %v2208
      %2211 = vmatprep.subr.mxu0 0.0
      %2212 = vmatpush1.msra.mxu0 0.0
      %2213 = vmatprep.subr.mxu0 0.0
      %2214 = vmatpush1.msra.mxu0 0.0
      %2215 = vmatprep.subr.mxu0 0.0
      %2216 = vmatpush1.msra.mxu0 0.0
      %2217 = vmatprep.subr.mxu0 0.0
      %2218 = vmatpush1.msra.mxu0 0.0
      %2219 = vmatprep.subr.mxu0 0.0
      %2220 = vmatpush1.msra.mxu0 0.0
      %2221 = vmatprep.subr.mxu0 0.0
      %2222 = vmatpush1.msra.mxu0 0.0
      %2223 = vmatprep.subr.mxu0 0.0
      %2224 = vmatpush1.msra.mxu0 0.0
      %2225 = vmatprep.subr.mxu0 0.0
      %2226 = vmatpush1.msra.mxu0 0.0
      %2227 = vmatprep.subr.mxu0 0.0
      %2228 = vmatpush1.msra.mxu0 0.0
      %2229 = vmatprep.subr.mxu0 0.0
      %2230 = vmatpush1.msra.mxu0 0.0
      %2231 = vmatprep.subr.mxu0 0.0
      %2232 = vmatpush1.msra.mxu0 0.0
      %2233 = vmatprep.subr.mxu0 0.0
      %2234 = vmatpush1.msra.mxu0 0.0
      %2235 = vmatprep.subr.mxu0 0.0
      %2236 = vmatpush1.msra.mxu0 %v667
      %2237 = vmatprep.subr.mxu0 0.0
      %2238 = vmatpush1.msra.mxu0 %v666
      %2239 = vmatprep.subr.mxu0 0.0
      %2240 = vmatpush1.msra.mxu0 %v665
      %2241 = vmatprep.subr.mxu0 0.0
      %2242 = vmatpush1.msra.mxu0 %v664
      %2243 = vmatprep.subr.mxu0 0.0
      %2244 = vmatpush2.msra.mxu0 0.0
      %2245 = vmatprep.subr.mxu0 0.0
      %2246 = vmatpush2.msra.mxu0 0.0
      %2247 = vmatprep.subr.mxu0 0.0
      %2248 = vmatpush2.msra.mxu0 0.0
      %2249 = vmatprep.subr.mxu0 0.0
      %2250 = vmatpush2.msra.mxu0 0.0
      %2251 = vmatprep.subr.mxu0 0.0
      %2252 = vmatpush2.msra.mxu0 0.0
      %2253 = vmatprep.subr.mxu0 0.0
      %2254 = vmatpush2.msra.mxu0 0.0
      %2255 = vmatprep.subr.mxu0 0.0
      %2256 = vmatpush2.msra.mxu0 0.0
      %2257 = vmatprep.subr.mxu0 0.0
      %2258 = vmatpush2.msra.mxu0 0.0
      %2259 = vmatprep.subr.mxu0 0.0
      %2260 = vmatpush2.msra.mxu0 0.0
      %2261 = vmatprep.subr.mxu0 0.0
      %2262 = vmatpush2.msra.mxu0 0.0
      %2263 = vmatprep.subr.mxu0 0.0
      %2264 = vmatpush2.msra.mxu0 0.0
      %2265 = vmatprep.subr.mxu0 0.0
      %2266 = vmatpush2.msra.mxu0 0.0
      %2267 = vmatprep.subr.mxu0 0.0
      %2268 = vmatpush2.msra.mxu0 0.0
      %2269 = vmatprep.subr.mxu0 0.0
      %2270 = vmatpush2.msra.mxu0 0.0
      %2271 = vmatprep.subr.mxu0 0.0
      %2272 = vmatpush2.msra.mxu0 0.0
      %2273 = vmatprep.subr.mxu0 0.0
      %2274 = vmatpush2.msra.mxu0 0.0
      %2275 = vmatprep.mubr.f32.mxu0 0.0
      %2276 = vmatmul.mubr.f32.gmra.mxu0 %v1847
      %v2277 = vpop.f32.mrf.mxu0
      %v2278 = vadd.f32 0.0, %v2277
      %v2279 = vpop.f32.mrf.mxu0
      %2280 = vdwg.mxu0
      %2282 = vrot.lane.b32.xlu0 %v2210, 112
      %v2283 = vpop.permute.xlu0 %2282
      %v2284 = vsel %vm810, %v2283, 0
      %2286 = vmatprep.subr.mxu0 0.0
      %2287 = vmatpush1.msra.mxu0 0.0
      %2288 = vmatprep.subr.mxu0 0.0
      %2289 = vmatpush1.msra.mxu0 0.0
      %2290 = vmatprep.subr.mxu0 0.0
      %2291 = vmatpush1.msra.mxu0 0.0
      %2292 = vmatprep.subr.mxu0 0.0
      %2293 = vmatpush1.msra.mxu0 0.0
      %2294 = vmatprep.subr.mxu0 0.0
      %2295 = vmatpush1.msra.mxu0 0.0
      %2296 = vmatprep.subr.mxu0 0.0
      %2297 = vmatpush1.msra.mxu0 0.0
      %2298 = vmatprep.subr.mxu0 0.0
      %2299 = vmatpush1.msra.mxu0 0.0
      %2300 = vmatprep.subr.mxu0 0.0
      %2301 = vmatpush1.msra.mxu0 0.0
      %2302 = vmatprep.subr.mxu0 0.0
      %2303 = vmatpush1.msra.mxu0 0.0
      %2304 = vmatprep.subr.mxu0 0.0
      %2305 = vmatpush1.msra.mxu0 0.0
      %2306 = vmatprep.subr.mxu0 0.0
      %2307 = vmatpush1.msra.mxu0 0.0
      %2308 = vmatprep.subr.mxu0 0.0
      %2309 = vmatpush1.msra.mxu0 0.0
      %2310 = vmatprep.subr.mxu0 0.0
      %2311 = vmatpush1.msra.mxu0 0.0
      %2312 = vmatprep.subr.mxu0 0.0
      %2313 = vmatpush1.msra.mxu0 0.0
      %2314 = vmatprep.subr.mxu0 0.0
      %2315 = vmatpush1.msra.mxu0 0.0
      %2316 = vmatprep.subr.mxu0 0.0
      %2317 = vmatpush1.msra.mxu0 %v663
      %2318 = vmatprep.subr.mxu0 0.0
      %2319 = vmatpush2.msra.mxu0 0.0
      %2320 = vmatprep.subr.mxu0 0.0
      %2321 = vmatpush2.msra.mxu0 0.0
      %2322 = vmatprep.subr.mxu0 0.0
      %2323 = vmatpush2.msra.mxu0 0.0
      %2324 = vmatprep.subr.mxu0 0.0
      %2325 = vmatpush2.msra.mxu0 0.0
      %2326 = vmatprep.subr.mxu0 0.0
      %2327 = vmatpush2.msra.mxu0 0.0
      %2328 = vmatprep.subr.mxu0 0.0
      %2329 = vmatpush2.msra.mxu0 0.0
      %2330 = vmatprep.subr.mxu0 0.0
      %2331 = vmatpush2.msra.mxu0 0.0
      %2332 = vmatprep.subr.mxu0 0.0
      %2333 = vmatpush2.msra.mxu0 0.0
      %2334 = vmatprep.subr.mxu0 0.0
      %2335 = vmatpush2.msra.mxu0 0.0
      %2336 = vmatprep.subr.mxu0 0.0
      %2337 = vmatpush2.msra.mxu0 0.0
      %2338 = vmatprep.subr.mxu0 0.0
      %2339 = vmatpush2.msra.mxu0 0.0
      %2340 = vmatprep.subr.mxu0 0.0
      %2341 = vmatpush2.msra.mxu0 0.0
      %2342 = vmatprep.subr.mxu0 0.0
      %2343 = vmatpush2.msra.mxu0 0.0
      %2344 = vmatprep.subr.mxu0 0.0
      %2345 = vmatpush2.msra.mxu0 0.0
      %2346 = vmatprep.subr.mxu0 0.0
      %2347 = vmatpush2.msra.mxu0 0.0
      %2348 = vmatprep.subr.mxu0 0.0
      %2349 = vmatpush2.msra.mxu0 0.0
      %2350 = vmatprep.mubr.f32.mxu0 0.0
      %2351 = vmatmul.mubr.f32.gmra.mxu0 %v2284
      %v2352 = vpop.f32.mrf.mxu0
      %v2353 = vadd.f32 %v2278, %v2352
      %v2354 = vpop.f32.mrf.mxu0
      %2355 = vdwg.mxu0
      %v2356 = vadd.f32 %v2353, %v685
      %v2357 = vmul.f32 %v2356, 0.5
      %v2358 = vtanh.pop %v2357
      %v2359 = vmul.f32 %v2358, 0.5
      %v2360 = vadd.f32 %v2359, 0.5
      %v2361 = vtanh.pop %v2356
      %v2362 = vmul.f32 %v2360, %v1765
      %2364 = vrot.lane.b32.xlu0 %v2361, 32
      %v2365 = vpop.permute.xlu0 %2364
      %v2367 = vmul.f32 %v2360, %v2365
      %2369 = vrot.lane.b32.xlu0 %v2367, 32
      %v2370 = vpop.permute.xlu0 %2369
      %v2372 = vadd.f32 %v2362, %v2370
      %v2373 = vtanh.pop %v2372
      %2375 = vrot.lane.b32.xlu0 %v2373, 32
      %v2376 = vpop.permute.xlu0 %2375
      %v2378 = vmul.f32 %v2360, %v2376
      %v2379 = vsel %vm810, %v1944, 0
      %2381 = vmatprep.subr.mxu0 0.0
      %2382 = vmatpush1.msra.mxu0 0.0
      %2383 = vmatprep.subr.mxu0 0.0
      %2384 = vmatpush1.msra.mxu0 0.0
      %2385 = vmatprep.subr.mxu0 0.0
      %2386 = vmatpush1.msra.mxu0 0.0
      %2387 = vmatprep.subr.mxu0 0.0
      %2388 = vmatpush1.msra.mxu0 0.0
      %2389 = vmatprep.subr.mxu0 0.0
      %2390 = vmatpush1.msra.mxu0 0.0
      %2391 = vmatprep.subr.mxu0 0.0
      %2392 = vmatpush1.msra.mxu0 0.0
      %2393 = vmatprep.subr.mxu0 0.0
      %2394 = vmatpush1.msra.mxu0 0.0
      %2395 = vmatprep.subr.mxu0 0.0
      %2396 = vmatpush1.msra.mxu0 0.0
      %2397 = vmatprep.subr.mxu0 0.0
      %2398 = vmatpush1.msra.mxu0 0.0
      %2399 = vmatprep.subr.mxu0 0.0
      %2400 = vmatpush1.msra.mxu0 0.0
      %2401 = vmatprep.subr.mxu0 0.0
      %2402 = vmatpush1.msra.mxu0 0.0
      %2403 = vmatprep.subr.mxu0 0.0
      %2404 = vmatpush1.msra.mxu0 0.0
      %2405 = vmatprep.subr.mxu0 0.0
      %2406 = vmatpush1.msra.mxu0 0.0
      %2407 = vmatprep.subr.mxu0 0.0
      %2408 = vmatpush1.msra.mxu0 0.0
      %2409 = vmatprep.subr.mxu0 0.0
      %2410 = vmatpush1.msra.mxu0 0.0
      %2411 = vmatprep.subr.mxu0 0.0
      %2412 = vmatpush1.msra.mxu0 %v672
      %2413 = vmatprep.subr.mxu0 0.0
      %2414 = vmatpush2.msra.mxu0 0.0
      %2415 = vmatprep.subr.mxu0 0.0
      %2416 = vmatpush2.msra.mxu0 0.0
      %2417 = vmatprep.subr.mxu0 0.0
      %2418 = vmatpush2.msra.mxu0 0.0
      %2419 = vmatprep.subr.mxu0 0.0
      %2420 = vmatpush2.msra.mxu0 0.0
      %2421 = vmatprep.subr.mxu0 0.0
      %2422 = vmatpush2.msra.mxu0 0.0
      %2423 = vmatprep.subr.mxu0 0.0
      %2424 = vmatpush2.msra.mxu0 0.0
      %2425 = vmatprep.subr.mxu0 0.0
      %2426 = vmatpush2.msra.mxu0 0.0
      %2427 = vmatprep.subr.mxu0 0.0
      %2428 = vmatpush2.msra.mxu0 0.0
      %2429 = vmatprep.subr.mxu0 0.0
      %2430 = vmatpush2.msra.mxu0 0.0
      %2431 = vmatprep.subr.mxu0 0.0
      %2432 = vmatpush2.msra.mxu0 0.0
      %2433 = vmatprep.subr.mxu0 0.0
      %2434 = vmatpush2.msra.mxu0 0.0
      %2435 = vmatprep.subr.mxu0 0.0
      %2436 = vmatpush2.msra.mxu0 0.0
      %2437 = vmatprep.subr.mxu0 0.0
      %2438 = vmatpush2.msra.mxu0 0.0
      %2439 = vmatprep.subr.mxu0 0.0
      %2440 = vmatpush2.msra.mxu0 0.0
      %2441 = vmatprep.subr.mxu0 0.0
      %2442 = vmatpush2.msra.mxu0 0.0
      %2443 = vmatprep.subr.mxu0 0.0
      %2444 = vmatpush2.msra.mxu0 0.0
      %2445 = vmatprep.mubr.f32.mxu0 0.0
      %2446 = vmatmul.mubr.f32.gmra.mxu0 %v2379
      %v2447 = vpop.f32.mrf.mxu0
      %v2448 = vadd.f32 0.0, %v2447
      %v2449 = vpop.f32.mrf.mxu0
      %2450 = vdwg.mxu0
      %2452 = vrot.lane.b32.xlu0 %v2378, 64
      %v2453 = vpop.permute.xlu0 %2452
      %v2454 = vsel %vm709, %v2453, 0
      %2456 = vmatprep.subr.mxu0 0.0
      %2457 = vmatpush1.msra.mxu0 0.0
      %2458 = vmatprep.subr.mxu0 0.0
      %2459 = vmatpush1.msra.mxu0 0.0
      %2460 = vmatprep.subr.mxu0 0.0
      %2461 = vmatpush1.msra.mxu0 0.0
      %2462 = vmatprep.subr.mxu0 0.0
      %2463 = vmatpush1.msra.mxu0 0.0
      %2464 = vmatprep.subr.mxu0 0.0
      %2465 = vmatpush1.msra.mxu0 0.0
      %2466 = vmatprep.subr.mxu0 0.0
      %2467 = vmatpush1.msra.mxu0 0.0
      %2468 = vmatprep.subr.mxu0 0.0
      %2469 = vmatpush1.msra.mxu0 0.0
      %2470 = vmatprep.subr.mxu0 0.0
      %2471 = vmatpush1.msra.mxu0 0.0
      %2472 = vmatprep.subr.mxu0 0.0
      %2473 = vmatpush1.msra.mxu0 0.0
      %2474 = vmatprep.subr.mxu0 0.0
      %2475 = vmatpush1.msra.mxu0 0.0
      %2476 = vmatprep.subr.mxu0 0.0
      %2477 = vmatpush1.msra.mxu0 0.0
      %2478 = vmatprep.subr.mxu0 0.0
      %2479 = vmatpush1.msra.mxu0 0.0
      %2480 = vmatprep.subr.mxu0 0.0
      %2481 = vmatpush1.msra.mxu0 %v671
      %2482 = vmatprep.subr.mxu0 0.0
      %2483 = vmatpush1.msra.mxu0 %v670
      %2484 = vmatprep.subr.mxu0 0.0
      %2485 = vmatpush1.msra.mxu0 %v669
      %2486 = vmatprep.subr.mxu0 0.0
      %2487 = vmatpush1.msra.mxu0 %v668
      %2488 = vmatprep.subr.mxu0 0.0
      %2489 = vmatpush2.msra.mxu0 0.0
      %2490 = vmatprep.subr.mxu0 0.0
      %2491 = vmatpush2.msra.mxu0 0.0
      %2492 = vmatprep.subr.mxu0 0.0
      %2493 = vmatpush2.msra.mxu0 0.0
      %2494 = vmatprep.subr.mxu0 0.0
      %2495 = vmatpush2.msra.mxu0 0.0
      %2496 = vmatprep.subr.mxu0 0.0
      %2497 = vmatpush2.msra.mxu0 0.0
      %2498 = vmatprep.subr.mxu0 0.0
      %2499 = vmatpush2.msra.mxu0 0.0
      %2500 = vmatprep.subr.mxu0 0.0
      %2501 = vmatpush2.msra.mxu0 0.0
      %2502 = vmatprep.subr.mxu0 0.0
      %2503 = vmatpush2.msra.mxu0 0.0
      %2504 = vmatprep.subr.mxu0 0.0
      %2505 = vmatpush2.msra.mxu0 0.0
      %2506 = vmatprep.subr.mxu0 0.0
      %2507 = vmatpush2.msra.mxu0 0.0
      %2508 = vmatprep.subr.mxu0 0.0
      %2509 = vmatpush2.msra.mxu0 0.0
      %2510 = vmatprep.subr.mxu0 0.0
      %2511 = vmatpush2.msra.mxu0 0.0
      %2512 = vmatprep.subr.mxu0 0.0
      %2513 = vmatpush2.msra.mxu0 0.0
      %2514 = vmatprep.subr.mxu0 0.0
      %2515 = vmatpush2.msra.mxu0 0.0
      %2516 = vmatprep.subr.mxu0 0.0
      %2517 = vmatpush2.msra.mxu0 0.0
      %2518 = vmatprep.subr.mxu0 0.0
      %2519 = vmatpush2.msra.mxu0 0.0
      %2520 = vmatprep.mubr.f32.mxu0 0.0
      %2521 = vmatmul.mubr.f32.gmra.mxu0 %v2454
      %v2522 = vpop.f32.mrf.mxu0
      %v2523 = vadd.f32 %v2448, %v2522
      %v2524 = vpop.f32.mrf.mxu0
      %2525 = vdwg.mxu0
      %v2526 = vadd.f32 %v2523, %v692
      %v2527 = vmul.f32 %v2526, 0.5
      %v2528 = vtanh.pop %v2527
      %v2529 = vmul.f32 %v2528, 0.5
      %v2530 = vadd.f32 %v2529, 0.5
      %v2531 = vtanh.pop %v2526
      %v2532 = vmul.f32 %v2530, %v1935
      %2534 = vrot.lane.b32.xlu0 %v2531, 104
      %v2535 = vpop.permute.xlu0 %2534
      %v2537 = vmul.f32 %v2530, %v2535
      %2539 = vrot.lane.b32.xlu0 %v2537, 8
      %v2540 = vpop.permute.xlu0 %2539
      %v2542 = vadd.f32 %v2532, %v2540
      %v2543 = vtanh.pop %v2542
      %2545 = vrot.lane.b32.xlu0 %v2543, 8
      %v2546 = vpop.permute.xlu0 %2545
      %v2548 = vmul.f32 %v2530, %v2546
      %2550 = vrot.lane.b32.xlu0 %v2548, 112
      %v2551 = vpop.permute.xlu0 %2550
      %s2553 = scalar_lea.vmem [#allocation3], 16
      %2554 = vst.msk [vmem:[%s2553] sm:$0xff] %vm810, %v2551
      %s2555 = scalar_lea.vmem [#allocation2], 24
      %v2556 = vld [vmem:[%s2555] sm:$0xff]
      %2557 = vmatprep.subr.mxu0 0.0
      %2558 = vmatpush1.msra.mxu0 0.0
      %2559 = vmatprep.subr.mxu0 0.0
      %2560 = vmatpush1.msra.mxu0 0.0
      %2561 = vmatprep.subr.mxu0 0.0
      %2562 = vmatpush1.msra.mxu0 0.0
      %2563 = vmatprep.subr.mxu0 0.0
      %2564 = vmatpush1.msra.mxu0 0.0
      %2565 = vmatprep.subr.mxu0 0.0
      %2566 = vmatpush1.msra.mxu0 0.0
      %2567 = vmatprep.subr.mxu0 0.0
      %2568 = vmatpush1.msra.mxu0 0.0
      %2569 = vmatprep.subr.mxu0 0.0
      %2570 = vmatpush1.msra.mxu0 0.0
      %2571 = vmatprep.subr.mxu0 0.0
      %2572 = vmatpush1.msra.mxu0 0.0
      %2573 = vmatprep.subr.mxu0 0.0
      %2574 = vmatpush1.msra.mxu0 0.0
      %2575 = vmatprep.subr.mxu0 0.0
      %2576 = vmatpush1.msra.mxu0 0.0
      %2577 = vmatprep.subr.mxu0 0.0
      %2578 = vmatpush1.msra.mxu0 0.0
      %2579 = vmatprep.subr.mxu0 0.0
      %2580 = vmatpush1.msra.mxu0 0.0
      %2581 = vmatprep.subr.mxu0 0.0
      %2582 = vmatpush1.msra.mxu0 %v657
      %2583 = vmatprep.subr.mxu0 0.0
      %2584 = vmatpush1.msra.mxu0 %v656
      %2585 = vmatprep.subr.mxu0 0.0
      %2586 = vmatpush1.msra.mxu0 %v655
      %2587 = vmatprep.subr.mxu0 0.0
      %2588 = vmatpush1.msra.mxu0 %v654
      %2589 = vmatprep.subr.mxu0 0.0
      %2590 = vmatpush2.msra.mxu0 0.0
      %2591 = vmatprep.subr.mxu0 0.0
      %2592 = vmatpush2.msra.mxu0 0.0
      %2593 = vmatprep.subr.mxu0 0.0
      %2594 = vmatpush2.msra.mxu0 0.0
      %2595 = vmatprep.subr.mxu0 0.0
      %2596 = vmatpush2.msra.mxu0 0.0
      %2597 = vmatprep.subr.mxu0 0.0
      %2598 = vmatpush2.msra.mxu0 0.0
      %2599 = vmatprep.subr.mxu0 0.0
      %2600 = vmatpush2.msra.mxu0 0.0
      %2601 = vmatprep.subr.mxu0 0.0
      %2602 = vmatpush2.msra.mxu0 0.0
      %2603 = vmatprep.subr.mxu0 0.0
      %2604 = vmatpush2.msra.mxu0 0.0
      %2605 = vmatprep.subr.mxu0 0.0
      %2606 = vmatpush2.msra.mxu0 0.0
      %2607 = vmatprep.subr.mxu0 0.0
      %2608 = vmatpush2.msra.mxu0 0.0
      %2609 = vmatprep.subr.mxu0 0.0
      %2610 = vmatpush2.msra.mxu0 0.0
      %2611 = vmatprep.subr.mxu0 0.0
      %2612 = vmatpush2.msra.mxu0 0.0
      %2613 = vmatprep.subr.mxu0 0.0
      %2614 = vmatpush2.msra.mxu0 0.0
      %2615 = vmatprep.subr.mxu0 0.0
      %2616 = vmatpush2.msra.mxu0 0.0
      %2617 = vmatprep.subr.mxu0 0.0
      %2618 = vmatpush2.msra.mxu0 0.0
      %2619 = vmatprep.subr.mxu0 0.0
      %2620 = vmatpush2.msra.mxu0 0.0
      %2621 = vmatprep.mubr.f32.mxu0 0.0
      %2622 = vmatmul.mubr.f32.gmra.mxu0 %v2116
      %v2623 = vpop.f32.mrf.mxu0
      %v2624 = vadd.f32 0.0, %v2623
      %v2625 = vpop.f32.mrf.mxu0
      %2626 = vdwg.mxu0
      %v2627 = vadd.f32 %v2556, %v2624
      %v2628 = vmul.f32 %v2627, 0.5
      %v2629 = vtanh.pop %v2628
      %v2630 = vmul.f32 %v2629, 0.5
      %v2631 = vadd.f32 %v2630, 0.5
      %v2632 = vtanh.pop %v2627
      %v2633 = vmul.f32 %v2631, %v2036
      %2635 = vrot.lane.b32.xlu0 %v2632, 32
      %v2636 = vpop.permute.xlu0 %2635
      %v2638 = vmul.f32 %v2631, %v2636
      %2640 = vrot.lane.b32.xlu0 %v2638, 32
      %v2641 = vpop.permute.xlu0 %2640
      %v2643 = vadd.f32 %v2633, %v2641
      %v2644 = vtanh.pop %v2643
      %2646 = vrot.lane.b32.xlu0 %v2644, 32
      %v2647 = vpop.permute.xlu0 %2646
      %v2649 = vmul.f32 %v2631, %v2647
      %2650 = vmatprep.subr.mxu0 0.0
      %2651 = vmatpush1.msra.mxu0 0.0
      %2652 = vmatprep.subr.mxu0 0.0
      %2653 = vmatpush1.msra.mxu0 0.0
      %2654 = vmatprep.subr.mxu0 0.0
      %2655 = vmatpush1.msra.mxu0 0.0
      %2656 = vmatprep.subr.mxu0 0.0
      %2657 = vmatpush1.msra.mxu0 0.0
      %2658 = vmatprep.subr.mxu0 0.0
      %2659 = vmatpush1.msra.mxu0 0.0
      %2660 = vmatprep.subr.mxu0 0.0
      %2661 = vmatpush1.msra.mxu0 0.0
      %2662 = vmatprep.subr.mxu0 0.0
      %2663 = vmatpush1.msra.mxu0 0.0
      %2664 = vmatprep.subr.mxu0 0.0
      %2665 = vmatpush1.msra.mxu0 0.0
      %2666 = vmatprep.subr.mxu0 0.0
      %2667 = vmatpush1.msra.mxu0 0.0
      %2668 = vmatprep.subr.mxu0 0.0
      %2669 = vmatpush1.msra.mxu0 0.0
      %2670 = vmatprep.subr.mxu0 0.0
      %2671 = vmatpush1.msra.mxu0 0.0
      %2672 = vmatprep.subr.mxu0 0.0
      %2673 = vmatpush1.msra.mxu0 0.0
      %2674 = vmatprep.subr.mxu0 0.0
      %2675 = vmatpush1.msra.mxu0 0.0
      %2676 = vmatprep.subr.mxu0 0.0
      %2677 = vmatpush1.msra.mxu0 0.0
      %2678 = vmatprep.subr.mxu0 0.0
      %2679 = vmatpush1.msra.mxu0 0.0
      %2680 = vmatprep.subr.mxu0 0.0
      %2681 = vmatpush1.msra.mxu0 %v662
      %2682 = vmatprep.subr.mxu0 0.0
      %2683 = vmatpush2.msra.mxu0 0.0
      %2684 = vmatprep.subr.mxu0 0.0
      %2685 = vmatpush2.msra.mxu0 0.0
      %2686 = vmatprep.subr.mxu0 0.0
      %2687 = vmatpush2.msra.mxu0 0.0
      %2688 = vmatprep.subr.mxu0 0.0
      %2689 = vmatpush2.msra.mxu0 0.0
      %2690 = vmatprep.subr.mxu0 0.0
      %2691 = vmatpush2.msra.mxu0 0.0
      %2692 = vmatprep.subr.mxu0 0.0
      %2693 = vmatpush2.msra.mxu0 0.0
      %2694 = vmatprep.subr.mxu0 0.0
      %2695 = vmatpush2.msra.mxu0 0.0
      %2696 = vmatprep.subr.mxu0 0.0
      %2697 = vmatpush2.msra.mxu0 0.0
      %2698 = vmatprep.subr.mxu0 0.0
      %2699 = vmatpush2.msra.mxu0 0.0
      %2700 = vmatprep.subr.mxu0 0.0
      %2701 = vmatpush2.msra.mxu0 0.0
      %2702 = vmatprep.subr.mxu0 0.0
      %2703 = vmatpush2.msra.mxu0 0.0
      %2704 = vmatprep.subr.mxu0 0.0
      %2705 = vmatpush2.msra.mxu0 0.0
      %2706 = vmatprep.subr.mxu0 0.0
      %2707 = vmatpush2.msra.mxu0 0.0
      %2708 = vmatprep.subr.mxu0 0.0
      %2709 = vmatpush2.msra.mxu0 0.0
      %2710 = vmatprep.subr.mxu0 0.0
      %2711 = vmatpush2.msra.mxu0 0.0
      %2712 = vmatprep.subr.mxu0 0.0
      %2713 = vmatpush2.msra.mxu0 0.0
      %2714 = vmatprep.mubr.f32.mxu0 0.0
      %2715 = vmatmul.mubr.f32.gmra.mxu0 %v2284
      %v2716 = vpop.f32.mrf.mxu0
      %v2717 = vadd.f32 0.0, %v2716
      %v2718 = vpop.f32.mrf.mxu0
      %2719 = vdwg.mxu0
      %2721 = vrot.lane.b32.xlu0 %v2649, 64
      %v2722 = vpop.permute.xlu0 %2721
      %v2723 = vsel %vm709, %v2722, 0
      %2725 = vmatprep.subr.mxu0 0.0
      %2726 = vmatpush1.msra.mxu0 0.0
      %2727 = vmatprep.subr.mxu0 0.0
      %2728 = vmatpush1.msra.mxu0 0.0
      %2729 = vmatprep.subr.mxu0 0.0
      %2730 = vmatpush1.msra.mxu0 0.0
      %2731 = vmatprep.subr.mxu0 0.0
      %2732 = vmatpush1.msra.mxu0 0.0
      %2733 = vmatprep.subr.mxu0 0.0
      %2734 = vmatpush1.msra.mxu0 0.0
      %2735 = vmatprep.subr.mxu0 0.0
      %2736 = vmatpush1.msra.mxu0 0.0
      %2737 = vmatprep.subr.mxu0 0.0
      %2738 = vmatpush1.msra.mxu0 0.0
      %2739 = vmatprep.subr.mxu0 0.0
      %2740 = vmatpush1.msra.mxu0 0.0
      %2741 = vmatprep.subr.mxu0 0.0
      %2742 = vmatpush1.msra.mxu0 0.0
      %2743 = vmatprep.subr.mxu0 0.0
      %2744 = vmatpush1.msra.mxu0 0.0
      %2745 = vmatprep.subr.mxu0 0.0
      %2746 = vmatpush1.msra.mxu0 0.0
      %2747 = vmatprep.subr.mxu0 0.0
      %2748 = vmatpush1.msra.mxu0 0.0
      %2749 = vmatprep.subr.mxu0 0.0
      %2750 = vmatpush1.msra.mxu0 %v661
      %2751 = vmatprep.subr.mxu0 0.0
      %2752 = vmatpush1.msra.mxu0 %v660
      %2753 = vmatprep.subr.mxu0 0.0
      %2754 = vmatpush1.msra.mxu0 %v659
      %2755 = vmatprep.subr.mxu0 0.0
      %2756 = vmatpush1.msra.mxu0 %v658
      %2757 = vmatprep.subr.mxu0 0.0
      %2758 = vmatpush2.msra.mxu0 0.0
      %2759 = vmatprep.subr.mxu0 0.0
      %2760 = vmatpush2.msra.mxu0 0.0
      %2761 = vmatprep.subr.mxu0 0.0
      %2762 = vmatpush2.msra.mxu0 0.0
      %2763 = vmatprep.subr.mxu0 0.0
      %2764 = vmatpush2.msra.mxu0 0.0
      %2765 = vmatprep.subr.mxu0 0.0
      %2766 = vmatpush2.msra.mxu0 0.0
      %2767 = vmatprep.subr.mxu0 0.0
      %2768 = vmatpush2.msra.mxu0 0.0
      %2769 = vmatprep.subr.mxu0 0.0
      %2770 = vmatpush2.msra.mxu0 0.0
      %2771 = vmatprep.subr.mxu0 0.0
      %2772 = vmatpush2.msra.mxu0 0.0
      %2773 = vmatprep.subr.mxu0 0.0
      %2774 = vmatpush2.msra.mxu0 0.0
      %2775 = vmatprep.subr.mxu0 0.0
      %2776 = vmatpush2.msra.mxu0 0.0
      %2777 = vmatprep.subr.mxu0 0.0
      %2778 = vmatpush2.msra.mxu0 0.0
      %2779 = vmatprep.subr.mxu0 0.0
      %2780 = vmatpush2.msra.mxu0 0.0
      %2781 = vmatprep.subr.mxu0 0.0
      %2782 = vmatpush2.msra.mxu0 0.0
      %2783 = vmatprep.subr.mxu0 0.0
      %2784 = vmatpush2.msra.mxu0 0.0
      %2785 = vmatprep.subr.mxu0 0.0
      %2786 = vmatpush2.msra.mxu0 0.0
      %2787 = vmatprep.subr.mxu0 0.0
      %2788 = vmatpush2.msra.mxu0 0.0
      %2789 = vmatprep.mubr.f32.mxu0 0.0
      %2790 = vmatmul.mubr.f32.gmra.mxu0 %v2723
      %v2791 = vpop.f32.mrf.mxu0
      %v2792 = vadd.f32 %v2717, %v2791
      %v2793 = vpop.f32.mrf.mxu0
      %2794 = vdwg.mxu0
      %v2795 = vadd.f32 %v2792, %v678
      %v2796 = vmul.f32 %v2795, 0.5
      %v2797 = vtanh.pop %v2796
      %v2798 = vmul.f32 %v2797, 0.5
      %v2799 = vadd.f32 %v2798, 0.5
      %v2800 = vtanh.pop %v2795
      %v2801 = vmul.f32 %v2799, %v2204
      %2803 = vrot.lane.b32.xlu0 %v2800, 104
      %v2804 = vpop.permute.xlu0 %2803
      %v2806 = vmul.f32 %v2799, %v2804
      %2808 = vrot.lane.b32.xlu0 %v2806, 8
      %v2809 = vpop.permute.xlu0 %2808
      %v2811 = vadd.f32 %v2801, %v2809
      %v2812 = vtanh.pop %v2811
      %2814 = vrot.lane.b32.xlu0 %v2812, 8
      %v2815 = vpop.permute.xlu0 %2814
      %v2817 = vmul.f32 %v2799, %v2815
      %2818 = vmatprep.subr.mxu0 0.0
      %2819 = vmatpush1.msra.mxu0 0.0
      %2820 = vmatprep.subr.mxu0 0.0
      %2821 = vmatpush1.msra.mxu0 0.0
      %2822 = vmatprep.subr.mxu0 0.0
      %2823 = vmatpush1.msra.mxu0 0.0
      %2824 = vmatprep.subr.mxu0 0.0
      %2825 = vmatpush1.msra.mxu0 0.0
      %2826 = vmatprep.subr.mxu0 0.0
      %2827 = vmatpush1.msra.mxu0 0.0
      %2828 = vmatprep.subr.mxu0 0.0
      %2829 = vmatpush1.msra.mxu0 0.0
      %2830 = vmatprep.subr.mxu0 0.0
      %2831 = vmatpush1.msra.mxu0 0.0
      %2832 = vmatprep.subr.mxu0 0.0
      %2833 = vmatpush1.msra.mxu0 0.0
      %2834 = vmatprep.subr.mxu0 0.0
      %2835 = vmatpush1.msra.mxu0 0.0
      %2836 = vmatprep.subr.mxu0 0.0
      %2837 = vmatpush1.msra.mxu0 0.0
      %2838 = vmatprep.subr.mxu0 0.0
      %2839 = vmatpush1.msra.mxu0 0.0
      %2840 = vmatprep.subr.mxu0 0.0
      %2841 = vmatpush1.msra.mxu0 0.0
      %2842 = vmatprep.subr.mxu0 0.0
      %2843 = vmatpush1.msra.mxu0 %v667
      %2844 = vmatprep.subr.mxu0 0.0
      %2845 = vmatpush1.msra.mxu0 %v666
      %2846 = vmatprep.subr.mxu0 0.0
      %2847 = vmatpush1.msra.mxu0 %v665
      %2848 = vmatprep.subr.mxu0 0.0
      %2849 = vmatpush1.msra.mxu0 %v664
      %2850 = vmatprep.subr.mxu0 0.0
      %2851 = vmatpush2.msra.mxu0 0.0
      %2852 = vmatprep.subr.mxu0 0.0
      %2853 = vmatpush2.msra.mxu0 0.0
      %2854 = vmatprep.subr.mxu0 0.0
      %2855 = vmatpush2.msra.mxu0 0.0
      %2856 = vmatprep.subr.mxu0 0.0
      %2857 = vmatpush2.msra.mxu0 0.0
      %2858 = vmatprep.subr.mxu0 0.0
      %2859 = vmatpush2.msra.mxu0 0.0
      %2860 = vmatprep.subr.mxu0 0.0
      %2861 = vmatpush2.msra.mxu0 0.0
      %2862 = vmatprep.subr.mxu0 0.0
      %2863 = vmatpush2.msra.mxu0 0.0
      %2864 = vmatprep.subr.mxu0 0.0
      %2865 = vmatpush2.msra.mxu0 0.0
      %2866 = vmatprep.subr.mxu0 0.0
      %2867 = vmatpush2.msra.mxu0 0.0
      %2868 = vmatprep.subr.mxu0 0.0
      %2869 = vmatpush2.msra.mxu0 0.0
      %2870 = vmatprep.subr.mxu0 0.0
      %2871 = vmatpush2.msra.mxu0 0.0
      %2872 = vmatprep.subr.mxu0 0.0
      %2873 = vmatpush2.msra.mxu0 0.0
      %2874 = vmatprep.subr.mxu0 0.0
      %2875 = vmatpush2.msra.mxu0 0.0
      %2876 = vmatprep.subr.mxu0 0.0
      %2877 = vmatpush2.msra.mxu0 0.0
      %2878 = vmatprep.subr.mxu0 0.0
      %2879 = vmatpush2.msra.mxu0 0.0
      %2880 = vmatprep.subr.mxu0 0.0
      %2881 = vmatpush2.msra.mxu0 0.0
      %2882 = vmatprep.mubr.f32.mxu0 0.0
      %2883 = vmatmul.mubr.f32.gmra.mxu0 %v2454
      %v2884 = vpop.f32.mrf.mxu0
      %v2885 = vadd.f32 0.0, %v2884
      %v2886 = vpop.f32.mrf.mxu0
      %2887 = vdwg.mxu0
      %2889 = vrot.lane.b32.xlu0 %v2817, 112
      %v2890 = vpop.permute.xlu0 %2889
      %v2891 = vsel %vm810, %v2890, 0
      %2893 = vmatprep.subr.mxu0 0.0
      %2894 = vmatpush1.msra.mxu0 0.0
      %2895 = vmatprep.subr.mxu0 0.0
      %2896 = vmatpush1.msra.mxu0 0.0
      %2897 = vmatprep.subr.mxu0 0.0
      %2898 = vmatpush1.msra.mxu0 0.0
      %2899 = vmatprep.subr.mxu0 0.0
      %2900 = vmatpush1.msra.mxu0 0.0
      %2901 = vmatprep.subr.mxu0 0.0
      %2902 = vmatpush1.msra.mxu0 0.0
      %2903 = vmatprep.subr.mxu0 0.0
      %2904 = vmatpush1.msra.mxu0 0.0
      %2905 = vmatprep.subr.mxu0 0.0
      %2906 = vmatpush1.msra.mxu0 0.0
      %2907 = vmatprep.subr.mxu0 0.0
      %2908 = vmatpush1.msra.mxu0 0.0
      %2909 = vmatprep.subr.mxu0 0.0
      %2910 = vmatpush1.msra.mxu0 0.0
      %2911 = vmatprep.subr.mxu0 0.0
      %2912 = vmatpush1.msra.mxu0 0.0
      %2913 = vmatprep.subr.mxu0 0.0
      %2914 = vmatpush1.msra.mxu0 0.0
      %2915 = vmatprep.subr.mxu0 0.0
      %2916 = vmatpush1.msra.mxu0 0.0
      %2917 = vmatprep.subr.mxu0 0.0
      %2918 = vmatpush1.msra.mxu0 0.0
      %2919 = vmatprep.subr.mxu0 0.0
      %2920 = vmatpush1.msra.mxu0 0.0
      %2921 = vmatprep.subr.mxu0 0.0
      %2922 = vmatpush1.msra.mxu0 0.0
      %2923 = vmatprep.subr.mxu0 0.0
      %2924 = vmatpush1.msra.mxu0 %v663
      %2925 = vmatprep.subr.mxu0 0.0
      %2926 = vmatpush2.msra.mxu0 0.0
      %2927 = vmatprep.subr.mxu0 0.0
      %2928 = vmatpush2.msra.mxu0 0.0
      %2929 = vmatprep.subr.mxu0 0.0
      %2930 = vmatpush2.msra.mxu0 0.0
      %2931 = vmatprep.subr.mxu0 0.0
      %2932 = vmatpush2.msra.mxu0 0.0
      %2933 = vmatprep.subr.mxu0 0.0
      %2934 = vmatpush2.msra.mxu0 0.0
      %2935 = vmatprep.subr.mxu0 0.0
      %2936 = vmatpush2.msra.mxu0 0.0
      %2937 = vmatprep.subr.mxu0 0.0
      %2938 = vmatpush2.msra.mxu0 0.0
      %2939 = vmatprep.subr.mxu0 0.0
      %2940 = vmatpush2.msra.mxu0 0.0
      %2941 = vmatprep.subr.mxu0 0.0
      %2942 = vmatpush2.msra.mxu0 0.0
      %2943 = vmatprep.subr.mxu0 0.0
      %2944 = vmatpush2.msra.mxu0 0.0
      %2945 = vmatprep.subr.mxu0 0.0
      %2946 = vmatpush2.msra.mxu0 0.0
      %2947 = vmatprep.subr.mxu0 0.0
      %2948 = vmatpush2.msra.mxu0 0.0
      %2949 = vmatprep.subr.mxu0 0.0
      %2950 = vmatpush2.msra.mxu0 0.0
      %2951 = vmatprep.subr.mxu0 0.0
      %2952 = vmatpush2.msra.mxu0 0.0
      %2953 = vmatprep.subr.mxu0 0.0
      %2954 = vmatpush2.msra.mxu0 0.0
      %2955 = vmatprep.subr.mxu0 0.0
      %2956 = vmatpush2.msra.mxu0 0.0
      %2957 = vmatprep.mubr.f32.mxu0 0.0
      %2958 = vmatmul.mubr.f32.gmra.mxu0 %v2891
      %v2959 = vpop.f32.mrf.mxu0
      %v2960 = vadd.f32 %v2885, %v2959
      %v2961 = vpop.f32.mrf.mxu0
      %2962 = vdwg.mxu0
      %v2963 = vadd.f32 %v2960, %v685
      %v2964 = vmul.f32 %v2963, 0.5
      %v2965 = vtanh.pop %v2964
      %v2966 = vmul.f32 %v2965, 0.5
      %v2967 = vadd.f32 %v2966, 0.5
      %v2968 = vtanh.pop %v2963
      %v2969 = vmul.f32 %v2967, %v2372
      %2971 = vrot.lane.b32.xlu0 %v2968, 32
      %v2972 = vpop.permute.xlu0 %2971
      %v2974 = vmul.f32 %v2967, %v2972
      %2976 = vrot.lane.b32.xlu0 %v2974, 32
      %v2977 = vpop.permute.xlu0 %2976
      %v2979 = vadd.f32 %v2969, %v2977
      %v2980 = vtanh.pop %v2979
      %2982 = vrot.lane.b32.xlu0 %v2980, 32
      %v2983 = vpop.permute.xlu0 %2982
      %v2985 = vmul.f32 %v2967, %v2983
      %v2986 = vsel %vm810, %v2551, 0
      %2988 = vmatprep.subr.mxu0 0.0
      %2989 = vmatpush1.msra.mxu0 0.0
      %2990 = vmatprep.subr.mxu0 0.0
      %2991 = vmatpush1.msra.mxu0 0.0
      %2992 = vmatprep.subr.mxu0 0.0
      %2993 = vmatpush1.msra.mxu0 0.0
      %2994 = vmatprep.subr.mxu0 0.0
      %2995 = vmatpush1.msra.mxu0 0.0
      %2996 = vmatprep.subr.mxu0 0.0
      %2997 = vmatpush1.msra.mxu0 0.0
      %2998 = vmatprep.subr.mxu0 0.0
      %2999 = vmatpush1.msra.mxu0 0.0
      %3000 = vmatprep.subr.mxu0 0.0
      %3001 = vmatpush1.msra.mxu0 0.0
      %3002 = vmatprep.subr.mxu0 0.0
      %3003 = vmatpush1.msra.mxu0 0.0
      %3004 = vmatprep.subr.mxu0 0.0
      %3005 = vmatpush1.msra.mxu0 0.0
      %3006 = vmatprep.subr.mxu0 0.0
      %3007 = vmatpush1.msra.mxu0 0.0
      %3008 = vmatprep.subr.mxu0 0.0
      %3009 = vmatpush1.msra.mxu0 0.0
      %3010 = vmatprep.subr.mxu0 0.0
      %3011 = vmatpush1.msra.mxu0 0.0
      %3012 = vmatprep.subr.mxu0 0.0
      %3013 = vmatpush1.msra.mxu0 0.0
      %3014 = vmatprep.subr.mxu0 0.0
      %3015 = vmatpush1.msra.mxu0 0.0
      %3016 = vmatprep.subr.mxu0 0.0
      %3017 = vmatpush1.msra.mxu0 0.0
      %3018 = vmatprep.subr.mxu0 0.0
      %3019 = vmatpush1.msra.mxu0 %v672
      %3020 = vmatprep.subr.mxu0 0.0
      %3021 = vmatpush2.msra.mxu0 0.0
      %3022 = vmatprep.subr.mxu0 0.0
      %3023 = vmatpush2.msra.mxu0 0.0
      %3024 = vmatprep.subr.mxu0 0.0
      %3025 = vmatpush2.msra.mxu0 0.0
      %3026 = vmatprep.subr.mxu0 0.0
      %3027 = vmatpush2.msra.mxu0 0.0
      %3028 = vmatprep.subr.mxu0 0.0
      %3029 = vmatpush2.msra.mxu0 0.0
      %3030 = vmatprep.subr.mxu0 0.0
      %3031 = vmatpush2.msra.mxu0 0.0
      %3032 = vmatprep.subr.mxu0 0.0
      %3033 = vmatpush2.msra.mxu0 0.0
      %3034 = vmatprep.subr.mxu0 0.0
      %3035 = vmatpush2.msra.mxu0 0.0
      %3036 = vmatprep.subr.mxu0 0.0
      %3037 = vmatpush2.msra.mxu0 0.0
      %3038 = vmatprep.subr.mxu0 0.0
      %3039 = vmatpush2.msra.mxu0 0.0
      %3040 = vmatprep.subr.mxu0 0.0
      %3041 = vmatpush2.msra.mxu0 0.0
      %3042 = vmatprep.subr.mxu0 0.0
      %3043 = vmatpush2.msra.mxu0 0.0
      %3044 = vmatprep.subr.mxu0 0.0
      %3045 = vmatpush2.msra.mxu0 0.0
      %3046 = vmatprep.subr.mxu0 0.0
      %3047 = vmatpush2.msra.mxu0 0.0
      %3048 = vmatprep.subr.mxu0 0.0
      %3049 = vmatpush2.msra.mxu0 0.0
      %3050 = vmatprep.subr.mxu0 0.0
      %3051 = vmatpush2.msra.mxu0 0.0
      %3052 = vmatprep.mubr.f32.mxu0 0.0
      %3053 = vmatmul.mubr.f32.gmra.mxu0 %v2986
      %v3054 = vpop.f32.mrf.mxu0
      %v3055 = vadd.f32 0.0, %v3054
      %v3056 = vpop.f32.mrf.mxu0
      %3057 = vdwg.mxu0
      %3059 = vrot.lane.b32.xlu0 %v2985, 64
      %v3060 = vpop.permute.xlu0 %3059
      %v3061 = vsel %vm709, %v3060, 0
      %3063 = vmatprep.subr.mxu0 0.0
      %3064 = vmatpush1.msra.mxu0 0.0
      %3065 = vmatprep.subr.mxu0 0.0
      %3066 = vmatpush1.msra.mxu0 0.0
      %3067 = vmatprep.subr.mxu0 0.0
      %3068 = vmatpush1.msra.mxu0 0.0
      %3069 = vmatprep.subr.mxu0 0.0
      %3070 = vmatpush1.msra.mxu0 0.0
      %3071 = vmatprep.subr.mxu0 0.0
      %3072 = vmatpush1.msra.mxu0 0.0
      %3073 = vmatprep.subr.mxu0 0.0
      %3074 = vmatpush1.msra.mxu0 0.0
      %3075 = vmatprep.subr.mxu0 0.0
      %3076 = vmatpush1.msra.mxu0 0.0
      %3077 = vmatprep.subr.mxu0 0.0
      %3078 = vmatpush1.msra.mxu0 0.0
      %3079 = vmatprep.subr.mxu0 0.0
      %3080 = vmatpush1.msra.mxu0 0.0
      %3081 = vmatprep.subr.mxu0 0.0
      %3082 = vmatpush1.msra.mxu0 0.0
      %3083 = vmatprep.subr.mxu0 0.0
      %3084 = vmatpush1.msra.mxu0 0.0
      %3085 = vmatprep.subr.mxu0 0.0
      %3086 = vmatpush1.msra.mxu0 0.0
      %3087 = vmatprep.subr.mxu0 0.0
      %3088 = vmatpush1.msra.mxu0 %v671
      %3089 = vmatprep.subr.mxu0 0.0
      %3090 = vmatpush1.msra.mxu0 %v670
      %3091 = vmatprep.subr.mxu0 0.0
      %3092 = vmatpush1.msra.mxu0 %v669
      %3093 = vmatprep.subr.mxu0 0.0
      %3094 = vmatpush1.msra.mxu0 %v668
      %3095 = vmatprep.subr.mxu0 0.0
      %3096 = vmatpush2.msra.mxu0 0.0
      %3097 = vmatprep.subr.mxu0 0.0
      %3098 = vmatpush2.msra.mxu0 0.0
      %3099 = vmatprep.subr.mxu0 0.0
      %3100 = vmatpush2.msra.mxu0 0.0
      %3101 = vmatprep.subr.mxu0 0.0
      %3102 = vmatpush2.msra.mxu0 0.0
      %3103 = vmatprep.subr.mxu0 0.0
      %3104 = vmatpush2.msra.mxu0 0.0
      %3105 = vmatprep.subr.mxu0 0.0
      %3106 = vmatpush2.msra.mxu0 0.0
      %3107 = vmatprep.subr.mxu0 0.0
      %3108 = vmatpush2.msra.mxu0 0.0
      %3109 = vmatprep.subr.mxu0 0.0
      %3110 = vmatpush2.msra.mxu0 0.0
      %3111 = vmatprep.subr.mxu0 0.0
      %3112 = vmatpush2.msra.mxu0 0.0
      %3113 = vmatprep.subr.mxu0 0.0
      %3114 = vmatpush2.msra.mxu0 0.0
      %3115 = vmatprep.subr.mxu0 0.0
      %3116 = vmatpush2.msra.mxu0 0.0
      %3117 = vmatprep.subr.mxu0 0.0
      %3118 = vmatpush2.msra.mxu0 0.0
      %3119 = vmatprep.subr.mxu0 0.0
      %3120 = vmatpush2.msra.mxu0 0.0
      %3121 = vmatprep.subr.mxu0 0.0
      %3122 = vmatpush2.msra.mxu0 0.0
      %3123 = vmatprep.subr.mxu0 0.0
      %3124 = vmatpush2.msra.mxu0 0.0
      %3125 = vmatprep.subr.mxu0 0.0
      %3126 = vmatpush2.msra.mxu0 0.0
      %3127 = vmatprep.mubr.f32.mxu0 0.0
      %3128 = vmatmul.mubr.f32.gmra.mxu0 %v3061
      %v3129 = vpop.f32.mrf.mxu0
      %v3130 = vadd.f32 %v3055, %v3129
      %v3131 = vpop.f32.mrf.mxu0
      %3132 = vdwg.mxu0
      %v3133 = vadd.f32 %v3130, %v692
      %v3134 = vmul.f32 %v3133, 0.5
      %v3135 = vtanh.pop %v3134
      %v3136 = vmul.f32 %v3135, 0.5
      %v3137 = vadd.f32 %v3136, 0.5
      %v3138 = vtanh.pop %v3133
      %v3139 = vmul.f32 %v3137, %v2542
      %3141 = vrot.lane.b32.xlu0 %v3138, 104
      %v3142 = vpop.permute.xlu0 %3141
      %v3144 = vmul.f32 %v3137, %v3142
      %3146 = vrot.lane.b32.xlu0 %v3144, 8
      %v3147 = vpop.permute.xlu0 %3146
      %v3149 = vadd.f32 %v3139, %v3147
      %v3150 = vtanh.pop %v3149
      %3152 = vrot.lane.b32.xlu0 %v3150, 8
      %v3153 = vpop.permute.xlu0 %3152
      %v3155 = vmul.f32 %v3137, %v3153
      %3157 = vrot.lane.b32.xlu0 %v3155, 112
      %v3158 = vpop.permute.xlu0 %3157
      %s3160 = scalar_lea.vmem [#allocation3], 24
      %3161 = vst.msk [vmem:[%s3160] sm:$0xff] %vm810, %v3158
      %3163 = vst.msk [vmem:[#allocation4] sm:$0xff] %vm709, %v2722
      %3165 = vrot.lane.b32.xlu0 %v2643, 96
      %v3166 = vpop.permute.xlu0 %3165
      %3168 = vst.msk [vmem:[%s695] sm:$0xff] %vm709, %v3166
      %3170 = vst.msk [vmem:[%s700] sm:$0xff] %vm709, %v3060
      %3172 = vrot.lane.b32.xlu0 %v2979, 96
      %v3173 = vpop.permute.xlu0 %3172
      %3175 = vst.msk [vmem:[%s702] sm:$0xff] %vm709, %v3173
      %3177 = vst.msk [vmem:[#allocation5] sm:$0xff] %vm810, %v2890
      %3179 = vrot.lane.b32.xlu0 %v2811, 120
      %v3180 = vpop.permute.xlu0 %3179
      %3182 = vst.msk [vmem:[%s698] sm:$0xff] %vm810, %v3180
      %3183 = vst.msk [vmem:[%s704] sm:$0xff] %vm810, %v3158
      %3185 = vrot.lane.b32.xlu0 %v3149, 120
      %v3186 = vpop.permute.xlu0 %3185
      %3188 = vst.msk [vmem:[%s706] sm:$0xff] %vm810, %v3186
      %v3189 = vld [vmem:[#allocation3] sm:$0xff]
      %v3190 = vld [vmem:[#allocation3 + $0x8] sm:$0xff]
      %v3191 = vld [vmem:[#allocation3 + $0x10] sm:$0xff]
      %v3192 = vld [vmem:[#allocation3 + $0x18] sm:$0xff]
      %v3193 = vld [vmem:[%s13] sm:$0xff]
      %v3194 = vld [vmem:[%s14] sm:$0x1]
      %v3196 = vlaneseq
      %v3197 = vshrl.u32 %v3196, 7
      %v3198 = vsub.s32 0, %v3197
      %v3199 = vrot.slane %v3194, %v3198
      %v3202 = vsel %vm810, %v3189, 0
      %v3205 = vsel %vm810, %v3190, 0
      %v3208 = vsel %vm810, %v3191, 0
      %v3211 = vsel %vm810, %v3192, 0
      %3213 = vmatprep.subr.mxu0 0.0
      %3214 = vmatpush1.msra.mxu0 0.0
      %3215 = vmatprep.subr.mxu0 0.0
      %3216 = vmatpush1.msra.mxu0 0.0
      %3217 = vmatprep.subr.mxu0 0.0
      %3218 = vmatpush1.msra.mxu0 0.0
      %3219 = vmatprep.subr.mxu0 0.0
      %3220 = vmatpush1.msra.mxu0 0.0
      %3221 = vmatprep.subr.mxu0 0.0
      %3222 = vmatpush1.msra.mxu0 0.0
      %3223 = vmatprep.subr.mxu0 0.0
      %3224 = vmatpush1.msra.mxu0 0.0
      %3225 = vmatprep.subr.mxu0 0.0
      %3226 = vmatpush1.msra.mxu0 0.0
      %3227 = vmatprep.subr.mxu0 0.0
      %3228 = vmatpush1.msra.mxu0 0.0
      %3229 = vmatprep.subr.mxu0 0.0
      %3230 = vmatpush1.msra.mxu0 0.0
      %3231 = vmatprep.subr.mxu0 0.0
      %3232 = vmatpush1.msra.mxu0 0.0
      %3233 = vmatprep.subr.mxu0 0.0
      %3234 = vmatpush1.msra.mxu0 0.0
      %3235 = vmatprep.subr.mxu0 0.0
      %3236 = vmatpush1.msra.mxu0 0.0
      %3237 = vmatprep.subr.mxu0 0.0
      %3238 = vmatpush1.msra.mxu0 0.0
      %3239 = vmatprep.subr.mxu0 0.0
      %3240 = vmatpush1.msra.mxu0 0.0
      %3241 = vmatprep.subr.mxu0 0.0
      %3242 = vmatpush1.msra.mxu0 0.0
      %3243 = vmatprep.subr.mxu0 0.0
      %3244 = vmatpush1.msra.mxu0 %v3193
      %3245 = vmatprep.subr.mxu0 0.0
      %3246 = vmatpush2.msra.mxu0 0.0
      %3247 = vmatprep.subr.mxu0 0.0
      %3248 = vmatpush2.msra.mxu0 0.0
      %3249 = vmatprep.subr.mxu0 0.0
      %3250 = vmatpush2.msra.mxu0 0.0
      %3251 = vmatprep.subr.mxu0 0.0
      %3252 = vmatpush2.msra.mxu0 0.0
      %3253 = vmatprep.subr.mxu0 0.0
      %3254 = vmatpush2.msra.mxu0 0.0
      %3255 = vmatprep.subr.mxu0 0.0
      %3256 = vmatpush2.msra.mxu0 0.0
      %3257 = vmatprep.subr.mxu0 0.0
      %3258 = vmatpush2.msra.mxu0 0.0
      %3259 = vmatprep.subr.mxu0 0.0
      %3260 = vmatpush2.msra.mxu0 0.0
      %3261 = vmatprep.subr.mxu0 0.0
      %3262 = vmatpush2.msra.mxu0 0.0
      %3263 = vmatprep.subr.mxu0 0.0
      %3264 = vmatpush2.msra.mxu0 0.0
      %3265 = vmatprep.subr.mxu0 0.0
      %3266 = vmatpush2.msra.mxu0 0.0
      %3267 = vmatprep.subr.mxu0 0.0
      %3268 = vmatpush2.msra.mxu0 0.0
      %3269 = vmatprep.subr.mxu0 0.0
      %3270 = vmatpush2.msra.mxu0 0.0
      %3271 = vmatprep.subr.mxu0 0.0
      %3272 = vmatpush2.msra.mxu0 0.0
      %3273 = vmatprep.subr.mxu0 0.0
      %3274 = vmatpush2.msra.mxu0 0.0
      %3275 = vmatprep.subr.mxu0 0.0
      %3276 = vmatpush2.msra.mxu0 0.0
      %3277 = vmatprep.mubr.f32.mxu0 0.0
      %3278 = vmatmul.mubr.f32.gmra.mxu0 %v3202
      %v3279 = vpop.f32.mrf.mxu0
      %v3280 = vadd.f32 %v3199, %v3279
      %v3281 = vpop.f32.mrf.mxu0
      %3282 = vmatprep.mubr.f32.mxu0 0.0
      %3283 = vmatmul.mubr.f32.gmra.mxu0 %v3205
      %v3284 = vpop.f32.mrf.mxu0
      %v3285 = vadd.f32 %v3199, %v3284
      %v3286 = vpop.f32.mrf.mxu0
      %3287 = vmatprep.mubr.f32.mxu0 0.0
      %3288 = vmatmul.mubr.f32.gmra.mxu0 %v3208
      %v3289 = vpop.f32.mrf.mxu0
      %v3290 = vadd.f32 %v3199, %v3289
      %v3291 = vpop.f32.mrf.mxu0
      %3292 = vmatprep.mubr.f32.mxu0 0.0
      %3293 = vmatmul.mubr.f32.gmra.mxu0 %v3211
      %v3294 = vpop.f32.mrf.mxu0
      %v3295 = vadd.f32 %v3199, %v3294
      %v3296 = vpop.f32.mrf.mxu0
      %3297 = vdwg.mxu0
      %v3298 = vmax.f32 %v3280, 0.0
      %v3299 = vmax.f32 %v3285, 0.0
      %v3300 = vmax.f32 %v3290, 0.0
      %v3301 = vmax.f32 %v3295, 0.0
      %v3302 = vld [vmem:[%s15] sm:$0xff]
      %v3303 = vld [vmem:[%s15 + $0x8] sm:$0xff]
      %v3304 = vld [vmem:[%s15 + $0x10] sm:$0xff]
      %v3305 = vld [vmem:[%s15 + $0x18] sm:$0xff]
      %v3307 = vsel %vm709, %v3298, 0
      %v3310 = vsel %vm709, %v3299, 0
      %v3313 = vsel %vm709, %v3300, 0
      %v3316 = vsel %vm709, %v3301, 0
      %3318 = vmatprep.subr.mxu0 0.0
      %3319 = vmatpush1.msra.mxu0 0.0
      %3320 = vmatprep.subr.mxu0 0.0
      %3321 = vmatpush1.msra.mxu0 0.0
      %3322 = vmatprep.subr.mxu0 0.0
      %3323 = vmatpush1.msra.mxu0 0.0
      %3324 = vmatprep.subr.mxu0 0.0
      %3325 = vmatpush1.msra.mxu0 0.0
      %3326 = vmatprep.subr.mxu0 0.0
      %3327 = vmatpush1.msra.mxu0 0.0
      %3328 = vmatprep.subr.mxu0 0.0
      %3329 = vmatpush1.msra.mxu0 0.0
      %3330 = vmatprep.subr.mxu0 0.0
      %3331 = vmatpush1.msra.mxu0 0.0
      %3332 = vmatprep.subr.mxu0 0.0
      %3333 = vmatpush1.msra.mxu0 0.0
      %3334 = vmatprep.subr.mxu0 0.0
      %3335 = vmatpush1.msra.mxu0 0.0
      %3336 = vmatprep.subr.mxu0 0.0
      %3337 = vmatpush1.msra.mxu0 0.0
      %3338 = vmatprep.subr.mxu0 0.0
      %3339 = vmatpush1.msra.mxu0 0.0
      %3340 = vmatprep.subr.mxu0 0.0
      %3341 = vmatpush1.msra.mxu0 0.0
      %3342 = vmatprep.subr.mxu0 0.0
      %3343 = vmatpush1.msra.mxu0 %v3305
      %3344 = vmatprep.subr.mxu0 0.0
      %3345 = vmatpush1.msra.mxu0 %v3304
      %3346 = vmatprep.subr.mxu0 0.0
      %3347 = vmatpush1.msra.mxu0 %v3303
      %3348 = vmatprep.subr.mxu0 0.0
      %3349 = vmatpush1.msra.mxu0 %v3302
      %3350 = vmatprep.subr.mxu0 0.0
      %3351 = vmatpush2.msra.mxu0 0.0
      %3352 = vmatprep.subr.mxu0 0.0
      %3353 = vmatpush2.msra.mxu0 0.0
      %3354 = vmatprep.subr.mxu0 0.0
      %3355 = vmatpush2.msra.mxu0 0.0
      %3356 = vmatprep.subr.mxu0 0.0
      %3357 = vmatpush2.msra.mxu0 0.0
      %3358 = vmatprep.subr.mxu0 0.0
      %3359 = vmatpush2.msra.mxu0 0.0
      %3360 = vmatprep.subr.mxu0 0.0
      %3361 = vmatpush2.msra.mxu0 0.0
      %3362 = vmatprep.subr.mxu0 0.0
      %3363 = vmatpush2.msra.mxu0 0.0
      %3364 = vmatprep.subr.mxu0 0.0
      %3365 = vmatpush2.msra.mxu0 0.0
      %3366 = vmatprep.subr.mxu0 0.0
      %3367 = vmatpush2.msra.mxu0 0.0
      %3368 = vmatprep.subr.mxu0 0.0
      %3369 = vmatpush2.msra.mxu0 0.0
      %3370 = vmatprep.subr.mxu0 0.0
      %3371 = vmatpush2.msra.mxu0 0.0
      %3372 = vmatprep.subr.mxu0 0.0
      %3373 = vmatpush2.msra.mxu0 0.0
      %3374 = vmatprep.subr.mxu0 0.0
      %3375 = vmatpush2.msra.mxu0 0.0
      %3376 = vmatprep.subr.mxu0 0.0
      %3377 = vmatpush2.msra.mxu0 0.0
      %3378 = vmatprep.subr.mxu0 0.0
      %3379 = vmatpush2.msra.mxu0 0.0
      %3380 = vmatprep.subr.mxu0 0.0
      %3381 = vmatpush2.msra.mxu0 0.0
      %3382 = vmatprep.mubr.f32.mxu0 0.0
      %3383 = vmatmul.mubr.f32.gmra.mxu0 %v3307
      %v3384 = vpop.f32.mrf.mxu0
      %v3385 = vadd.f32 0.0, %v3384
      %v3386 = vpop.f32.mrf.mxu0
      %3387 = vmatprep.mubr.f32.mxu0 0.0
      %3388 = vmatmul.mubr.f32.gmra.mxu0 %v3310
      %v3389 = vpop.f32.mrf.mxu0
      %v3390 = vadd.f32 0.0, %v3389
      %v3391 = vpop.f32.mrf.mxu0
      %3392 = vmatprep.mubr.f32.mxu0 0.0
      %3393 = vmatmul.mubr.f32.gmra.mxu0 %v3313
      %v3394 = vpop.f32.mrf.mxu0
      %v3395 = vadd.f32 0.0, %v3394
      %v3396 = vpop.f32.mrf.mxu0
      %3397 = vmatprep.mubr.f32.mxu0 0.0
      %3398 = vmatmul.mubr.f32.gmra.mxu0 %v3316
      %v3399 = vpop.f32.mrf.mxu0
      %v3400 = vadd.f32 0.0, %v3399
      %v3401 = vpop.f32.mrf.mxu0
      %3402 = vdwg.mxu0
      %3403 = vst [vmem:[%s523] sm:$0xff] %v3385
      %3404 = vst [vmem:[%s523 + $0x8] sm:$0xff] %v3390
      %3405 = vst [vmem:[%s523 + $0x10] sm:$0xff] %v3395
      %3406 = vst [vmem:[%s523 + $0x18] sm:$0xff] %v3400
      %s3407 = smul.u32 4, %s27
      %p3408 = scmp.lt.s32.totalorder %s3407, 7
      %s3409 = scalar_select %p3408, %s3407, 7
      %s3410 = smul.addr %s3409, 8
      %s3411 = scalar_lea.vmem %s16, %s3410
      // Predicated region
      $region89: #{lstm_autoencoder_pallas.1} parent=83 // pred_check
        %p3412 = pneg %p386
      $region90: #{lstm_autoencoder_pallas.1} parent=83 // pred_check_branch
        %3414 = sbr.rel (%p3412) target = $region92
      $region91: #{lstm_autoencoder_pallas.1} parent=83 // pred_region
        %s3415 = smul.u32 4, %s27
      $region92: #{lstm_autoencoder_pallas.1} parent=83 // pred_fallthru
        _
    $region84: #{lstm_autoencoder_pallas.1} parent=5 // pred_fallthru
      _
    %p3416 = scmp.le.s32.totalorder 2, %s22
    // Predicated region
    $region93: #{lstm_autoencoder_pallas.1} parent=5 // pred_check
      %p3417 = pneg %p3416
    $region94: #{lstm_autoencoder_pallas.1} parent=5 // pred_check_branch
      %3419 = sbr.rel (%p3417) target = $region96
    $region95: #{lstm_autoencoder_pallas.1} parent=5 // pred_region
      %s3420 = ssub.s32 %s22, 2
      // Predicated region
      $region97: #{lstm_autoencoder_pallas.1} parent=95 // pred_check
        %p3421 = pneg %p392
      $region98: #{lstm_autoencoder_pallas.1} parent=95 // pred_check_branch
        %3423 = sbr.rel (%p3421) target = $region100
      $region99: #{lstm_autoencoder_pallas.1} parent=95 // pred_region
        %s3424 = smul.u32 4, %s28
        %p3425 = scmp.lt.s32.totalorder %s3424, 7
        %s3426 = scalar_select %p3425, %s3424, 7
        %s3427 = smul.addr %s3426, 8
        %s3428 = scalar_lea.vmem %s16, %s3427
      $region100: #{lstm_autoencoder_pallas.1} parent=95 // pred_fallthru
        _
    $region96: #{lstm_autoencoder_pallas.1} parent=5 // pred_fallthru
      _
  $region6: #{lstm_autoencoder_pallas.1} parent=0 // loop_footer
    %s26 = sadd.s32 1, %s22
  $region7: #{lstm_autoencoder_pallas.1} parent=0 // loop_footer_branch
    %21 = sbr.rel target = $region3
  $region8: #{lstm_autoencoder_pallas.1} parent=0 // loop_exit
    _

</llo_original>
